<compile_context>
chip_gen: v5e
topology: v5e:2x2
jax: 0.10.0
libtpu: 0.0.40
codegen_flags: <defaults>
</compile_context>

<pallas_src>
import functools

import jax
import jax.numpy as jnp
from jax.experimental import pallas as pl
from jax.experimental.pallas import tpu as pltpu

LEAKY_SLOPE = 0.01   # nn.LeakyReLU default negative_slope
BN_EPS = 1e-5        # nn.BatchNorm1d default eps
HIDDEN = (500, 400, 300, 200, 100, 50)
LANE = 128           # lane-dense padding granularity
NEG_MASK = -1e30     # bias value for padded logit columns (masked in LogSoftmax)


def _round_up(n, m):
    return ((n + m - 1) // m) * m


def _build_layout(input_size, output_size):
    """Static (Python-int) packing layout derived only from the sizes."""
    dims = [input_size, *HIDDEN, output_size]
    pdims = [_round_up(d, LANE) for d in dims]
    n_layers = len(dims) - 1            # 7 linear layers
    n_hidden = len(HIDDEN)              # 6 hidden blocks

    # Weight groups: concatenate weights with equal out_pad along the sublane
    # axis.  All in_pads are multiples of 128 so every row offset is aligned.
    group_keys = []                     # lane width (out_pad) per group
    group_rows = []                     # total sublane rows per group
    layer_w = []                        # per layer: (group_idx, row0, in_pad, out_pad)
    for i in range(n_layers):
        ip, op = pdims[i], pdims[i + 1]
        if op in group_keys:
            g = group_keys.index(op)
        else:
            g = len(group_keys)
            group_keys.append(op)
            group_rows.append(0)
        layer_w.append((g, group_rows[g], ip, op))
        group_rows[g] += ip

    # Vector pack: rows 0..5 biases, 6..11 gammas, 12..17 betas, 18 final bias.
    vec_rows = 3 * n_hidden + 1
    vec_rows_padded = _round_up(vec_rows, 8)
    vec_width = max(pdims[1:])

    return dict(dims=tuple(dims), pdims=tuple(pdims), n_layers=n_layers,
                n_hidden=n_hidden, group_keys=tuple(group_keys),
                group_rows=tuple(group_rows), layer_w=tuple(layer_w),
                vec_rows_padded=vec_rows_padded, vec_width=vec_width)


def _make_kernel(layout):
    """Whole MLP forward in one kernel; all operands live in VMEM.

    Ref order: x, [weight group buffers...], packed vectors, out.
    Weight groups are bf16 (MXU operands); packed vectors and output are f32.
    """
    layer_w = layout["layer_w"]
    n_hidden = layout["n_hidden"]
    n_groups = len(layout["group_keys"])

    def kernel(*refs):
        x_ref = refs[0]
        w_refs = refs[1:1 + n_groups]
        vec_ref = refs[1 + n_groups]
        o_ref = refs[2 + n_groups]

        h = x_ref[...]                                   # (B, in_pad) bf16

        for i in range(n_hidden):
            g, r0, ip, op = layer_w[i]
            w = w_refs[g][r0:r0 + ip, :op]               # (ip, op) bf16, static slice
            b = vec_ref[i:i + 1, :op]                    # (1, op) f32
            gamma = vec_ref[n_hidden + i:n_hidden + i + 1, :op]
            beta = vec_ref[2 * n_hidden + i:2 * n_hidden + i + 1, :op]

            # Linear: bf16 operands, f32 accumulation on the MXU.
            z = jnp.dot(h, w, preferred_element_type=jnp.float32) + b
            # LeakyReLU (slope < 1): mul + max instead of cmp + select + mul.
            z = jnp.maximum(z, LEAKY_SLOPE * z)
            # BatchNorm1d with live batch statistics, fused to one scale/shift:
            # single pass for mean and E[x^2]; rsqrt on the EUP; var clamped >=0.
            mean = jnp.mean(z, axis=0, keepdims=True)
            var = jnp.mean(z * z, axis=0, keepdims=True) - mean * mean
            var = jnp.maximum(var, 0.0)
            scale = gamma * jax.lax.rsqrt(var + BN_EPS)
            shift = beta - mean * scale
            z = z * scale + shift
            # Next matmul's LHS in bf16 (f32 accumulation keeps precision).
            h = z.astype(jnp.bfloat16)

        # Final Linear.  Padded logit lanes carry bias == NEG_MASK so they
        # contribute exp(~-1e30) == 0 to the LogSoftmax denominator.
        g, r0, ip, op = layer_w[-1]
        w = w_refs[g][r0:r0 + ip, :op]
        b_last = vec_ref[3 * n_hidden:3 * n_hidden + 1, :op]
        logits = jnp.dot(h, w, preferred_element_type=jnp.float32) + b_last

        # LogSoftmax(dim=-1), lane-dense (padded-width) output store.
        m = jnp.max(logits, axis=-1, keepdims=True)
        s = logits - m
        lse = jnp.log(jnp.sum(jnp.exp(s), axis=-1, keepdims=True))
        o_ref[...] = (s - lse).astype(o_ref.dtype)

    return kernel


@functools.partial(jax.jit, static_argnames=("input_size", "output_size"))
def image_classifier_forward(x, padded_params, *, input_size, output_size):
    """padded_params: {"w_groups": [bf16 (rows, lane) buffers], "vec": f32 (24, W)}."""
    layout = _build_layout(input_size, output_size)
    b = x.shape[0]
    in_pad = layout["pdims"][0]
    out_pad = layout["pdims"][-1]

    # bf16 x from the wrapper: halves x DMA bytes, drops an in-kernel convert.
    x = x.astype(jnp.bfloat16)
    if in_pad != x.shape[1]:
        x = jnp.pad(x, ((0, 0), (0, in_pad - x.shape[1])))

    flat_inputs = [x, *padded_params["w_groups"], padded_params["vec"]]

    vmem_spec = pl.BlockSpec(memory_space=pltpu.MemorySpace.VMEM)
    out = pl.pallas_call(
        _make_kernel(layout),
        out_shape=jax.ShapeDtypeStruct((b, out_pad), jnp.float32),
        in_specs=[vmem_spec] * len(flat_inputs),
        out_specs=vmem_spec,
        # Working set is ~1.5 MiB (bf16 weights + packed vectors + tiny
        # activations); 16 MiB leaves ample headroom, including v7x (64 MiB).
        compiler_params=pltpu.CompilerParams(vmem_limit_bytes=16 << 20),
    )(*flat_inputs)
    return out[:, :output_size]


def init_params(key, input_size, output_size):
    """Deterministic synthetic parameters (PyTorch-like uniform init), f32,
    unpadded.  Weights stored transposed vs. PyTorch: (in, out)."""
    dims = [input_size, *HIDDEN, output_size]
    weights, biases, gammas, betas = [], [], [], []
    for i in range(len(dims) - 1):
        fan_in, fan_out = dims[i], dims[i + 1]
        key, kw, kb = jax.random.split(key, 3)
        bound = 1.0 / jnp.sqrt(jnp.float32(fan_in))
        w = jax.random.uniform(kw, (fan_in, fan_out), jnp.float32, -bound, bound)
        bi = jax.random.uniform(kb, (1, fan_out), jnp.float32, -bound, bound)
        weights.append(w)
        biases.append(bi)
        if i < len(HIDDEN):  # BatchNorm after every hidden layer
            gammas.append(jnp.ones((1, fan_out), jnp.float32))
            betas.append(jnp.zeros((1, fan_out), jnp.float32))
    return {"weights": weights, "biases": biases, "gammas": gammas, "betas": betas}


def prepare_padded_params(params, input_size, output_size):
    """Pack parameters for the kernel:
      * every feature dim zero-padded to a multiple of 128,
      * weights cast to bf16 and concatenated (sublane axis) into per-lane-width
        group buffers,
      * all 19 bias/gamma/beta vectors packed into one (24, 512) f32 buffer.
    Padded BN columns get gamma=0/beta=0 (stay exactly 0); padded final-logit
    columns get bias=NEG_MASK so LogSoftmax ignores them.
    TODO(synk): optional fp8 (v7x) / int8 (v5e,v6e) weight path with
    per-output-channel scales folded into the BN scale — needs accuracy sign-off."""
    layout = _build_layout(input_size, output_size)
    dims = layout["dims"]
    pdims = layout["pdims"]
    n_hidden = layout["n_hidden"]

    # Weight group buffers.
    groups = [jnp.zeros((rows, lane), jnp.float32)
              for lane, rows in zip(layout["group_keys"], layout["group_rows"])]
    for i, (g, r0, _ip, _op) in enumerate(layout["layer_w"]):
        di, do = dims[i], dims[i + 1]
        groups[g] = groups[g].at[r0:r0 + di, :do].set(params["weights"][i])
    w_groups = [grp.astype(jnp.bfloat16) for grp in groups]

    # Packed bias/gamma/beta buffer.
    vec = jnp.zeros((layout["vec_rows_padded"], layout["vec_width"]), jnp.float32)
    for i in range(n_hidden):
        do = dims[i + 1]
        vec = vec.at[i, :do].set(params["biases"][i][0])
        vec = vec.at[n_hidden + i, :do].set(params["gammas"][i][0])
        vec = vec.at[2 * n_hidden + i, :do].set(params["betas"][i][0])
    do, op = dims[-1], pdims[-1]
    last_row = jnp.zeros((layout["vec_width"],), jnp.float32)
    last_row = last_row.at[:op].set(NEG_MASK)
    last_row = last_row.at[:do].set(params["biases"][-1][0])
    vec = vec.at[3 * n_hidden, :].set(last_row)

    return {"w_groups": w_groups, "vec": vec}


def reference_forward(x, params):
    """Pure-JAX reference mirroring the kernel's numerics (bf16 matmul
    operands, f32 accumulation, fused training-mode BN with batch statistics)."""
    h = x.astype(jnp.float32)
    for i in range(len(HIDDEN)):
        h = jnp.dot(h.astype(jnp.bfloat16), params["weights"][i].astype(jnp.bfloat16),
                    preferred_element_type=jnp.float32) + params["biases"][i]
        h = jnp.maximum(h, LEAKY_SLOPE * h)
        mean = jnp.mean(h, axis=0, keepdims=True)
        var = jnp.maximum(jnp.mean(h * h, axis=0, keepdims=True) - mean * mean, 0.0)
        h = (h - mean) * jax.lax.rsqrt(var + BN_EPS) * params["gammas"][i] + params["betas"][i]
    h = jnp.dot(h.astype(jnp.bfloat16), params["weights"][-1].astype(jnp.bfloat16),
                preferred_element_type=jnp.float32) + params["biases"][-1]
    return jax.nn.log_softmax(h, axis=-1)


if __name__ == "__main__":
    INPUT_SIZE = 256   # e.g. a flattened 16x16 single-channel image
    OUTPUT_SIZE = 10
    BATCH = 8

    key = jax.random.PRNGKey(0)
    key, kx = jax.random.split(key)
    x = jax.random.normal(kx, (BATCH, INPUT_SIZE), jnp.float32)
    params = init_params(key, INPUT_SIZE, OUTPUT_SIZE)
    padded_params = prepare_padded_params(params, INPUT_SIZE, OUTPUT_SIZE)

    y = image_classifier_forward(
        x, padded_params, input_size=INPUT_SIZE, output_size=OUTPUT_SIZE)
    y = jax.block_until_ready(y)

    y_ref = reference_forward(x, params)
    assert y.shape == (BATCH, OUTPUT_SIZE)
    max_err = jnp.max(jnp.abs(y - y_ref))
    assert jnp.allclose(y, y_ref, atol=5e-3, rtol=5e-3), f"max abs err {max_err}"

    print("KERNEL_OK")
</pallas_src>

<mosaic_0001>
module attributes {stable_mosaic.version = 11 : i64} {
  func.func @kernel(%arg0: memref<8x256xbf16, #tpu.memory_space<vmem>>, %arg1: memref<768x512xbf16, #tpu.memory_space<vmem>>, %arg2: memref<512x384xbf16, #tpu.memory_space<vmem>>, %arg3: memref<384x256xbf16, #tpu.memory_space<vmem>>, %arg4: memref<512x128xbf16, #tpu.memory_space<vmem>>, %arg5: memref<24x512xf32, #tpu.memory_space<vmem>>, %arg6: memref<8x128xf32, #tpu.memory_space<vmem>>) attributes {dimension_semantics = [], scalar_prefetch = 0 : i64, scratch_operands = 0 : i64, tpu.core_type = #tpu.core_type<tc>} {
    %c0 = arith.constant 0 : index
    %c0_0 = arith.constant 0 : index
    %0 = vector.load %arg0[%c0, %c0_0] : memref<8x256xbf16, #tpu.memory_space<vmem>>, vector<8x256xbf16>
    %c0_1 = arith.constant 0 : index
    %c0_2 = arith.constant 0 : index
    %1 = vector.load %arg1[%c0_1, %c0_2] : memref<768x512xbf16, #tpu.memory_space<vmem>>, vector<256x512xbf16>
    %c0_3 = arith.constant 0 : index
    %c0_4 = arith.constant 0 : index
    %2 = vector.load %arg5[%c0_3, %c0_4] : memref<24x512xf32, #tpu.memory_space<vmem>>, vector<1x512xf32>
    %c6 = arith.constant 6 : index
    %c0_5 = arith.constant 0 : index
    %3 = vector.load %arg5[%c6, %c0_5] : memref<24x512xf32, #tpu.memory_space<vmem>>, vector<1x512xf32>
    %c12 = arith.constant 12 : index
    %c0_6 = arith.constant 0 : index
    %4 = vector.load %arg5[%c12, %c0_6] : memref<24x512xf32, #tpu.memory_space<vmem>>, vector<1x512xf32>
    %cst = arith.constant dense<0.000000e+00> : vector<8x512xf32>
    %5 = tpu.matmul %0, %1, %cst {dimension_numbers = #tpu.dot_dimension_numbers<[1], [0], [0], [1], [0, 0, 1, 1], [], []>} : vector<8x256xbf16>, vector<256x512xbf16>, vector<8x512xf32> -> vector<8x512xf32>
    %6 = vector.broadcast %2 : vector<1x512xf32> to vector<8x512xf32>
    %7 = arith.addf %5, %6 : vector<8x512xf32>
    %cst_7 = arith.constant 0.00999999977 : f32
    %8 = vector.broadcast %cst_7 : f32 to vector<8x512xf32>
    %9 = arith.mulf %8, %7 : vector<8x512xf32>
    %10 = arith.maximumf %7, %9 : vector<8x512xf32>
    %cst_8 = arith.constant dense<0.000000e+00> : vector<512xf32>
    %11 = vector.multi_reduction <add>, %10, %cst_8 [0] : vector<8x512xf32> to vector<512xf32>
    %12 = vector.shape_cast %11 : vector<512xf32> to vector<1x512xf32>
    %cst_9 = arith.constant 8.000000e+00 : f32
    %13 = vector.broadcast %cst_9 : f32 to vector<1x512xf32>
    %14 = arith.divf %12, %13 : vector<1x512xf32>
    %15 = arith.mulf %10, %10 : vector<8x512xf32>
    %cst_10 = arith.constant dense<0.000000e+00> : vector<512xf32>
    %16 = vector.multi_reduction <add>, %15, %cst_10 [0] : vector<8x512xf32> to vector<512xf32>
    %17 = vector.shape_cast %16 : vector<512xf32> to vector<1x512xf32>
    %cst_11 = arith.constant 8.000000e+00 : f32
    %18 = vector.broadcast %cst_11 : f32 to vector<1x512xf32>
    %19 = arith.divf %17, %18 : vector<1x512xf32>
    %20 = arith.mulf %14, %14 : vector<1x512xf32>
    %21 = arith.subf %19, %20 : vector<1x512xf32>
    %cst_12 = arith.constant 0.000000e+00 : f32
    %22 = vector.broadcast %cst_12 : f32 to vector<1x512xf32>
    %23 = arith.maximumf %21, %22 : vector<1x512xf32>
    %cst_13 = arith.constant 9.99999974E-6 : f32
    %24 = vector.broadcast %cst_13 : f32 to vector<1x512xf32>
    %25 = arith.addf %23, %24 : vector<1x512xf32>
    %26 = math.rsqrt %25 : vector<1x512xf32>
    %27 = arith.mulf %3, %26 : vector<1x512xf32>
    %28 = arith.mulf %14, %27 : vector<1x512xf32>
    %29 = arith.subf %4, %28 : vector<1x512xf32>
    %30 = vector.broadcast %27 : vector<1x512xf32> to vector<8x512xf32>
    %31 = arith.mulf %10, %30 : vector<8x512xf32>
    %32 = vector.broadcast %29 : vector<1x512xf32> to vector<8x512xf32>
    %33 = arith.addf %31, %32 : vector<8x512xf32>
    %34 = arith.truncf %33 : vector<8x512xf32> to vector<8x512xbf16>
    %c256 = arith.constant 256 : index
    %c0_14 = arith.constant 0 : index
    %35 = vector.load %arg1[%c256, %c0_14] : memref<768x512xbf16, #tpu.memory_space<vmem>>, vector<512x512xbf16>
    %c1 = arith.constant 1 : index
    %c0_15 = arith.constant 0 : index
    %36 = vector.load %arg5[%c1, %c0_15] : memref<24x512xf32, #tpu.memory_space<vmem>>, vector<1x512xf32>
    %c7 = arith.constant 7 : index
    %c0_16 = arith.constant 0 : index
    %37 = vector.load %arg5[%c7, %c0_16] : memref<24x512xf32, #tpu.memory_space<vmem>>, vector<1x512xf32>
    %c13 = arith.constant 13 : index
    %c0_17 = arith.constant 0 : index
    %38 = vector.load %arg5[%c13, %c0_17] : memref<24x512xf32, #tpu.memory_space<vmem>>, vector<1x512xf32>
    %cst_18 = arith.constant dense<0.000000e+00> : vector<8x512xf32>
    %39 = tpu.matmul %34, %35, %cst_18 {dimension_numbers = #tpu.dot_dimension_numbers<[1], [0], [0], [1], [0, 0, 1, 1], [], []>} : vector<8x512xbf16>, vector<512x512xbf16>, vector<8x512xf32> -> vector<8x512xf32>
    %40 = vector.broadcast %36 : vector<1x512xf32> to vector<8x512xf32>
    %41 = arith.addf %39, %40 : vector<8x512xf32>
    %cst_19 = arith.constant 0.00999999977 : f32
    %42 = vector.broadcast %cst_19 : f32 to vector<8x512xf32>
    %43 = arith.mulf %42, %41 : vector<8x512xf32>
    %44 = arith.maximumf %41, %43 : vector<8x512xf32>
    %cst_20 = arith.constant dense<0.000000e+00> : vector<512xf32>
    %45 = vector.multi_reduction <add>, %44, %cst_20 [0] : vector<8x512xf32> to vector<512xf32>
    %46 = vector.shape_cast %45 : vector<512xf32> to vector<1x512xf32>
    %cst_21 = arith.constant 8.000000e+00 : f32
    %47 = vector.broadcast %cst_21 : f32 to vector<1x512xf32>
    %48 = arith.divf %46, %47 : vector<1x512xf32>
    %49 = arith.mulf %44, %44 : vector<8x512xf32>
    %cst_22 = arith.constant dense<0.000000e+00> : vector<512xf32>
    %50 = vector.multi_reduction <add>, %49, %cst_22 [0] : vector<8x512xf32> to vector<512xf32>
    %51 = vector.shape_cast %50 : vector<512xf32> to vector<1x512xf32>
    %cst_23 = arith.constant 8.000000e+00 : f32
    %52 = vector.broadcast %cst_23 : f32 to vector<1x512xf32>
    %53 = arith.divf %51, %52 : vector<1x512xf32>
    %54 = arith.mulf %48, %48 : vector<1x512xf32>
    %55 = arith.subf %53, %54 : vector<1x512xf32>
    %cst_24 = arith.constant 0.000000e+00 : f32
    %56 = vector.broadcast %cst_24 : f32 to vector<1x512xf32>
    %57 = arith.maximumf %55, %56 : vector<1x512xf32>
    %cst_25 = arith.constant 9.99999974E-6 : f32
    %58 = vector.broadcast %cst_25 : f32 to vector<1x512xf32>
    %59 = arith.addf %57, %58 : vector<1x512xf32>
    %60 = math.rsqrt %59 : vector<1x512xf32>
    %61 = arith.mulf %37, %60 : vector<1x512xf32>
    %62 = arith.mulf %48, %61 : vector<1x512xf32>
    %63 = arith.subf %38, %62 : vector<1x512xf32>
    %64 = vector.broadcast %61 : vector<1x512xf32> to vector<8x512xf32>
    %65 = arith.mulf %44, %64 : vector<8x512xf32>
    %66 = vector.broadcast %63 : vector<1x512xf32> to vector<8x512xf32>
    %67 = arith.addf %65, %66 : vector<8x512xf32>
    %68 = arith.truncf %67 : vector<8x512xf32> to vector<8x512xbf16>
    %c0_26 = arith.constant 0 : index
    %c0_27 = arith.constant 0 : index
    %69 = vector.load %arg2[%c0_26, %c0_27] : memref<512x384xbf16, #tpu.memory_space<vmem>>, vector<512x384xbf16>
    %c2 = arith.constant 2 : index
    %c0_28 = arith.constant 0 : index
    %70 = vector.load %arg5[%c2, %c0_28] : memref<24x512xf32, #tpu.memory_space<vmem>>, vector<1x384xf32>
    %c8 = arith.constant 8 : index
    %c0_29 = arith.constant 0 : index
    %71 = vector.load %arg5[%c8, %c0_29] : memref<24x512xf32, #tpu.memory_space<vmem>>, vector<1x384xf32>
    %c14 = arith.constant 14 : index
    %c0_30 = arith.constant 0 : index
    %72 = vector.load %arg5[%c14, %c0_30] : memref<24x512xf32, #tpu.memory_space<vmem>>, vector<1x384xf32>
    %cst_31 = arith.constant dense<0.000000e+00> : vector<8x384xf32>
    %73 = tpu.matmul %68, %69, %cst_31 {dimension_numbers = #tpu.dot_dimension_numbers<[1], [0], [0], [1], [0, 0, 1, 1], [], []>} : vector<8x512xbf16>, vector<512x384xbf16>, vector<8x384xf32> -> vector<8x384xf32>
    %74 = vector.broadcast %70 : vector<1x384xf32> to vector<8x384xf32>
    %75 = arith.addf %73, %74 : vector<8x384xf32>
    %cst_32 = arith.constant 0.00999999977 : f32
    %76 = vector.broadcast %cst_32 : f32 to vector<8x384xf32>
    %77 = arith.mulf %76, %75 : vector<8x384xf32>
    %78 = arith.maximumf %75, %77 : vector<8x384xf32>
    %cst_33 = arith.constant dense<0.000000e+00> : vector<384xf32>
    %79 = vector.multi_reduction <add>, %78, %cst_33 [0] : vector<8x384xf32> to vector<384xf32>
    %80 = vector.shape_cast %79 : vector<384xf32> to vector<1x384xf32>
    %cst_34 = arith.constant 8.000000e+00 : f32
    %81 = vector.broadcast %cst_34 : f32 to vector<1x384xf32>
    %82 = arith.divf %80, %81 : vector<1x384xf32>
    %83 = arith.mulf %78, %78 : vector<8x384xf32>
    %cst_35 = arith.constant dense<0.000000e+00> : vector<384xf32>
    %84 = vector.multi_reduction <add>, %83, %cst_35 [0] : vector<8x384xf32> to vector<384xf32>
    %85 = vector.shape_cast %84 : vector<384xf32> to vector<1x384xf32>
    %cst_36 = arith.constant 8.000000e+00 : f32
    %86 = vector.broadcast %cst_36 : f32 to vector<1x384xf32>
    %87 = arith.divf %85, %86 : vector<1x384xf32>
    %88 = arith.mulf %82, %82 : vector<1x384xf32>
    %89 = arith.subf %87, %88 : vector<1x384xf32>
    %cst_37 = arith.constant 0.000000e+00 : f32
    %90 = vector.broadcast %cst_37 : f32 to vector<1x384xf32>
    %91 = arith.maximumf %89, %90 : vector<1x384xf32>
    %cst_38 = arith.constant 9.99999974E-6 : f32
    %92 = vector.broadcast %cst_38 : f32 to vector<1x384xf32>
    %93 = arith.addf %91, %92 : vector<1x384xf32>
    %94 = math.rsqrt %93 : vector<1x384xf32>
    %95 = arith.mulf %71, %94 : vector<1x384xf32>
    %96 = arith.mulf %82, %95 : vector<1x384xf32>
    %97 = arith.subf %72, %96 : vector<1x384xf32>
    %98 = vector.broadcast %95 : vector<1x384xf32> to vector<8x384xf32>
    %99 = arith.mulf %78, %98 : vector<8x384xf32>
    %100 = vector.broadcast %97 : vector<1x384xf32> to vector<8x384xf32>
    %101 = arith.addf %99, %100 : vector<8x384xf32>
    %102 = arith.truncf %101 : vector<8x384xf32> to vector<8x384xbf16>
    %c0_39 = arith.constant 0 : index
    %c0_40 = arith.constant 0 : index
    %103 = vector.load %arg3[%c0_39, %c0_40] : memref<384x256xbf16, #tpu.memory_space<vmem>>, vector<384x256xbf16>
    %c3 = arith.constant 3 : index
    %c0_41 = arith.constant 0 : index
    %104 = vector.load %arg5[%c3, %c0_41] : memref<24x512xf32, #tpu.memory_space<vmem>>, vector<1x256xf32>
    %c9 = arith.constant 9 : index
    %c0_42 = arith.constant 0 : index
    %105 = vector.load %arg5[%c9, %c0_42] : memref<24x512xf32, #tpu.memory_space<vmem>>, vector<1x256xf32>
    %c15 = arith.constant 15 : index
    %c0_43 = arith.constant 0 : index
    %106 = vector.load %arg5[%c15, %c0_43] : memref<24x512xf32, #tpu.memory_space<vmem>>, vector<1x256xf32>
    %cst_44 = arith.constant dense<0.000000e+00> : vector<8x256xf32>
    %107 = tpu.matmul %102, %103, %cst_44 {dimension_numbers = #tpu.dot_dimension_numbers<[1], [0], [0], [1], [0, 0, 1, 1], [], []>} : vector<8x384xbf16>, vector<384x256xbf16>, vector<8x256xf32> -> vector<8x256xf32>
    %108 = vector.broadcast %104 : vector<1x256xf32> to vector<8x256xf32>
    %109 = arith.addf %107, %108 : vector<8x256xf32>
    %cst_45 = arith.constant 0.00999999977 : f32
    %110 = vector.broadcast %cst_45 : f32 to vector<8x256xf32>
    %111 = arith.mulf %110, %109 : vector<8x256xf32>
    %112 = arith.maximumf %109, %111 : vector<8x256xf32>
    %cst_46 = arith.constant dense<0.000000e+00> : vector<256xf32>
    %113 = vector.multi_reduction <add>, %112, %cst_46 [0] : vector<8x256xf32> to vector<256xf32>
    %114 = vector.shape_cast %113 : vector<256xf32> to vector<1x256xf32>
    %cst_47 = arith.constant 8.000000e+00 : f32
    %115 = vector.broadcast %cst_47 : f32 to vector<1x256xf32>
    %116 = arith.divf %114, %115 : vector<1x256xf32>
    %117 = arith.mulf %112, %112 : vector<8x256xf32>
    %cst_48 = arith.constant dense<0.000000e+00> : vector<256xf32>
    %118 = vector.multi_reduction <add>, %117, %cst_48 [0] : vector<8x256xf32> to vector<256xf32>
    %119 = vector.shape_cast %118 : vector<256xf32> to vector<1x256xf32>
    %cst_49 = arith.constant 8.000000e+00 : f32
    %120 = vector.broadcast %cst_49 : f32 to vector<1x256xf32>
    %121 = arith.divf %119, %120 : vector<1x256xf32>
    %122 = arith.mulf %116, %116 : vector<1x256xf32>
    %123 = arith.subf %121, %122 : vector<1x256xf32>
    %cst_50 = arith.constant 0.000000e+00 : f32
    %124 = vector.broadcast %cst_50 : f32 to vector<1x256xf32>
    %125 = arith.maximumf %123, %124 : vector<1x256xf32>
    %cst_51 = arith.constant 9.99999974E-6 : f32
    %126 = vector.broadcast %cst_51 : f32 to vector<1x256xf32>
    %127 = arith.addf %125, %126 : vector<1x256xf32>
    %128 = math.rsqrt %127 : vector<1x256xf32>
    %129 = arith.mulf %105, %128 : vector<1x256xf32>
    %130 = arith.mulf %116, %129 : vector<1x256xf32>
    %131 = arith.subf %106, %130 : vector<1x256xf32>
    %132 = vector.broadcast %129 : vector<1x256xf32> to vector<8x256xf32>
    %133 = arith.mulf %112, %132 : vector<8x256xf32>
    %134 = vector.broadcast %131 : vector<1x256xf32> to vector<8x256xf32>
    %135 = arith.addf %133, %134 : vector<8x256xf32>
    %136 = arith.truncf %135 : vector<8x256xf32> to vector<8x256xbf16>
    %c0_52 = arith.constant 0 : index
    %c0_53 = arith.constant 0 : index
    %137 = vector.load %arg4[%c0_52, %c0_53] : memref<512x128xbf16, #tpu.memory_space<vmem>>, vector<256x128xbf16>
    %c4 = arith.constant 4 : index
    %c0_54 = arith.constant 0 : index
    %138 = vector.load %arg5[%c4, %c0_54] : memref<24x512xf32, #tpu.memory_space<vmem>>, vector<1x128xf32>
    %c10 = arith.constant 10 : index
    %c0_55 = arith.constant 0 : index
    %139 = vector.load %arg5[%c10, %c0_55] : memref<24x512xf32, #tpu.memory_space<vmem>>, vector<1x128xf32>
    %c16 = arith.constant 16 : index
    %c0_56 = arith.constant 0 : index
    %140 = vector.load %arg5[%c16, %c0_56] : memref<24x512xf32, #tpu.memory_space<vmem>>, vector<1x128xf32>
    %cst_57 = arith.constant dense<0.000000e+00> : vector<8x128xf32>
    %141 = tpu.matmul %136, %137, %cst_57 {dimension_numbers = #tpu.dot_dimension_numbers<[1], [0], [0], [1], [0, 0, 1, 1], [], []>} : vector<8x256xbf16>, vector<256x128xbf16>, vector<8x128xf32> -> vector<8x128xf32>
    %142 = vector.broadcast %138 : vector<1x128xf32> to vector<8x128xf32>
    %143 = arith.addf %141, %142 : vector<8x128xf32>
    %cst_58 = arith.constant 0.00999999977 : f32
    %144 = vector.broadcast %cst_58 : f32 to vector<8x128xf32>
    %145 = arith.mulf %144, %143 : vector<8x128xf32>
    %146 = arith.maximumf %143, %145 : vector<8x128xf32>
    %cst_59 = arith.constant dense<0.000000e+00> : vector<128xf32>
    %147 = vector.multi_reduction <add>, %146, %cst_59 [0] : vector<8x128xf32> to vector<128xf32>
    %148 = vector.shape_cast %147 : vector<128xf32> to vector<1x128xf32>
    %cst_60 = arith.constant 8.000000e+00 : f32
    %149 = vector.broadcast %cst_60 : f32 to vector<1x128xf32>
    %150 = arith.divf %148, %149 : vector<1x128xf32>
    %151 = arith.mulf %146, %146 : vector<8x128xf32>
    %cst_61 = arith.constant dense<0.000000e+00> : vector<128xf32>
    %152 = vector.multi_reduction <add>, %151, %cst_61 [0] : vector<8x128xf32> to vector<128xf32>
    %153 = vector.shape_cast %152 : vector<128xf32> to vector<1x128xf32>
    %cst_62 = arith.constant 8.000000e+00 : f32
    %154 = vector.broadcast %cst_62 : f32 to vector<1x128xf32>
    %155 = arith.divf %153, %154 : vector<1x128xf32>
    %156 = arith.mulf %150, %150 : vector<1x128xf32>
    %157 = arith.subf %155, %156 : vector<1x128xf32>
    %cst_63 = arith.constant 0.000000e+00 : f32
    %158 = vector.broadcast %cst_63 : f32 to vector<1x128xf32>
    %159 = arith.maximumf %157, %158 : vector<1x128xf32>
    %cst_64 = arith.constant 9.99999974E-6 : f32
    %160 = vector.broadcast %cst_64 : f32 to vector<1x128xf32>
    %161 = arith.addf %159, %160 : vector<1x128xf32>
    %162 = math.rsqrt %161 : vector<1x128xf32>
    %163 = arith.mulf %139, %162 : vector<1x128xf32>
    %164 = arith.mulf %150, %163 : vector<1x128xf32>
    %165 = arith.subf %140, %164 : vector<1x128xf32>
    %166 = vector.broadcast %163 : vector<1x128xf32> to vector<8x128xf32>
    %167 = arith.mulf %146, %166 : vector<8x128xf32>
    %168 = vector.broadcast %165 : vector<1x128xf32> to vector<8x128xf32>
    %169 = arith.addf %167, %168 : vector<8x128xf32>
    %170 = arith.truncf %169 : vector<8x128xf32> to vector<8x128xbf16>
    %c256_65 = arith.constant 256 : index
    %c0_66 = arith.constant 0 : index
    %171 = vector.load %arg4[%c256_65, %c0_66] : memref<512x128xbf16, #tpu.memory_space<vmem>>, vector<128x128xbf16>
    %c5 = arith.constant 5 : index
    %c0_67 = arith.constant 0 : index
    %172 = vector.load %arg5[%c5, %c0_67] : memref<24x512xf32, #tpu.memory_space<vmem>>, vector<1x128xf32>
    %c11 = arith.constant 11 : index
    %c0_68 = arith.constant 0 : index
    %173 = vector.load %arg5[%c11, %c0_68] : memref<24x512xf32, #tpu.memory_space<vmem>>, vector<1x128xf32>
    %c17 = arith.constant 17 : index
    %c0_69 = arith.constant 0 : index
    %174 = vector.load %arg5[%c17, %c0_69] : memref<24x512xf32, #tpu.memory_space<vmem>>, vector<1x128xf32>
    %cst_70 = arith.constant dense<0.000000e+00> : vector<8x128xf32>
    %175 = tpu.matmul %170, %171, %cst_70 {dimension_numbers = #tpu.dot_dimension_numbers<[1], [0], [0], [1], [0, 0, 1, 1], [], []>} : vector<8x128xbf16>, vector<128x128xbf16>, vector<8x128xf32> -> vector<8x128xf32>
    %176 = vector.broadcast %172 : vector<1x128xf32> to vector<8x128xf32>
    %177 = arith.addf %175, %176 : vector<8x128xf32>
    %cst_71 = arith.constant 0.00999999977 : f32
    %178 = vector.broadcast %cst_71 : f32 to vector<8x128xf32>
    %179 = arith.mulf %178, %177 : vector<8x128xf32>
    %180 = arith.maximumf %177, %179 : vector<8x128xf32>
    %cst_72 = arith.constant dense<0.000000e+00> : vector<128xf32>
    %181 = vector.multi_reduction <add>, %180, %cst_72 [0] : vector<8x128xf32> to vector<128xf32>
    %182 = vector.shape_cast %181 : vector<128xf32> to vector<1x128xf32>
    %cst_73 = arith.constant 8.000000e+00 : f32
    %183 = vector.broadcast %cst_73 : f32 to vector<1x128xf32>
    %184 = arith.divf %182, %183 : vector<1x128xf32>
    %185 = arith.mulf %180, %180 : vector<8x128xf32>
    %cst_74 = arith.constant dense<0.000000e+00> : vector<128xf32>
    %186 = vector.multi_reduction <add>, %185, %cst_74 [0] : vector<8x128xf32> to vector<128xf32>
    %187 = vector.shape_cast %186 : vector<128xf32> to vector<1x128xf32>
    %cst_75 = arith.constant 8.000000e+00 : f32
    %188 = vector.broadcast %cst_75 : f32 to vector<1x128xf32>
    %189 = arith.divf %187, %188 : vector<1x128xf32>
    %190 = arith.mulf %184, %184 : vector<1x128xf32>
    %191 = arith.subf %189, %190 : vector<1x128xf32>
    %cst_76 = arith.constant 0.000000e+00 : f32
    %192 = vector.broadcast %cst_76 : f32 to vector<1x128xf32>
    %193 = arith.maximumf %191, %192 : vector<1x128xf32>
    %cst_77 = arith.constant 9.99999974E-6 : f32
    %194 = vector.broadcast %cst_77 : f32 to vector<1x128xf32>
    %195 = arith.addf %193, %194 : vector<1x128xf32>
    %196 = math.rsqrt %195 : vector<1x128xf32>
    %197 = arith.mulf %173, %196 : vector<1x128xf32>
    %198 = arith.mulf %184, %197 : vector<1x128xf32>
    %199 = arith.subf %174, %198 : vector<1x128xf32>
    %200 = vector.broadcast %197 : vector<1x128xf32> to vector<8x128xf32>
    %201 = arith.mulf %180, %200 : vector<8x128xf32>
    %202 = vector.broadcast %199 : vector<1x128xf32> to vector<8x128xf32>
    %203 = arith.addf %201, %202 : vector<8x128xf32>
    %204 = arith.truncf %203 : vector<8x128xf32> to vector<8x128xbf16>
    %c384 = arith.constant 384 : index
    %c0_78 = arith.constant 0 : index
    %205 = vector.load %arg4[%c384, %c0_78] : memref<512x128xbf16, #tpu.memory_space<vmem>>, vector<128x128xbf16>
    %c18 = arith.constant 18 : index
    %c0_79 = arith.constant 0 : index
    %206 = vector.load %arg5[%c18, %c0_79] : memref<24x512xf32, #tpu.memory_space<vmem>>, vector<1x128xf32>
    %cst_80 = arith.constant dense<0.000000e+00> : vector<8x128xf32>
    %207 = tpu.matmul %204, %205, %cst_80 {dimension_numbers = #tpu.dot_dimension_numbers<[1], [0], [0], [1], [0, 0, 1, 1], [], []>} : vector<8x128xbf16>, vector<128x128xbf16>, vector<8x128xf32> -> vector<8x128xf32>
    %208 = vector.broadcast %206 : vector<1x128xf32> to vector<8x128xf32>
    %209 = arith.addf %207, %208 : vector<8x128xf32>
    %cst_81 = arith.constant dense<0xFF800000> : vector<8xf32>
    %210 = vector.multi_reduction <maximumf>, %209, %cst_81 [1] : vector<8x128xf32> to vector<8xf32>
    %211 = vector.shape_cast %210 : vector<8xf32> to vector<8x1xf32>
    %212 = vector.broadcast %211 : vector<8x1xf32> to vector<8x128xf32>
    %213 = arith.subf %209, %212 : vector<8x128xf32>
    %214 = math.exp %213 : vector<8x128xf32>
    %cst_82 = arith.constant dense<0.000000e+00> : vector<8xf32>
    %215 = vector.multi_reduction <add>, %214, %cst_82 [1] : vector<8x128xf32> to vector<8xf32>
    %216 = vector.shape_cast %215 : vector<8xf32> to vector<8x1xf32>
    %217 = math.log %216 : vector<8x1xf32>
    %218 = vector.broadcast %217 : vector<8x1xf32> to vector<8x128xf32>
    %219 = arith.subf %213, %218 : vector<8x128xf32>
    %c0_83 = arith.constant 0 : index
    %c0_84 = arith.constant 0 : index
    %220 = vector.load %arg6[%c0_83, %c0_84] : memref<8x128xf32, #tpu.memory_space<vmem>>, vector<8x128xf32>
    tpu.vector_store %arg6[%c0_83, %c0_84], %219 {strides = array<i32>} : memref<8x128xf32, #tpu.memory_space<vmem>>, vector<8x128xf32>,
    return
  }
}

</mosaic_0001>

<llo_original>
// kernel: image_classifier_forward.1
$region0: #{image_classifier_forward.1}
  #allocation0 [shape = 'u32[]', space=smem, size = 0x4, offset = 0x4, fixed_abs, tag = 'smem constant byte address 0x4 - core index']
  #allocation1 [shape = 'u32[72,128]{1,0:T(1,128)}', space=vmem, size = 0x9000, scoped, tag = 'internal scratch']
  %s0 = inlined_call_operand.vmem [shape: bf16[8,256], index: 0, kind: input, shape index: {}]
  %s1 = inlined_call_operand.hbm [shape: bf16[768,512], index: 1, kind: input, shape index: {}]
  %s2 = inlined_call_operand.hbm [shape: bf16[512,384], index: 2, kind: input, shape index: {}]
  %s3 = inlined_call_operand.hbm [shape: bf16[384,256], index: 3, kind: input, shape index: {}]
  %s4 = inlined_call_operand.hbm [shape: bf16[512,128], index: 4, kind: input, shape index: {}]
  %s5 = inlined_call_operand.hbm [shape: f32[24,512], index: 5, kind: input, shape index: {}]
  %s6 = inlined_call_operand.hbm [shape: f32[8,128], index: 6, kind: output, shape index: {}]
  %s7 = sld [smem:[#allocation0]]
  $region54: #{image_classifier_forward.1} parent=0
    _
  %s9 = ssub.s32 1, %s7
  %s10 = scalar_select 0, %s9, %s7
  $region1: #{image_classifier_forward.1} parent=0
    #allocation2 [shape = 'u8[786432]{0}', space=vmem, size = 0xc0000, scoped, tag = 'input window, operand 1, single buffered']
    #allocation3 [shape = 's32[1]{0}', space=sflag, size = 0x4, scoped, tag = 'scoped memory for image_classifier_forward.1']
    #allocation4 [shape = 's32[1]{0}', space=sflag, size = 0x4, scoped, tag = 'scoped memory for image_classifier_forward.1']
    #allocation5 [shape = 'u8[393216]{0}', space=vmem, size = 0x60000, scoped, tag = 'input window, operand 2, single buffered']
    #allocation6 [shape = 's32[1]{0}', space=sflag, size = 0x4, scoped, tag = 'scoped memory for image_classifier_forward.1']
    #allocation7 [shape = 'u8[196608]{0}', space=vmem, size = 0x30000, scoped, tag = 'input window, operand 3, single buffered']
    #allocation8 [shape = 'u8[131072]{0}', space=vmem, size = 0x20000, scoped, tag = 'input window, operand 4, single buffered']
    #allocation9 [shape = 's32[1]{0}', space=sflag, size = 0x4, scoped, tag = 'scoped memory for image_classifier_forward.1']
    #allocation10 [shape = 'u8[49152]{0}', space=vmem, size = 0xc000, scoped, tag = 'input window, operand 5, single buffered']
    #allocation11 [shape = 'u8[4096]{0}', space=vmem, size = 0x1000, scoped, tag = 'output window, operand 0, single buffered']
    %11 = vsyncpa [#allocation3], 0
    %12 = vsyncpa [#allocation6], 0
    %13 = vsyncpa [#allocation9], 0
    %14 = vsyncpa [#allocation4], 0
    // Predicated region
    $region2: #{image_classifier_forward.1} parent=1 // pred_check
      _
    $region3: #{image_classifier_forward.1} parent=1 // pred_check_branch
      %16 = sbr.rel (0) target = $region5
    $region4: #{image_classifier_forward.1} parent=1 // pred_region
      _
    $region5: #{image_classifier_forward.1} parent=1 // pred_fallthru
      _
    // Predicated region
    $region6: #{image_classifier_forward.1} parent=1 // pred_check
      _
    $region7: #{image_classifier_forward.1} parent=1 // pred_check_branch
      %18 = sbr.rel (0) target = $region9
    $region8: #{image_classifier_forward.1} parent=1 // pred_region
      %20 = vsyncadd [#allocation3], 0
      %s21 = sshll.u32 %s1, 4
      %s22 = int_to_ptr.hbm [resolvable:$true] %s21
      %s23 = sshll.u32 [#allocation2], 4
      %s24 = int_to_ptr.vmem [resolvable:$true] %s23
      %29 = dma.hbm_to_vmem [thread:$0]  %s22, 24576, %s24, [#allocation3], 256, 256, 16
    $region9: #{image_classifier_forward.1} parent=1 // pred_fallthru
      _
    // Predicated region
    $region10: #{image_classifier_forward.1} parent=1 // pred_check
      _
    $region11: #{image_classifier_forward.1} parent=1 // pred_check_branch
      %31 = sbr.rel (0) target = $region13
    $region12: #{image_classifier_forward.1} parent=1 // pred_region
      %33 = vsyncadd [#allocation6], 0
      %s34 = sshll.u32 %s2, 4
      %s35 = int_to_ptr.hbm [resolvable:$true] %s34
      %s36 = sshll.u32 [#allocation5], 4
      %s37 = int_to_ptr.vmem [resolvable:$true] %s36
      %42 = dma.hbm_to_vmem [thread:$0]  %s35, 12288, %s37, [#allocation6], 192, 192, 12
    $region13: #{image_classifier_forward.1} parent=1 // pred_fallthru
      _
    // Predicated region
    $region14: #{image_classifier_forward.1} parent=1 // pred_check
      _
    $region15: #{image_classifier_forward.1} parent=1 // pred_check_branch
      %44 = sbr.rel (0) target = $region17
    $region16: #{image_classifier_forward.1} parent=1 // pred_region
      %46 = vsyncadd [#allocation6], 0
      %s47 = sshll.u32 %s3, 4
      %s48 = int_to_ptr.hbm [resolvable:$true] %s47
      %s49 = sshll.u32 [#allocation7], 4
      %s50 = int_to_ptr.vmem [resolvable:$true] %s49
      %55 = dma.hbm_to_vmem [thread:$0]  %s48, 6144, %s50, [#allocation6], 128, 128, 8
    $region17: #{image_classifier_forward.1} parent=1 // pred_fallthru
      _
    // Predicated region
    $region18: #{image_classifier_forward.1} parent=1 // pred_check
      _
    $region19: #{image_classifier_forward.1} parent=1 // pred_check_branch
      %57 = sbr.rel (0) target = $region21
    $region20: #{image_classifier_forward.1} parent=1 // pred_region
      %59 = vsyncadd [#allocation9], 0
      %s60 = sshll.u32 %s4, 4
      %s61 = int_to_ptr.hbm [resolvable:$true] %s60
      %s62 = sshll.u32 [#allocation8], 4
      %s63 = int_to_ptr.vmem [resolvable:$true] %s62
      %68 = dma.hbm_to_vmem [thread:$0]  %s61, 4096, %s63, [#allocation9], 64, 64, 4
    $region21: #{image_classifier_forward.1} parent=1 // pred_fallthru
      _
    // Predicated region
    $region22: #{image_classifier_forward.1} parent=1 // pred_check
      _
    $region23: #{image_classifier_forward.1} parent=1 // pred_check_branch
      %70 = sbr.rel (0) target = $region25
    $region24: #{image_classifier_forward.1} parent=1 // pred_region
      %72 = vsyncadd [#allocation9], 0
      %s73 = sshll.u32 %s5, 4
      %s74 = int_to_ptr.hbm [resolvable:$true] %s73
      %s75 = sshll.u32 [#allocation10], 4
      %s76 = int_to_ptr.vmem [resolvable:$true] %s75
      %81 = dma.hbm_to_vmem [thread:$0]  %s74, 1536, %s76, [#allocation9], 512, 512, 32
    $region25: #{image_classifier_forward.1} parent=1 // pred_fallthru
      _
    // Predicated region
    $region26: #{image_classifier_forward.1} parent=1 // pred_check
      _
    $region27: #{image_classifier_forward.1} parent=1 // pred_check_branch
      %83 = sbr.rel (0) target = $region29
    $region28: #{image_classifier_forward.1} parent=1 // pred_region
      %85 = dma.done [#allocation3], 24576
    $region29: #{image_classifier_forward.1} parent=1 // pred_fallthru
      _
    // Predicated region
    $region30: #{image_classifier_forward.1} parent=1 // pred_check
      _
    $region31: #{image_classifier_forward.1} parent=1 // pred_check_branch
      %87 = sbr.rel (0) target = $region33
    $region32: #{image_classifier_forward.1} parent=1 // pred_region
      %89 = dma.done [#allocation6], 12288
    $region33: #{image_classifier_forward.1} parent=1 // pred_fallthru
      _
    // Predicated region
    $region34: #{image_classifier_forward.1} parent=1 // pred_check
      _
    $region35: #{image_classifier_forward.1} parent=1 // pred_check_branch
      %91 = sbr.rel (0) target = $region37
    $region36: #{image_classifier_forward.1} parent=1 // pred_region
      %93 = dma.done [#allocation6], 6144
    $region37: #{image_classifier_forward.1} parent=1 // pred_fallthru
      _
    // Predicated region
    $region38: #{image_classifier_forward.1} parent=1 // pred_check
      _
    $region39: #{image_classifier_forward.1} parent=1 // pred_check_branch
      %95 = sbr.rel (0) target = $region41
    $region40: #{image_classifier_forward.1} parent=1 // pred_region
      %97 = dma.done [#allocation9], 4096
    $region41: #{image_classifier_forward.1} parent=1 // pred_fallthru
      _
    // Predicated region
    $region42: #{image_classifier_forward.1} parent=1 // pred_check
      _
    $region43: #{image_classifier_forward.1} parent=1 // pred_check_branch
      %99 = sbr.rel (0) target = $region45
    $region44: #{image_classifier_forward.1} parent=1 // pred_region
      %101 = dma.done [#allocation9], 1536
    $region45: #{image_classifier_forward.1} parent=1 // pred_fallthru
      _
    %v102 = vld [vmem:[%s0] sm:$0xff]
    %v103 = vld [vmem:[#allocation2] sm:$0xff]
    %v104 = vld [vmem:[#allocation2 + $0x8] sm:$0xff]
    %v105 = vld [vmem:[#allocation2 + $0x10] sm:$0xff]
    %v106 = vld [vmem:[#allocation2 + $0x18] sm:$0xff]
    %v107 = vld [vmem:[#allocation2 + $0x20] sm:$0xff]
    %v108 = vld [vmem:[#allocation2 + $0x28] sm:$0xff]
    %v109 = vld [vmem:[#allocation2 + $0x30] sm:$0xff]
    %v110 = vld [vmem:[#allocation2 + $0x38] sm:$0xff]
    %v111 = vld [vmem:[#allocation2 + $0x40] sm:$0xff]
    %v112 = vld [vmem:[#allocation2 + $0x48] sm:$0xff]
    %v113 = vld [vmem:[#allocation2 + $0x50] sm:$0xff]
    %v114 = vld [vmem:[#allocation2 + $0x58] sm:$0xff]
    %v115 = vld [vmem:[#allocation2 + $0x60] sm:$0xff]
    %v116 = vld [vmem:[#allocation2 + $0x68] sm:$0xff]
    %v117 = vld [vmem:[#allocation2 + $0x70] sm:$0xff]
    %v118 = vld [vmem:[#allocation2 + $0x78] sm:$0xff]
    %v119 = vld [vmem:[#allocation2 + $0x80] sm:$0xff]
    %v120 = vld [vmem:[#allocation2 + $0x88] sm:$0xff]
    %v121 = vld [vmem:[#allocation2 + $0x90] sm:$0xff]
    %v122 = vld [vmem:[#allocation2 + $0x98] sm:$0xff]
    %v123 = vld [vmem:[#allocation2 + $0xa0] sm:$0xff]
    %v124 = vld [vmem:[#allocation2 + $0xa8] sm:$0xff]
    %v125 = vld [vmem:[#allocation2 + $0xb0] sm:$0xff]
    %v126 = vld [vmem:[#allocation2 + $0xb8] sm:$0xff]
    %v127 = vld [vmem:[#allocation2 + $0xc0] sm:$0xff]
    %v128 = vld [vmem:[#allocation2 + $0xc8] sm:$0xff]
    %v129 = vld [vmem:[#allocation2 + $0xd0] sm:$0xff]
    %v130 = vld [vmem:[#allocation2 + $0xd8] sm:$0xff]
    %v131 = vld [vmem:[#allocation2 + $0xe0] sm:$0xff]
    %v132 = vld [vmem:[#allocation2 + $0xe8] sm:$0xff]
    %v133 = vld [vmem:[#allocation2 + $0xf0] sm:$0xff]
    %v134 = vld [vmem:[#allocation2 + $0xf8] sm:$0xff]
    %v135 = vld [vmem:[#allocation2 + $0x100] sm:$0xff]
    %v136 = vld [vmem:[#allocation2 + $0x108] sm:$0xff]
    %v137 = vld [vmem:[#allocation2 + $0x110] sm:$0xff]
    %v138 = vld [vmem:[#allocation2 + $0x118] sm:$0xff]
    %v139 = vld [vmem:[#allocation2 + $0x120] sm:$0xff]
    %v140 = vld [vmem:[#allocation2 + $0x128] sm:$0xff]
    %v141 = vld [vmem:[#allocation2 + $0x130] sm:$0xff]
    %v142 = vld [vmem:[#allocation2 + $0x138] sm:$0xff]
    %v143 = vld [vmem:[#allocation2 + $0x140] sm:$0xff]
    %v144 = vld [vmem:[#allocation2 + $0x148] sm:$0xff]
    %v145 = vld [vmem:[#allocation2 + $0x150] sm:$0xff]
    %v146 = vld [vmem:[#allocation2 + $0x158] sm:$0xff]
    %v147 = vld [vmem:[#allocation2 + $0x160] sm:$0xff]
    %v148 = vld [vmem:[#allocation2 + $0x168] sm:$0xff]
    %v149 = vld [vmem:[#allocation2 + $0x170] sm:$0xff]
    %v150 = vld [vmem:[#allocation2 + $0x178] sm:$0xff]
    %v151 = vld [vmem:[#allocation2 + $0x180] sm:$0xff]
    %v152 = vld [vmem:[#allocation2 + $0x188] sm:$0xff]
    %v153 = vld [vmem:[#allocation2 + $0x190] sm:$0xff]
    %v154 = vld [vmem:[#allocation2 + $0x198] sm:$0xff]
    %v155 = vld [vmem:[#allocation2 + $0x1a0] sm:$0xff]
    %v156 = vld [vmem:[#allocation2 + $0x1a8] sm:$0xff]
    %v157 = vld [vmem:[#allocation2 + $0x1b0] sm:$0xff]
    %v158 = vld [vmem:[#allocation2 + $0x1b8] sm:$0xff]
    %v159 = vld [vmem:[#allocation2 + $0x1c0] sm:$0xff]
    %v160 = vld [vmem:[#allocation2 + $0x1c8] sm:$0xff]
    %v161 = vld [vmem:[#allocation2 + $0x1d0] sm:$0xff]
    %v162 = vld [vmem:[#allocation2 + $0x1d8] sm:$0xff]
    %v163 = vld [vmem:[#allocation2 + $0x1e0] sm:$0xff]
    %v164 = vld [vmem:[#allocation2 + $0x1e8] sm:$0xff]
    %v165 = vld [vmem:[#allocation2 + $0x1f0] sm:$0xff]
    %v166 = vld [vmem:[#allocation2 + $0x1f8] sm:$0xff]
    %v167 = vld [vmem:[#allocation10] ss:$8 sm:$0xf]
    %s168 = scalar_lea.vmem [#allocation10], 6
    %v169 = vld [vmem:[%s168] ss:$8 sm:$0xf]
    %s170 = scalar_lea.vmem [#allocation10], 36
    %v171 = vld [vmem:[%s170] ss:$8 sm:$0xf]
    %v173 = vperm.slane %v167, 0
    %v174 = vperm.slane %v167, 1
    %v175 = vperm.slane %v167, 2
    %v176 = vperm.slane %v167, 3
    %v182 = vunpack.c.l.b16 %v102
    %v183 = vunpack.c.h.b16 %v102
    %v184 = vpack.c.b16 %v182, %v182
    %v185 = vpack.c.b16 %v183, %v183
    %v252 = vunpack.c.l.b16 %v103
    %v253 = vunpack.c.h.b16 %v103
    %v254 = vunpack.c.l.b16 %v104
    %v255 = vunpack.c.h.b16 %v104
    %v256 = vunpack.c.l.b16 %v105
    %v257 = vunpack.c.h.b16 %v105
    %v258 = vunpack.c.l.b16 %v106
    %v259 = vunpack.c.h.b16 %v106
    %v260 = vunpack.c.l.b16 %v107
    %v261 = vunpack.c.h.b16 %v107
    %v262 = vunpack.c.l.b16 %v108
    %v263 = vunpack.c.h.b16 %v108
    %v264 = vunpack.c.l.b16 %v109
    %v265 = vunpack.c.h.b16 %v109
    %v266 = vunpack.c.l.b16 %v110
    %v267 = vunpack.c.h.b16 %v110
    %v268 = vunpack.c.l.b16 %v111
    %v269 = vunpack.c.h.b16 %v111
    %v270 = vunpack.c.l.b16 %v112
    %v271 = vunpack.c.h.b16 %v112
    %v272 = vunpack.c.l.b16 %v113
    %v273 = vunpack.c.h.b16 %v113
    %v274 = vunpack.c.l.b16 %v114
    %v275 = vunpack.c.h.b16 %v114
    %v276 = vunpack.c.l.b16 %v115
    %v277 = vunpack.c.h.b16 %v115
    %v278 = vunpack.c.l.b16 %v116
    %v279 = vunpack.c.h.b16 %v116
    %v280 = vunpack.c.l.b16 %v117
    %v281 = vunpack.c.h.b16 %v117
    %v282 = vunpack.c.l.b16 %v118
    %v283 = vunpack.c.h.b16 %v118
    %v284 = vunpack.c.l.b16 %v119
    %v285 = vunpack.c.h.b16 %v119
    %v286 = vunpack.c.l.b16 %v120
    %v287 = vunpack.c.h.b16 %v120
    %v288 = vunpack.c.l.b16 %v121
    %v289 = vunpack.c.h.b16 %v121
    %v290 = vunpack.c.l.b16 %v122
    %v291 = vunpack.c.h.b16 %v122
    %v292 = vunpack.c.l.b16 %v123
    %v293 = vunpack.c.h.b16 %v123
    %v294 = vunpack.c.l.b16 %v124
    %v295 = vunpack.c.h.b16 %v124
    %v296 = vunpack.c.l.b16 %v125
    %v297 = vunpack.c.h.b16 %v125
    %v298 = vunpack.c.l.b16 %v126
    %v299 = vunpack.c.h.b16 %v126
    %v300 = vunpack.c.l.b16 %v127
    %v301 = vunpack.c.h.b16 %v127
    %v302 = vunpack.c.l.b16 %v128
    %v303 = vunpack.c.h.b16 %v128
    %v304 = vunpack.c.l.b16 %v129
    %v305 = vunpack.c.h.b16 %v129
    %v306 = vunpack.c.l.b16 %v130
    %v307 = vunpack.c.h.b16 %v130
    %v308 = vunpack.c.l.b16 %v131
    %v309 = vunpack.c.h.b16 %v131
    %v310 = vunpack.c.l.b16 %v132
    %v311 = vunpack.c.h.b16 %v132
    %v312 = vunpack.c.l.b16 %v133
    %v313 = vunpack.c.h.b16 %v133
    %v314 = vunpack.c.l.b16 %v134
    %v315 = vunpack.c.h.b16 %v134
    %v316 = vunpack.c.l.b16 %v135
    %v317 = vunpack.c.h.b16 %v135
    %v318 = vunpack.c.l.b16 %v136
    %v319 = vunpack.c.h.b16 %v136
    %v320 = vunpack.c.l.b16 %v137
    %v321 = vunpack.c.h.b16 %v137
    %v322 = vunpack.c.l.b16 %v138
    %v323 = vunpack.c.h.b16 %v138
    %v324 = vunpack.c.l.b16 %v139
    %v325 = vunpack.c.h.b16 %v139
    %v326 = vunpack.c.l.b16 %v140
    %v327 = vunpack.c.h.b16 %v140
    %v328 = vunpack.c.l.b16 %v141
    %v329 = vunpack.c.h.b16 %v141
    %v330 = vunpack.c.l.b16 %v142
    %v331 = vunpack.c.h.b16 %v142
    %v332 = vunpack.c.l.b16 %v143
    %v333 = vunpack.c.h.b16 %v143
    %v334 = vunpack.c.l.b16 %v144
    %v335 = vunpack.c.h.b16 %v144
    %v336 = vunpack.c.l.b16 %v145
    %v337 = vunpack.c.h.b16 %v145
    %v338 = vunpack.c.l.b16 %v146
    %v339 = vunpack.c.h.b16 %v146
    %v340 = vunpack.c.l.b16 %v147
    %v341 = vunpack.c.h.b16 %v147
    %v342 = vunpack.c.l.b16 %v148
    %v343 = vunpack.c.h.b16 %v148
    %v344 = vunpack.c.l.b16 %v149
    %v345 = vunpack.c.h.b16 %v149
    %v346 = vunpack.c.l.b16 %v150
    %v347 = vunpack.c.h.b16 %v150
    %v348 = vunpack.c.l.b16 %v151
    %v349 = vunpack.c.h.b16 %v151
    %v350 = vunpack.c.l.b16 %v152
    %v351 = vunpack.c.h.b16 %v152
    %v352 = vunpack.c.l.b16 %v153
    %v353 = vunpack.c.h.b16 %v153
    %v354 = vunpack.c.l.b16 %v154
    %v355 = vunpack.c.h.b16 %v154
    %v356 = vunpack.c.l.b16 %v155
    %v357 = vunpack.c.h.b16 %v155
    %v358 = vunpack.c.l.b16 %v156
    %v359 = vunpack.c.h.b16 %v156
    %v360 = vunpack.c.l.b16 %v157
    %v361 = vunpack.c.h.b16 %v157
    %v362 = vunpack.c.l.b16 %v158
    %v363 = vunpack.c.h.b16 %v158
    %v364 = vunpack.c.l.b16 %v159
    %v365 = vunpack.c.h.b16 %v159
    %v366 = vunpack.c.l.b16 %v160
    %v367 = vunpack.c.h.b16 %v160
    %v368 = vunpack.c.l.b16 %v161
    %v369 = vunpack.c.h.b16 %v161
    %v370 = vunpack.c.l.b16 %v162
    %v371 = vunpack.c.h.b16 %v162
    %v372 = vunpack.c.l.b16 %v163
    %v373 = vunpack.c.h.b16 %v163
    %v374 = vunpack.c.l.b16 %v164
    %v375 = vunpack.c.h.b16 %v164
    %v376 = vunpack.c.l.b16 %v165
    %v377 = vunpack.c.h.b16 %v165
    %v378 = vunpack.c.l.b16 %v166
    %v379 = vunpack.c.h.b16 %v166
    %v380 = vpack.c.b16 %v256, %v252
    %v381 = vpack.c.b16 %v257, %v253
    %v382 = vpack.c.b16 %v258, %v254
    %v383 = vpack.c.b16 %v259, %v255
    %v384 = vpack.c.b16 %v264, %v260
    %v385 = vpack.c.b16 %v265, %v261
    %v386 = vpack.c.b16 %v266, %v262
    %v387 = vpack.c.b16 %v267, %v263
    %v388 = vpack.c.b16 %v272, %v268
    %v389 = vpack.c.b16 %v273, %v269
    %v390 = vpack.c.b16 %v274, %v270
    %v391 = vpack.c.b16 %v275, %v271
    %v392 = vpack.c.b16 %v280, %v276
    %v393 = vpack.c.b16 %v281, %v277
    %v394 = vpack.c.b16 %v282, %v278
    %v395 = vpack.c.b16 %v283, %v279
    %v396 = vpack.c.b16 %v288, %v284
    %v397 = vpack.c.b16 %v289, %v285
    %v398 = vpack.c.b16 %v290, %v286
    %v399 = vpack.c.b16 %v291, %v287
    %v400 = vpack.c.b16 %v296, %v292
    %v401 = vpack.c.b16 %v297, %v293
    %v402 = vpack.c.b16 %v298, %v294
    %v403 = vpack.c.b16 %v299, %v295
    %v404 = vpack.c.b16 %v304, %v300
    %v405 = vpack.c.b16 %v305, %v301
    %v406 = vpack.c.b16 %v306, %v302
    %v407 = vpack.c.b16 %v307, %v303
    %v408 = vpack.c.b16 %v312, %v308
    %v409 = vpack.c.b16 %v313, %v309
    %v410 = vpack.c.b16 %v314, %v310
    %v411 = vpack.c.b16 %v315, %v311
    %v412 = vpack.c.b16 %v320, %v316
    %v413 = vpack.c.b16 %v321, %v317
    %v414 = vpack.c.b16 %v322, %v318
    %v415 = vpack.c.b16 %v323, %v319
    %v416 = vpack.c.b16 %v328, %v324
    %v417 = vpack.c.b16 %v329, %v325
    %v418 = vpack.c.b16 %v330, %v326
    %v419 = vpack.c.b16 %v331, %v327
    %v420 = vpack.c.b16 %v336, %v332
    %v421 = vpack.c.b16 %v337, %v333
    %v422 = vpack.c.b16 %v338, %v334
    %v423 = vpack.c.b16 %v339, %v335
    %v424 = vpack.c.b16 %v344, %v340
    %v425 = vpack.c.b16 %v345, %v341
    %v426 = vpack.c.b16 %v346, %v342
    %v427 = vpack.c.b16 %v347, %v343
    %v428 = vpack.c.b16 %v352, %v348
    %v429 = vpack.c.b16 %v353, %v349
    %v430 = vpack.c.b16 %v354, %v350
    %v431 = vpack.c.b16 %v355, %v351
    %v432 = vpack.c.b16 %v360, %v356
    %v433 = vpack.c.b16 %v361, %v357
    %v434 = vpack.c.b16 %v362, %v358
    %v435 = vpack.c.b16 %v363, %v359
    %v436 = vpack.c.b16 %v368, %v364
    %v437 = vpack.c.b16 %v369, %v365
    %v438 = vpack.c.b16 %v370, %v366
    %v439 = vpack.c.b16 %v371, %v367
    %v440 = vpack.c.b16 %v376, %v372
    %v441 = vpack.c.b16 %v377, %v373
    %v442 = vpack.c.b16 %v378, %v374
    %v443 = vpack.c.b16 %v379, %v375
    %508 = vmatpush.bf16.msra.mxu0 %v408
    %509 = vmatpush.bf16.msra.mxu0 %v404
    %510 = vmatpush.bf16.msra.mxu0 %v400
    %511 = vmatpush.bf16.msra.mxu0 %v396
    %512 = vmatpush.bf16.msra.mxu0 %v392
    %513 = vmatpush.bf16.msra.mxu0 %v388
    %514 = vmatpush.bf16.msra.mxu0 %v384
    %515 = vmatpush.bf16.msra.mxu0 %v380
    %516 = vmatmul.bf16.gmra.mxu0 %v184
    %v517 = vpop.f32.mrf.mxu0
    %v518 = vadd.f32 %v173, %v517
    %v519 = vpop.f32.mrf.mxu0
    %520 = vdwg.mxu0
    %521 = vmatpush.bf16.msra.mxu0 %v440
    %522 = vmatpush.bf16.msra.mxu0 %v436
    %523 = vmatpush.bf16.msra.mxu0 %v432
    %524 = vmatpush.bf16.msra.mxu0 %v428
    %525 = vmatpush.bf16.msra.mxu0 %v424
    %526 = vmatpush.bf16.msra.mxu0 %v420
    %527 = vmatpush.bf16.msra.mxu0 %v416
    %528 = vmatpush.bf16.msra.mxu0 %v412
    %529 = vmatmul.bf16.gmra.mxu0 %v185
    %v530 = vpop.f32.mrf.mxu0
    %v531 = vadd.f32 %v518, %v530
    %v532 = vpop.f32.mrf.mxu0
    %533 = vdwg.mxu0
    %534 = vmatpush.bf16.msra.mxu0 %v409
    %535 = vmatpush.bf16.msra.mxu0 %v405
    %536 = vmatpush.bf16.msra.mxu0 %v401
    %537 = vmatpush.bf16.msra.mxu0 %v397
    %538 = vmatpush.bf16.msra.mxu0 %v393
    %539 = vmatpush.bf16.msra.mxu0 %v389
    %540 = vmatpush.bf16.msra.mxu0 %v385
    %541 = vmatpush.bf16.msra.mxu0 %v381
    %542 = vmatmul.bf16.gmra.mxu0 %v184
    %v543 = vpop.f32.mrf.mxu0
    %v544 = vadd.f32 %v174, %v543
    %v545 = vpop.f32.mrf.mxu0
    %546 = vdwg.mxu0
    %547 = vmatpush.bf16.msra.mxu0 %v441
    %548 = vmatpush.bf16.msra.mxu0 %v437
    %549 = vmatpush.bf16.msra.mxu0 %v433
    %550 = vmatpush.bf16.msra.mxu0 %v429
    %551 = vmatpush.bf16.msra.mxu0 %v425
    %552 = vmatpush.bf16.msra.mxu0 %v421
    %553 = vmatpush.bf16.msra.mxu0 %v417
    %554 = vmatpush.bf16.msra.mxu0 %v413
    %555 = vmatmul.bf16.gmra.mxu0 %v185
    %v556 = vpop.f32.mrf.mxu0
    %v557 = vadd.f32 %v544, %v556
    %v558 = vpop.f32.mrf.mxu0
    %559 = vdwg.mxu0
    %560 = vmatpush.bf16.msra.mxu0 %v410
    %561 = vmatpush.bf16.msra.mxu0 %v406
    %562 = vmatpush.bf16.msra.mxu0 %v402
    %563 = vmatpush.bf16.msra.mxu0 %v398
    %564 = vmatpush.bf16.msra.mxu0 %v394
    %565 = vmatpush.bf16.msra.mxu0 %v390
    %566 = vmatpush.bf16.msra.mxu0 %v386
    %567 = vmatpush.bf16.msra.mxu0 %v382
    %568 = vmatmul.bf16.gmra.mxu0 %v184
    %v569 = vpop.f32.mrf.mxu0
    %v570 = vadd.f32 %v175, %v569
    %v571 = vpop.f32.mrf.mxu0
    %572 = vdwg.mxu0
    %573 = vmatpush.bf16.msra.mxu0 %v442
    %574 = vmatpush.bf16.msra.mxu0 %v438
    %575 = vmatpush.bf16.msra.mxu0 %v434
    %576 = vmatpush.bf16.msra.mxu0 %v430
    %577 = vmatpush.bf16.msra.mxu0 %v426
    %578 = vmatpush.bf16.msra.mxu0 %v422
    %579 = vmatpush.bf16.msra.mxu0 %v418
    %580 = vmatpush.bf16.msra.mxu0 %v414
    %581 = vmatmul.bf16.gmra.mxu0 %v185
    %v582 = vpop.f32.mrf.mxu0
    %v583 = vadd.f32 %v570, %v582
    %v584 = vpop.f32.mrf.mxu0
    %585 = vdwg.mxu0
    %586 = vmatpush.bf16.msra.mxu0 %v411
    %587 = vmatpush.bf16.msra.mxu0 %v407
    %588 = vmatpush.bf16.msra.mxu0 %v403
    %589 = vmatpush.bf16.msra.mxu0 %v399
    %590 = vmatpush.bf16.msra.mxu0 %v395
    %591 = vmatpush.bf16.msra.mxu0 %v391
    %592 = vmatpush.bf16.msra.mxu0 %v387
    %593 = vmatpush.bf16.msra.mxu0 %v383
    %594 = vmatmul.bf16.gmra.mxu0 %v184
    %v595 = vpop.f32.mrf.mxu0
    %v596 = vadd.f32 %v176, %v595
    %v597 = vpop.f32.mrf.mxu0
    %598 = vdwg.mxu0
    %599 = vmatpush.bf16.msra.mxu0 %v443
    %600 = vmatpush.bf16.msra.mxu0 %v439
    %601 = vmatpush.bf16.msra.mxu0 %v435
    %602 = vmatpush.bf16.msra.mxu0 %v431
    %603 = vmatpush.bf16.msra.mxu0 %v427
    %604 = vmatpush.bf16.msra.mxu0 %v423
    %605 = vmatpush.bf16.msra.mxu0 %v419
    %606 = vmatpush.bf16.msra.mxu0 %v415
    %607 = vmatmul.bf16.gmra.mxu0 %v185
    %v608 = vpop.f32.mrf.mxu0
    %v609 = vadd.f32 %v596, %v608
    %v610 = vpop.f32.mrf.mxu0
    %611 = vdwg.mxu0
    %v612 = vmul.f32 %v531, 0.01
    %v613 = vmul.f32 %v557, 0.01
    %v614 = vmul.f32 %v583, 0.01
    %v615 = vmul.f32 %v609, 0.01
    %v616 = vmax.f32 %v531, %v612
    %v617 = vmax.f32 %v557, %v613
    %v618 = vmax.f32 %v583, %v614
    %v619 = vmax.f32 %v609, %v615
    %v620 = vrot.slane %v616, 4
    %v621 = vadd.f32 %v616, %v620
    %v622 = vrot.slane %v621, 2
    %v623 = vadd.f32 %v621, %v622
    %v624 = vrot.slane %v623, 1
    %v625 = vadd.f32 %v623, %v624
    %v626 = vrot.slane %v617, 4
    %v627 = vadd.f32 %v617, %v626
    %v628 = vrot.slane %v627, 2
    %v629 = vadd.f32 %v627, %v628
    %v630 = vrot.slane %v629, 1
    %v631 = vadd.f32 %v629, %v630
    %v632 = vrot.slane %v618, 4
    %v633 = vadd.f32 %v618, %v632
    %v634 = vrot.slane %v633, 2
    %v635 = vadd.f32 %v633, %v634
    %v636 = vrot.slane %v635, 1
    %v637 = vadd.f32 %v635, %v636
    %v638 = vrot.slane %v619, 4
    %v639 = vadd.f32 %v619, %v638
    %v640 = vrot.slane %v639, 2
    %v641 = vadd.f32 %v639, %v640
    %v642 = vrot.slane %v641, 1
    %v643 = vadd.f32 %v641, %v642
    %v644 = vrcp.pop 8.0
    %v645 = vmul.f32 8.0, %v644
    %v646 = vsub.f32 1.0, %v645
    %v647 = vmul.f32 %v644, %v646
    %v648 = vadd.f32 %v644, %v647
    %vm649 = vweird.f32 %v644
    %v650 = vsel %vm649, %v644, %v648
    %v651 = vmul.f32 %v625, %v650
    %v652 = vmul.f32 %v631, %v650
    %v653 = vmul.f32 %v637, %v650
    %v654 = vmul.f32 %v643, %v650
    %v655 = vmul.f32 %v616, %v616
    %v656 = vmul.f32 %v617, %v617
    %v657 = vmul.f32 %v618, %v618
    %v658 = vmul.f32 %v619, %v619
    %v659 = vrot.slane %v655, 4
    %v660 = vadd.f32 %v655, %v659
    %v661 = vrot.slane %v660, 2
    %v662 = vadd.f32 %v660, %v661
    %v663 = vrot.slane %v662, 1
    %v664 = vadd.f32 %v662, %v663
    %v665 = vrot.slane %v656, 4
    %v666 = vadd.f32 %v656, %v665
    %v667 = vrot.slane %v666, 2
    %v668 = vadd.f32 %v666, %v667
    %v669 = vrot.slane %v668, 1
    %v670 = vadd.f32 %v668, %v669
    %v671 = vrot.slane %v657, 4
    %v672 = vadd.f32 %v657, %v671
    %v673 = vrot.slane %v672, 2
    %v674 = vadd.f32 %v672, %v673
    %v675 = vrot.slane %v674, 1
    %v676 = vadd.f32 %v674, %v675
    %v677 = vrot.slane %v658, 4
    %v678 = vadd.f32 %v658, %v677
    %v679 = vrot.slane %v678, 2
    %v680 = vadd.f32 %v678, %v679
    %v681 = vrot.slane %v680, 1
    %v682 = vadd.f32 %v680, %v681
    %v683 = vmul.f32 %v664, %v650
    %v684 = vmul.f32 %v670, %v650
    %v685 = vmul.f32 %v676, %v650
    %v686 = vmul.f32 %v682, %v650
    %v687 = vmul.f32 %v651, %v651
    %v688 = vmul.f32 %v652, %v652
    %v689 = vmul.f32 %v653, %v653
    %v690 = vmul.f32 %v654, %v654
    %v691 = vsub.f32 %v683, %v687
    %v692 = vsub.f32 %v684, %v688
    %v693 = vsub.f32 %v685, %v689
    %v694 = vsub.f32 %v686, %v690
    %v695 = vmax.f32 %v691, 0.0
    %v696 = vmax.f32 %v692, 0.0
    %v697 = vmax.f32 %v693, 0.0
    %v698 = vmax.f32 %v694, 0.0
    %v699 = vadd.f32 %v695, 1e-05
    %v700 = vadd.f32 %v696, 1e-05
    %v701 = vadd.f32 %v697, 1e-05
    %v702 = vadd.f32 %v698, 1e-05
    %v703 = vrsqrt.pop %v699
    %v704 = vmul.f32 %v703, %v699
    %v705 = vmul.f32 %v704, %v703
    %v706 = vmul.f32 0.5, %v705
    %v707 = vsub.f32 1.5, %v706
    %v708 = vmul.f32 %v703, %v707
    %vm709 = vweird.f32 %v699
    %vm710 = vweird.f32 %v703
    %vm711 = vmor %vm709, %vm710
    %v712 = vsel %vm711, %v703, %v708
    %v713 = vrsqrt.pop %v700
    %v714 = vmul.f32 %v713, %v700
    %v715 = vmul.f32 %v714, %v713
    %v716 = vmul.f32 0.5, %v715
    %v717 = vsub.f32 1.5, %v716
    %v718 = vmul.f32 %v713, %v717
    %vm719 = vweird.f32 %v700
    %vm720 = vweird.f32 %v713
    %vm721 = vmor %vm719, %vm720
    %v722 = vsel %vm721, %v713, %v718
    %v723 = vrsqrt.pop %v701
    %v724 = vmul.f32 %v723, %v701
    %v725 = vmul.f32 %v724, %v723
    %v726 = vmul.f32 0.5, %v725
    %v727 = vsub.f32 1.5, %v726
    %v728 = vmul.f32 %v723, %v727
    %vm729 = vweird.f32 %v701
    %vm730 = vweird.f32 %v723
    %vm731 = vmor %vm729, %vm730
    %v732 = vsel %vm731, %v723, %v728
    %v733 = vrsqrt.pop %v702
    %v734 = vmul.f32 %v733, %v702
    %v735 = vmul.f32 %v734, %v733
    %v736 = vmul.f32 0.5, %v735
    %v737 = vsub.f32 1.5, %v736
    %v738 = vmul.f32 %v733, %v737
    %vm739 = vweird.f32 %v702
    %vm740 = vweird.f32 %v733
    %vm741 = vmor %vm739, %vm740
    %v742 = vsel %vm741, %v733, %v738
    %v747 = vrot.slane %v722, 7
    %v748 = vrot.slane %v732, 6
    %v749 = vrot.slane %v742, 5
    %vm750 = vcmask 1040384
    %v751 = vsel %vm750, %v712, %v747
    %vm752 = vcmask 1042434
    %v753 = vsel %vm752, %v748, %v749
    %vm754 = vcmask 1041408
    %v755 = vsel %vm754, %v751, %v753
    %v757 = vmul.f32 %v169, %v755
    %v759 = vperm.slane %v757, 0
    %v760 = vperm.slane %v757, 1
    %v761 = vperm.slane %v757, 2
    %v762 = vperm.slane %v757, 3
    %v767 = vmul.f32 %v651, %v759
    %v768 = vmul.f32 %v652, %v760
    %v769 = vmul.f32 %v653, %v761
    %v770 = vmul.f32 %v654, %v762
    %v775 = vrot.slane %v768, 7
    %v776 = vrot.slane %v769, 6
    %v777 = vrot.slane %v770, 5
    %v778 = vsel %vm750, %v767, %v775
    %v779 = vsel %vm752, %v776, %v777
    %v780 = vsel %vm754, %v778, %v779
    %v782 = vsub.f32 %v171, %v780
    %v783 = vmul.f32 %v616, %v759
    %v784 = vmul.f32 %v617, %v760
    %v785 = vmul.f32 %v618, %v761
    %v786 = vmul.f32 %v619, %v762
    %v788 = vperm.slane %v782, 0
    %v789 = vperm.slane %v782, 1
    %v790 = vperm.slane %v782, 2
    %v791 = vperm.slane %v782, 3
    %v796 = vadd.f32 %v783, %v788
    %v797 = vadd.f32 %v784, %v789
    %v798 = vadd.f32 %v785, %v790
    %v799 = vadd.f32 %v786, %v791
    %v800 = vpack.c.bf16 %v796, %v796
    %v801 = vpack.c.bf16 %v797, %v797
    %v802 = vpack.c.bf16 %v798, %v798
    %v803 = vpack.c.bf16 %v799, %v799
    %v804 = vld [vmem:[#allocation2 + $0x200] sm:$0xff]
    %v805 = vld [vmem:[#allocation2 + $0x208] sm:$0xff]
    %v806 = vld [vmem:[#allocation2 + $0x210] sm:$0xff]
    %v807 = vld [vmem:[#allocation2 + $0x218] sm:$0xff]
    %v808 = vld [vmem:[#allocation2 + $0x220] sm:$0xff]
    %v809 = vld [vmem:[#allocation2 + $0x228] sm:$0xff]
    %v810 = vld [vmem:[#allocation2 + $0x230] sm:$0xff]
    %v811 = vld [vmem:[#allocation2 + $0x238] sm:$0xff]
    %v812 = vld [vmem:[#allocation2 + $0x240] sm:$0xff]
    %v813 = vld [vmem:[#allocation2 + $0x248] sm:$0xff]
    %v814 = vld [vmem:[#allocation2 + $0x250] sm:$0xff]
    %v815 = vld [vmem:[#allocation2 + $0x258] sm:$0xff]
    %v816 = vld [vmem:[#allocation2 + $0x260] sm:$0xff]
    %v817 = vld [vmem:[#allocation2 + $0x268] sm:$0xff]
    %v818 = vld [vmem:[#allocation2 + $0x270] sm:$0xff]
    %v819 = vld [vmem:[#allocation2 + $0x278] sm:$0xff]
    %v820 = vld [vmem:[#allocation2 + $0x280] sm:$0xff]
    %v821 = vld [vmem:[#allocation2 + $0x288] sm:$0xff]
    %v822 = vld [vmem:[#allocation2 + $0x290] sm:$0xff]
    %v823 = vld [vmem:[#allocation2 + $0x298] sm:$0xff]
    %v824 = vld [vmem:[#allocation2 + $0x2a0] sm:$0xff]
    %v825 = vld [vmem:[#allocation2 + $0x2a8] sm:$0xff]
    %v826 = vld [vmem:[#allocation2 + $0x2b0] sm:$0xff]
    %v827 = vld [vmem:[#allocation2 + $0x2b8] sm:$0xff]
    %v828 = vld [vmem:[#allocation2 + $0x2c0] sm:$0xff]
    %v829 = vld [vmem:[#allocation2 + $0x2c8] sm:$0xff]
    %v830 = vld [vmem:[#allocation2 + $0x2d0] sm:$0xff]
    %v831 = vld [vmem:[#allocation2 + $0x2d8] sm:$0xff]
    %v832 = vld [vmem:[#allocation2 + $0x2e0] sm:$0xff]
    %v833 = vld [vmem:[#allocation2 + $0x2e8] sm:$0xff]
    %v834 = vld [vmem:[#allocation2 + $0x2f0] sm:$0xff]
    %v835 = vld [vmem:[#allocation2 + $0x2f8] sm:$0xff]
    %v836 = vld [vmem:[#allocation2 + $0x300] sm:$0xff]
    %v837 = vld [vmem:[#allocation2 + $0x308] sm:$0xff]
    %v838 = vld [vmem:[#allocation2 + $0x310] sm:$0xff]
    %v839 = vld [vmem:[#allocation2 + $0x318] sm:$0xff]
    %v840 = vld [vmem:[#allocation2 + $0x320] sm:$0xff]
    %v841 = vld [vmem:[#allocation2 + $0x328] sm:$0xff]
    %v842 = vld [vmem:[#allocation2 + $0x330] sm:$0xff]
    %v843 = vld [vmem:[#allocation2 + $0x338] sm:$0xff]
    %v844 = vld [vmem:[#allocation2 + $0x340] sm:$0xff]
    %v845 = vld [vmem:[#allocation2 + $0x348] sm:$0xff]
    %v846 = vld [vmem:[#allocation2 + $0x350] sm:$0xff]
    %v847 = vld [vmem:[#allocation2 + $0x358] sm:$0xff]
    %v848 = vld [vmem:[#allocation2 + $0x360] sm:$0xff]
    %v849 = vld [vmem:[#allocation2 + $0x368] sm:$0xff]
    %v850 = vld [vmem:[#allocation2 + $0x370] sm:$0xff]
    %v851 = vld [vmem:[#allocation2 + $0x378] sm:$0xff]
    %v852 = vld [vmem:[#allocation2 + $0x380] sm:$0xff]
    %v853 = vld [vmem:[#allocation2 + $0x388] sm:$0xff]
    %v854 = vld [vmem:[#allocation2 + $0x390] sm:$0xff]
    %v855 = vld [vmem:[#allocation2 + $0x398] sm:$0xff]
    %v856 = vld [vmem:[#allocation2 + $0x3a0] sm:$0xff]
    %v857 = vld [vmem:[#allocation2 + $0x3a8] sm:$0xff]
    %v858 = vld [vmem:[#allocation2 + $0x3b0] sm:$0xff]
    %v859 = vld [vmem:[#allocation2 + $0x3b8] sm:$0xff]
    %v860 = vld [vmem:[#allocation2 + $0x3c0] sm:$0xff]
    %v861 = vld [vmem:[#allocation2 + $0x3c8] sm:$0xff]
    %v862 = vld [vmem:[#allocation2 + $0x3d0] sm:$0xff]
    %v863 = vld [vmem:[#allocation2 + $0x3d8] sm:$0xff]
    %v864 = vld [vmem:[#allocation2 + $0x3e0] sm:$0xff]
    %v865 = vld [vmem:[#allocation2 + $0x3e8] sm:$0xff]
    %v866 = vld [vmem:[#allocation2 + $0x3f0] sm:$0xff]
    %v867 = vld [vmem:[#allocation2 + $0x3f8] sm:$0xff]
    %v868 = vld [vmem:[#allocation2 + $0x400] sm:$0xff]
    %v869 = vld [vmem:[#allocation2 + $0x408] sm:$0xff]
    %v870 = vld [vmem:[#allocation2 + $0x410] sm:$0xff]
    %v871 = vld [vmem:[#allocation2 + $0x418] sm:$0xff]
    %v872 = vld [vmem:[#allocation2 + $0x420] sm:$0xff]
    %v873 = vld [vmem:[#allocation2 + $0x428] sm:$0xff]
    %v874 = vld [vmem:[#allocation2 + $0x430] sm:$0xff]
    %v875 = vld [vmem:[#allocation2 + $0x438] sm:$0xff]
    %v876 = vld [vmem:[#allocation2 + $0x440] sm:$0xff]
    %v877 = vld [vmem:[#allocation2 + $0x448] sm:$0xff]
    %v878 = vld [vmem:[#allocation2 + $0x450] sm:$0xff]
    %v879 = vld [vmem:[#allocation2 + $0x458] sm:$0xff]
    %v880 = vld [vmem:[#allocation2 + $0x460] sm:$0xff]
    %v881 = vld [vmem:[#allocation2 + $0x468] sm:$0xff]
    %v882 = vld [vmem:[#allocation2 + $0x470] sm:$0xff]
    %v883 = vld [vmem:[#allocation2 + $0x478] sm:$0xff]
    %v884 = vld [vmem:[#allocation2 + $0x480] sm:$0xff]
    %v885 = vld [vmem:[#allocation2 + $0x488] sm:$0xff]
    %v886 = vld [vmem:[#allocation2 + $0x490] sm:$0xff]
    %v887 = vld [vmem:[#allocation2 + $0x498] sm:$0xff]
    %v888 = vld [vmem:[#allocation2 + $0x4a0] sm:$0xff]
    %v889 = vld [vmem:[#allocation2 + $0x4a8] sm:$0xff]
    %v890 = vld [vmem:[#allocation2 + $0x4b0] sm:$0xff]
    %v891 = vld [vmem:[#allocation2 + $0x4b8] sm:$0xff]
    %v892 = vld [vmem:[#allocation2 + $0x4c0] sm:$0xff]
    %v893 = vld [vmem:[#allocation2 + $0x4c8] sm:$0xff]
    %v894 = vld [vmem:[#allocation2 + $0x4d0] sm:$0xff]
    %v895 = vld [vmem:[#allocation2 + $0x4d8] sm:$0xff]
    %v896 = vld [vmem:[#allocation2 + $0x4e0] sm:$0xff]
    %v897 = vld [vmem:[#allocation2 + $0x4e8] sm:$0xff]
    %v898 = vld [vmem:[#allocation2 + $0x4f0] sm:$0xff]
    %v899 = vld [vmem:[#allocation2 + $0x4f8] sm:$0xff]
    %v900 = vld [vmem:[#allocation2 + $0x500] sm:$0xff]
    %v901 = vld [vmem:[#allocation2 + $0x508] sm:$0xff]
    %v902 = vld [vmem:[#allocation2 + $0x510] sm:$0xff]
    %v903 = vld [vmem:[#allocation2 + $0x518] sm:$0xff]
    %v904 = vld [vmem:[#allocation2 + $0x520] sm:$0xff]
    %v905 = vld [vmem:[#allocation2 + $0x528] sm:$0xff]
    %v906 = vld [vmem:[#allocation2 + $0x530] sm:$0xff]
    %v907 = vld [vmem:[#allocation2 + $0x538] sm:$0xff]
    %v908 = vld [vmem:[#allocation2 + $0x540] sm:$0xff]
    %v909 = vld [vmem:[#allocation2 + $0x548] sm:$0xff]
    %v910 = vld [vmem:[#allocation2 + $0x550] sm:$0xff]
    %v911 = vld [vmem:[#allocation2 + $0x558] sm:$0xff]
    %v912 = vld [vmem:[#allocation2 + $0x560] sm:$0xff]
    %v913 = vld [vmem:[#allocation2 + $0x568] sm:$0xff]
    %v914 = vld [vmem:[#allocation2 + $0x570] sm:$0xff]
    %v915 = vld [vmem:[#allocation2 + $0x578] sm:$0xff]
    %v916 = vld [vmem:[#allocation2 + $0x580] sm:$0xff]
    %v917 = vld [vmem:[#allocation2 + $0x588] sm:$0xff]
    %v918 = vld [vmem:[#allocation2 + $0x590] sm:$0xff]
    %v919 = vld [vmem:[#allocation2 + $0x598] sm:$0xff]
    %v920 = vld [vmem:[#allocation2 + $0x5a0] sm:$0xff]
    %v921 = vld [vmem:[#allocation2 + $0x5a8] sm:$0xff]
    %v922 = vld [vmem:[#allocation2 + $0x5b0] sm:$0xff]
    %v923 = vld [vmem:[#allocation2 + $0x5b8] sm:$0xff]
    %v924 = vld [vmem:[#allocation2 + $0x5c0] sm:$0xff]
    %v925 = vld [vmem:[#allocation2 + $0x5c8] sm:$0xff]
    %v926 = vld [vmem:[#allocation2 + $0x5d0] sm:$0xff]
    %v927 = vld [vmem:[#allocation2 + $0x5d8] sm:$0xff]
    %v928 = vld [vmem:[#allocation2 + $0x5e0] sm:$0xff]
    %v929 = vld [vmem:[#allocation2 + $0x5e8] sm:$0xff]
    %v930 = vld [vmem:[#allocation2 + $0x5f0] sm:$0xff]
    %v931 = vld [vmem:[#allocation2 + $0x5f8] sm:$0xff]
    %s932 = scalar_lea.vmem [#allocation10], 1
    %v933 = vld [vmem:[%s932] ss:$8 sm:$0xf]
    %s934 = scalar_lea.vmem [#allocation10], 7
    %v935 = vld [vmem:[%s934] ss:$8 sm:$0xf]
    %s936 = scalar_lea.vmem [#allocation10], 37
    %v937 = vld [vmem:[%s936] ss:$8 sm:$0xf]
    %v939 = vperm.slane %v933, 0
    %v940 = vperm.slane %v933, 1
    %v941 = vperm.slane %v933, 2
    %v942 = vperm.slane %v933, 3
    %v1075 = vunpack.c.l.b16 %v804
    %v1076 = vunpack.c.h.b16 %v804
    %v1077 = vunpack.c.l.b16 %v805
    %v1078 = vunpack.c.h.b16 %v805
    %v1079 = vunpack.c.l.b16 %v806
    %v1080 = vunpack.c.h.b16 %v806
    %v1081 = vunpack.c.l.b16 %v807
    %v1082 = vunpack.c.h.b16 %v807
    %v1083 = vunpack.c.l.b16 %v808
    %v1084 = vunpack.c.h.b16 %v808
    %v1085 = vunpack.c.l.b16 %v809
    %v1086 = vunpack.c.h.b16 %v809
    %v1087 = vunpack.c.l.b16 %v810
    %v1088 = vunpack.c.h.b16 %v810
    %v1089 = vunpack.c.l.b16 %v811
    %v1090 = vunpack.c.h.b16 %v811
    %v1091 = vunpack.c.l.b16 %v812
    %v1092 = vunpack.c.h.b16 %v812
    %v1093 = vunpack.c.l.b16 %v813
    %v1094 = vunpack.c.h.b16 %v813
    %v1095 = vunpack.c.l.b16 %v814
    %v1096 = vunpack.c.h.b16 %v814
    %v1097 = vunpack.c.l.b16 %v815
    %v1098 = vunpack.c.h.b16 %v815
    %v1099 = vunpack.c.l.b16 %v816
    %v1100 = vunpack.c.h.b16 %v816
    %v1101 = vunpack.c.l.b16 %v817
    %v1102 = vunpack.c.h.b16 %v817
    %v1103 = vunpack.c.l.b16 %v818
    %v1104 = vunpack.c.h.b16 %v818
    %v1105 = vunpack.c.l.b16 %v819
    %v1106 = vunpack.c.h.b16 %v819
    %v1107 = vunpack.c.l.b16 %v820
    %v1108 = vunpack.c.h.b16 %v820
    %v1109 = vunpack.c.l.b16 %v821
    %v1110 = vunpack.c.h.b16 %v821
    %v1111 = vunpack.c.l.b16 %v822
    %v1112 = vunpack.c.h.b16 %v822
    %v1113 = vunpack.c.l.b16 %v823
    %v1114 = vunpack.c.h.b16 %v823
    %v1115 = vunpack.c.l.b16 %v824
    %v1116 = vunpack.c.h.b16 %v824
    %v1117 = vunpack.c.l.b16 %v825
    %v1118 = vunpack.c.h.b16 %v825
    %v1119 = vunpack.c.l.b16 %v826
    %v1120 = vunpack.c.h.b16 %v826
    %v1121 = vunpack.c.l.b16 %v827
    %v1122 = vunpack.c.h.b16 %v827
    %v1123 = vunpack.c.l.b16 %v828
    %v1124 = vunpack.c.h.b16 %v828
    %v1125 = vunpack.c.l.b16 %v829
    %v1126 = vunpack.c.h.b16 %v829
    %v1127 = vunpack.c.l.b16 %v830
    %v1128 = vunpack.c.h.b16 %v830
    %v1129 = vunpack.c.l.b16 %v831
    %v1130 = vunpack.c.h.b16 %v831
    %v1131 = vunpack.c.l.b16 %v832
    %v1132 = vunpack.c.h.b16 %v832
    %v1133 = vunpack.c.l.b16 %v833
    %v1134 = vunpack.c.h.b16 %v833
    %v1135 = vunpack.c.l.b16 %v834
    %v1136 = vunpack.c.h.b16 %v834
    %v1137 = vunpack.c.l.b16 %v835
    %v1138 = vunpack.c.h.b16 %v835
    %v1139 = vunpack.c.l.b16 %v836
    %v1140 = vunpack.c.h.b16 %v836
    %v1141 = vunpack.c.l.b16 %v837
    %v1142 = vunpack.c.h.b16 %v837
    %v1143 = vunpack.c.l.b16 %v838
    %v1144 = vunpack.c.h.b16 %v838
    %v1145 = vunpack.c.l.b16 %v839
    %v1146 = vunpack.c.h.b16 %v839
    %v1147 = vunpack.c.l.b16 %v840
    %v1148 = vunpack.c.h.b16 %v840
    %v1149 = vunpack.c.l.b16 %v841
    %v1150 = vunpack.c.h.b16 %v841
    %v1151 = vunpack.c.l.b16 %v842
    %v1152 = vunpack.c.h.b16 %v842
    %v1153 = vunpack.c.l.b16 %v843
    %v1154 = vunpack.c.h.b16 %v843
    %v1155 = vunpack.c.l.b16 %v844
    %v1156 = vunpack.c.h.b16 %v844
    %v1157 = vunpack.c.l.b16 %v845
    %v1158 = vunpack.c.h.b16 %v845
    %v1159 = vunpack.c.l.b16 %v846
    %v1160 = vunpack.c.h.b16 %v846
    %v1161 = vunpack.c.l.b16 %v847
    %v1162 = vunpack.c.h.b16 %v847
    %v1163 = vunpack.c.l.b16 %v848
    %v1164 = vunpack.c.h.b16 %v848
    %v1165 = vunpack.c.l.b16 %v849
    %v1166 = vunpack.c.h.b16 %v849
    %v1167 = vunpack.c.l.b16 %v850
    %v1168 = vunpack.c.h.b16 %v850
    %v1169 = vunpack.c.l.b16 %v851
    %v1170 = vunpack.c.h.b16 %v851
    %v1171 = vunpack.c.l.b16 %v852
    %v1172 = vunpack.c.h.b16 %v852
    %v1173 = vunpack.c.l.b16 %v853
    %v1174 = vunpack.c.h.b16 %v853
    %v1175 = vunpack.c.l.b16 %v854
    %v1176 = vunpack.c.h.b16 %v854
    %v1177 = vunpack.c.l.b16 %v855
    %v1178 = vunpack.c.h.b16 %v855
    %v1179 = vunpack.c.l.b16 %v856
    %v1180 = vunpack.c.h.b16 %v856
    %v1181 = vunpack.c.l.b16 %v857
    %v1182 = vunpack.c.h.b16 %v857
    %v1183 = vunpack.c.l.b16 %v858
    %v1184 = vunpack.c.h.b16 %v858
    %v1185 = vunpack.c.l.b16 %v859
    %v1186 = vunpack.c.h.b16 %v859
    %v1187 = vunpack.c.l.b16 %v860
    %v1188 = vunpack.c.h.b16 %v860
    %v1189 = vunpack.c.l.b16 %v861
    %v1190 = vunpack.c.h.b16 %v861
    %v1191 = vunpack.c.l.b16 %v862
    %v1192 = vunpack.c.h.b16 %v862
    %v1193 = vunpack.c.l.b16 %v863
    %v1194 = vunpack.c.h.b16 %v863
    %v1195 = vunpack.c.l.b16 %v864
    %v1196 = vunpack.c.h.b16 %v864
    %v1197 = vunpack.c.l.b16 %v865
    %v1198 = vunpack.c.h.b16 %v865
    %v1199 = vunpack.c.l.b16 %v866
    %v1200 = vunpack.c.h.b16 %v866
    %v1201 = vunpack.c.l.b16 %v867
    %v1202 = vunpack.c.h.b16 %v867
    %v1203 = vunpack.c.l.b16 %v868
    %v1204 = vunpack.c.h.b16 %v868
    %v1205 = vunpack.c.l.b16 %v869
    %v1206 = vunpack.c.h.b16 %v869
    %v1207 = vunpack.c.l.b16 %v870
    %v1208 = vunpack.c.h.b16 %v870
    %v1209 = vunpack.c.l.b16 %v871
    %v1210 = vunpack.c.h.b16 %v871
    %v1211 = vunpack.c.l.b16 %v872
    %v1212 = vunpack.c.h.b16 %v872
    %v1213 = vunpack.c.l.b16 %v873
    %v1214 = vunpack.c.h.b16 %v873
    %v1215 = vunpack.c.l.b16 %v874
    %v1216 = vunpack.c.h.b16 %v874
    %v1217 = vunpack.c.l.b16 %v875
    %v1218 = vunpack.c.h.b16 %v875
    %v1219 = vunpack.c.l.b16 %v876
    %v1220 = vunpack.c.h.b16 %v876
    %v1221 = vunpack.c.l.b16 %v877
    %v1222 = vunpack.c.h.b16 %v877
    %v1223 = vunpack.c.l.b16 %v878
    %v1224 = vunpack.c.h.b16 %v878
    %v1225 = vunpack.c.l.b16 %v879
    %v1226 = vunpack.c.h.b16 %v879
    %v1227 = vunpack.c.l.b16 %v880
    %v1228 = vunpack.c.h.b16 %v880
    %v1229 = vunpack.c.l.b16 %v881
    %v1230 = vunpack.c.h.b16 %v881
    %v1231 = vunpack.c.l.b16 %v882
    %v1232 = vunpack.c.h.b16 %v882
    %v1233 = vunpack.c.l.b16 %v883
    %v1234 = vunpack.c.h.b16 %v883
    %v1235 = vunpack.c.l.b16 %v884
    %v1236 = vunpack.c.h.b16 %v884
    %v1237 = vunpack.c.l.b16 %v885
    %v1238 = vunpack.c.h.b16 %v885
    %v1239 = vunpack.c.l.b16 %v886
    %v1240 = vunpack.c.h.b16 %v886
    %v1241 = vunpack.c.l.b16 %v887
    %v1242 = vunpack.c.h.b16 %v887
    %v1243 = vunpack.c.l.b16 %v888
    %v1244 = vunpack.c.h.b16 %v888
    %v1245 = vunpack.c.l.b16 %v889
    %v1246 = vunpack.c.h.b16 %v889
    %v1247 = vunpack.c.l.b16 %v890
    %v1248 = vunpack.c.h.b16 %v890
    %v1249 = vunpack.c.l.b16 %v891
    %v1250 = vunpack.c.h.b16 %v891
    %v1251 = vunpack.c.l.b16 %v892
    %v1252 = vunpack.c.h.b16 %v892
    %v1253 = vunpack.c.l.b16 %v893
    %v1254 = vunpack.c.h.b16 %v893
    %v1255 = vunpack.c.l.b16 %v894
    %v1256 = vunpack.c.h.b16 %v894
    %v1257 = vunpack.c.l.b16 %v895
    %v1258 = vunpack.c.h.b16 %v895
    %v1259 = vunpack.c.l.b16 %v896
    %v1260 = vunpack.c.h.b16 %v896
    %v1261 = vunpack.c.l.b16 %v897
    %v1262 = vunpack.c.h.b16 %v897
    %v1263 = vunpack.c.l.b16 %v898
    %v1264 = vunpack.c.h.b16 %v898
    %v1265 = vunpack.c.l.b16 %v899
    %v1266 = vunpack.c.h.b16 %v899
    %v1267 = vunpack.c.l.b16 %v900
    %v1268 = vunpack.c.h.b16 %v900
    %v1269 = vunpack.c.l.b16 %v901
    %v1270 = vunpack.c.h.b16 %v901
    %v1271 = vunpack.c.l.b16 %v902
    %v1272 = vunpack.c.h.b16 %v902
    %v1273 = vunpack.c.l.b16 %v903
    %v1274 = vunpack.c.h.b16 %v903
    %v1275 = vunpack.c.l.b16 %v904
    %v1276 = vunpack.c.h.b16 %v904
    %v1277 = vunpack.c.l.b16 %v905
    %v1278 = vunpack.c.h.b16 %v905
    %v1279 = vunpack.c.l.b16 %v906
    %v1280 = vunpack.c.h.b16 %v906
    %v1281 = vunpack.c.l.b16 %v907
    %v1282 = vunpack.c.h.b16 %v907
    %v1283 = vunpack.c.l.b16 %v908
    %v1284 = vunpack.c.h.b16 %v908
    %v1285 = vunpack.c.l.b16 %v909
    %v1286 = vunpack.c.h.b16 %v909
    %v1287 = vunpack.c.l.b16 %v910
    %v1288 = vunpack.c.h.b16 %v910
    %v1289 = vunpack.c.l.b16 %v911
    %v1290 = vunpack.c.h.b16 %v911
    %v1291 = vunpack.c.l.b16 %v912
    %v1292 = vunpack.c.h.b16 %v912
    %v1293 = vunpack.c.l.b16 %v913
    %v1294 = vunpack.c.h.b16 %v913
    %v1295 = vunpack.c.l.b16 %v914
    %v1296 = vunpack.c.h.b16 %v914
    %v1297 = vunpack.c.l.b16 %v915
    %v1298 = vunpack.c.h.b16 %v915
    %v1299 = vunpack.c.l.b16 %v916
    %v1300 = vunpack.c.h.b16 %v916
    %v1301 = vunpack.c.l.b16 %v917
    %v1302 = vunpack.c.h.b16 %v917
    %v1303 = vunpack.c.l.b16 %v918
    %v1304 = vunpack.c.h.b16 %v918
    %v1305 = vunpack.c.l.b16 %v919
    %v1306 = vunpack.c.h.b16 %v919
    %v1307 = vunpack.c.l.b16 %v920
    %v1308 = vunpack.c.h.b16 %v920
    %v1309 = vunpack.c.l.b16 %v921
    %v1310 = vunpack.c.h.b16 %v921
    %v1311 = vunpack.c.l.b16 %v922
    %v1312 = vunpack.c.h.b16 %v922
    %v1313 = vunpack.c.l.b16 %v923
    %v1314 = vunpack.c.h.b16 %v923
    %v1315 = vunpack.c.l.b16 %v924
    %v1316 = vunpack.c.h.b16 %v924
    %v1317 = vunpack.c.l.b16 %v925
    %v1318 = vunpack.c.h.b16 %v925
    %v1319 = vunpack.c.l.b16 %v926
    %v1320 = vunpack.c.h.b16 %v926
    %v1321 = vunpack.c.l.b16 %v927
    %v1322 = vunpack.c.h.b16 %v927
    %v1323 = vunpack.c.l.b16 %v928
    %v1324 = vunpack.c.h.b16 %v928
    %v1325 = vunpack.c.l.b16 %v929
    %v1326 = vunpack.c.h.b16 %v929
    %v1327 = vunpack.c.l.b16 %v930
    %v1328 = vunpack.c.h.b16 %v930
    %v1329 = vunpack.c.l.b16 %v931
    %v1330 = vunpack.c.h.b16 %v931
    %v1331 = vpack.c.b16 %v1079, %v1075
    %v1332 = vpack.c.b16 %v1080, %v1076
    %v1333 = vpack.c.b16 %v1081, %v1077
    %v1334 = vpack.c.b16 %v1082, %v1078
    %v1335 = vpack.c.b16 %v1087, %v1083
    %v1336 = vpack.c.b16 %v1088, %v1084
    %v1337 = vpack.c.b16 %v1089, %v1085
    %v1338 = vpack.c.b16 %v1090, %v1086
    %v1339 = vpack.c.b16 %v1095, %v1091
    %v1340 = vpack.c.b16 %v1096, %v1092
    %v1341 = vpack.c.b16 %v1097, %v1093
    %v1342 = vpack.c.b16 %v1098, %v1094
    %v1343 = vpack.c.b16 %v1103, %v1099
    %v1344 = vpack.c.b16 %v1104, %v1100
    %v1345 = vpack.c.b16 %v1105, %v1101
    %v1346 = vpack.c.b16 %v1106, %v1102
    %v1347 = vpack.c.b16 %v1111, %v1107
    %v1348 = vpack.c.b16 %v1112, %v1108
    %v1349 = vpack.c.b16 %v1113, %v1109
    %v1350 = vpack.c.b16 %v1114, %v1110
    %v1351 = vpack.c.b16 %v1119, %v1115
    %v1352 = vpack.c.b16 %v1120, %v1116
    %v1353 = vpack.c.b16 %v1121, %v1117
    %v1354 = vpack.c.b16 %v1122, %v1118
    %v1355 = vpack.c.b16 %v1127, %v1123
    %v1356 = vpack.c.b16 %v1128, %v1124
    %v1357 = vpack.c.b16 %v1129, %v1125
    %v1358 = vpack.c.b16 %v1130, %v1126
    %v1359 = vpack.c.b16 %v1135, %v1131
    %v1360 = vpack.c.b16 %v1136, %v1132
    %v1361 = vpack.c.b16 %v1137, %v1133
    %v1362 = vpack.c.b16 %v1138, %v1134
    %v1363 = vpack.c.b16 %v1143, %v1139
    %v1364 = vpack.c.b16 %v1144, %v1140
    %v1365 = vpack.c.b16 %v1145, %v1141
    %v1366 = vpack.c.b16 %v1146, %v1142
    %v1367 = vpack.c.b16 %v1151, %v1147
    %v1368 = vpack.c.b16 %v1152, %v1148
    %v1369 = vpack.c.b16 %v1153, %v1149
    %v1370 = vpack.c.b16 %v1154, %v1150
    %v1371 = vpack.c.b16 %v1159, %v1155
    %v1372 = vpack.c.b16 %v1160, %v1156
    %v1373 = vpack.c.b16 %v1161, %v1157
    %v1374 = vpack.c.b16 %v1162, %v1158
    %v1375 = vpack.c.b16 %v1167, %v1163
    %v1376 = vpack.c.b16 %v1168, %v1164
    %v1377 = vpack.c.b16 %v1169, %v1165
    %v1378 = vpack.c.b16 %v1170, %v1166
    %v1379 = vpack.c.b16 %v1175, %v1171
    %v1380 = vpack.c.b16 %v1176, %v1172
    %v1381 = vpack.c.b16 %v1177, %v1173
    %v1382 = vpack.c.b16 %v1178, %v1174
    %v1383 = vpack.c.b16 %v1183, %v1179
    %v1384 = vpack.c.b16 %v1184, %v1180
    %v1385 = vpack.c.b16 %v1185, %v1181
    %v1386 = vpack.c.b16 %v1186, %v1182
    %v1387 = vpack.c.b16 %v1191, %v1187
    %v1388 = vpack.c.b16 %v1192, %v1188
    %v1389 = vpack.c.b16 %v1193, %v1189
    %v1390 = vpack.c.b16 %v1194, %v1190
    %v1391 = vpack.c.b16 %v1199, %v1195
    %v1392 = vpack.c.b16 %v1200, %v1196
    %v1393 = vpack.c.b16 %v1201, %v1197
    %v1394 = vpack.c.b16 %v1202, %v1198
    %v1395 = vpack.c.b16 %v1207, %v1203
    %v1396 = vpack.c.b16 %v1208, %v1204
    %v1397 = vpack.c.b16 %v1209, %v1205
    %v1398 = vpack.c.b16 %v1210, %v1206
    %v1399 = vpack.c.b16 %v1215, %v1211
    %v1400 = vpack.c.b16 %v1216, %v1212
    %v1401 = vpack.c.b16 %v1217, %v1213
    %v1402 = vpack.c.b16 %v1218, %v1214
    %v1403 = vpack.c.b16 %v1223, %v1219
    %v1404 = vpack.c.b16 %v1224, %v1220
    %v1405 = vpack.c.b16 %v1225, %v1221
    %v1406 = vpack.c.b16 %v1226, %v1222
    %v1407 = vpack.c.b16 %v1231, %v1227
    %v1408 = vpack.c.b16 %v1232, %v1228
    %v1409 = vpack.c.b16 %v1233, %v1229
    %v1410 = vpack.c.b16 %v1234, %v1230
    %v1411 = vpack.c.b16 %v1239, %v1235
    %v1412 = vpack.c.b16 %v1240, %v1236
    %v1413 = vpack.c.b16 %v1241, %v1237
    %v1414 = vpack.c.b16 %v1242, %v1238
    %v1415 = vpack.c.b16 %v1247, %v1243
    %v1416 = vpack.c.b16 %v1248, %v1244
    %v1417 = vpack.c.b16 %v1249, %v1245
    %v1418 = vpack.c.b16 %v1250, %v1246
    %v1419 = vpack.c.b16 %v1255, %v1251
    %v1420 = vpack.c.b16 %v1256, %v1252
    %v1421 = vpack.c.b16 %v1257, %v1253
    %v1422 = vpack.c.b16 %v1258, %v1254
    %v1423 = vpack.c.b16 %v1263, %v1259
    %v1424 = vpack.c.b16 %v1264, %v1260
    %v1425 = vpack.c.b16 %v1265, %v1261
    %v1426 = vpack.c.b16 %v1266, %v1262
    %v1427 = vpack.c.b16 %v1271, %v1267
    %v1428 = vpack.c.b16 %v1272, %v1268
    %v1429 = vpack.c.b16 %v1273, %v1269
    %v1430 = vpack.c.b16 %v1274, %v1270
    %v1431 = vpack.c.b16 %v1279, %v1275
    %v1432 = vpack.c.b16 %v1280, %v1276
    %v1433 = vpack.c.b16 %v1281, %v1277
    %v1434 = vpack.c.b16 %v1282, %v1278
    %v1435 = vpack.c.b16 %v1287, %v1283
    %v1436 = vpack.c.b16 %v1288, %v1284
    %v1437 = vpack.c.b16 %v1289, %v1285
    %v1438 = vpack.c.b16 %v1290, %v1286
    %v1439 = vpack.c.b16 %v1295, %v1291
    %v1440 = vpack.c.b16 %v1296, %v1292
    %v1441 = vpack.c.b16 %v1297, %v1293
    %v1442 = vpack.c.b16 %v1298, %v1294
    %v1443 = vpack.c.b16 %v1303, %v1299
    %v1444 = vpack.c.b16 %v1304, %v1300
    %v1445 = vpack.c.b16 %v1305, %v1301
    %v1446 = vpack.c.b16 %v1306, %v1302
    %v1447 = vpack.c.b16 %v1311, %v1307
    %v1448 = vpack.c.b16 %v1312, %v1308
    %v1449 = vpack.c.b16 %v1313, %v1309
    %v1450 = vpack.c.b16 %v1314, %v1310
    %v1451 = vpack.c.b16 %v1319, %v1315
    %v1452 = vpack.c.b16 %v1320, %v1316
    %v1453 = vpack.c.b16 %v1321, %v1317
    %v1454 = vpack.c.b16 %v1322, %v1318
    %v1455 = vpack.c.b16 %v1327, %v1323
    %v1456 = vpack.c.b16 %v1328, %v1324
    %v1457 = vpack.c.b16 %v1329, %v1325
    %v1458 = vpack.c.b16 %v1330, %v1326
    %1587 = vmatpush.bf16.msra.mxu0 %v1359
    %1588 = vmatpush.bf16.msra.mxu0 %v1355
    %1589 = vmatpush.bf16.msra.mxu0 %v1351
    %1590 = vmatpush.bf16.msra.mxu0 %v1347
    %1591 = vmatpush.bf16.msra.mxu0 %v1343
    %1592 = vmatpush.bf16.msra.mxu0 %v1339
    %1593 = vmatpush.bf16.msra.mxu0 %v1335
    %1594 = vmatpush.bf16.msra.mxu0 %v1331
    %1595 = vmatmul.bf16.gmra.mxu0 %v800
    %v1596 = vpop.f32.mrf.mxu0
    %v1597 = vadd.f32 %v939, %v1596
    %v1598 = vpop.f32.mrf.mxu0
    %1599 = vdwg.mxu0
    %1600 = vmatpush.bf16.msra.mxu0 %v1391
    %1601 = vmatpush.bf16.msra.mxu0 %v1387
    %1602 = vmatpush.bf16.msra.mxu0 %v1383
    %1603 = vmatpush.bf16.msra.mxu0 %v1379
    %1604 = vmatpush.bf16.msra.mxu0 %v1375
    %1605 = vmatpush.bf16.msra.mxu0 %v1371
    %1606 = vmatpush.bf16.msra.mxu0 %v1367
    %1607 = vmatpush.bf16.msra.mxu0 %v1363
    %1608 = vmatmul.bf16.gmra.mxu0 %v801
    %v1609 = vpop.f32.mrf.mxu0
    %v1610 = vadd.f32 %v1597, %v1609
    %v1611 = vpop.f32.mrf.mxu0
    %1612 = vdwg.mxu0
    %1613 = vmatpush.bf16.msra.mxu0 %v1423
    %1614 = vmatpush.bf16.msra.mxu0 %v1419
    %1615 = vmatpush.bf16.msra.mxu0 %v1415
    %1616 = vmatpush.bf16.msra.mxu0 %v1411
    %1617 = vmatpush.bf16.msra.mxu0 %v1407
    %1618 = vmatpush.bf16.msra.mxu0 %v1403
    %1619 = vmatpush.bf16.msra.mxu0 %v1399
    %1620 = vmatpush.bf16.msra.mxu0 %v1395
    %1621 = vmatmul.bf16.gmra.mxu0 %v802
    %v1622 = vpop.f32.mrf.mxu0
    %v1623 = vadd.f32 %v1610, %v1622
    %v1624 = vpop.f32.mrf.mxu0
    %1625 = vdwg.mxu0
    %1626 = vmatpush.bf16.msra.mxu0 %v1455
    %1627 = vmatpush.bf16.msra.mxu0 %v1451
    %1628 = vmatpush.bf16.msra.mxu0 %v1447
    %1629 = vmatpush.bf16.msra.mxu0 %v1443
    %1630 = vmatpush.bf16.msra.mxu0 %v1439
    %1631 = vmatpush.bf16.msra.mxu0 %v1435
    %1632 = vmatpush.bf16.msra.mxu0 %v1431
    %1633 = vmatpush.bf16.msra.mxu0 %v1427
    %1634 = vmatmul.bf16.gmra.mxu0 %v803
    %v1635 = vpop.f32.mrf.mxu0
    %v1636 = vadd.f32 %v1623, %v1635
    %v1637 = vpop.f32.mrf.mxu0
    %1638 = vdwg.mxu0
    %1639 = vmatpush.bf16.msra.mxu0 %v1360
    %1640 = vmatpush.bf16.msra.mxu0 %v1356
    %1641 = vmatpush.bf16.msra.mxu0 %v1352
    %1642 = vmatpush.bf16.msra.mxu0 %v1348
    %1643 = vmatpush.bf16.msra.mxu0 %v1344
    %1644 = vmatpush.bf16.msra.mxu0 %v1340
    %1645 = vmatpush.bf16.msra.mxu0 %v1336
    %1646 = vmatpush.bf16.msra.mxu0 %v1332
    %1647 = vmatmul.bf16.gmra.mxu0 %v800
    %v1648 = vpop.f32.mrf.mxu0
    %v1649 = vadd.f32 %v940, %v1648
    %v1650 = vpop.f32.mrf.mxu0
    %1651 = vdwg.mxu0
    %1652 = vmatpush.bf16.msra.mxu0 %v1392
    %1653 = vmatpush.bf16.msra.mxu0 %v1388
    %1654 = vmatpush.bf16.msra.mxu0 %v1384
    %1655 = vmatpush.bf16.msra.mxu0 %v1380
    %1656 = vmatpush.bf16.msra.mxu0 %v1376
    %1657 = vmatpush.bf16.msra.mxu0 %v1372
    %1658 = vmatpush.bf16.msra.mxu0 %v1368
    %1659 = vmatpush.bf16.msra.mxu0 %v1364
    %1660 = vmatmul.bf16.gmra.mxu0 %v801
    %v1661 = vpop.f32.mrf.mxu0
    %v1662 = vadd.f32 %v1649, %v1661
    %v1663 = vpop.f32.mrf.mxu0
    %1664 = vdwg.mxu0
    %1665 = vmatpush.bf16.msra.mxu0 %v1424
    %1666 = vmatpush.bf16.msra.mxu0 %v1420
    %1667 = vmatpush.bf16.msra.mxu0 %v1416
    %1668 = vmatpush.bf16.msra.mxu0 %v1412
    %1669 = vmatpush.bf16.msra.mxu0 %v1408
    %1670 = vmatpush.bf16.msra.mxu0 %v1404
    %1671 = vmatpush.bf16.msra.mxu0 %v1400
    %1672 = vmatpush.bf16.msra.mxu0 %v1396
    %1673 = vmatmul.bf16.gmra.mxu0 %v802
    %v1674 = vpop.f32.mrf.mxu0
    %v1675 = vadd.f32 %v1662, %v1674
    %v1676 = vpop.f32.mrf.mxu0
    %1677 = vdwg.mxu0
    %1678 = vmatpush.bf16.msra.mxu0 %v1456
    %1679 = vmatpush.bf16.msra.mxu0 %v1452
    %1680 = vmatpush.bf16.msra.mxu0 %v1448
    %1681 = vmatpush.bf16.msra.mxu0 %v1444
    %1682 = vmatpush.bf16.msra.mxu0 %v1440
    %1683 = vmatpush.bf16.msra.mxu0 %v1436
    %1684 = vmatpush.bf16.msra.mxu0 %v1432
    %1685 = vmatpush.bf16.msra.mxu0 %v1428
    %1686 = vmatmul.bf16.gmra.mxu0 %v803
    %v1687 = vpop.f32.mrf.mxu0
    %v1688 = vadd.f32 %v1675, %v1687
    %v1689 = vpop.f32.mrf.mxu0
    %1690 = vdwg.mxu0
    %1691 = vmatpush.bf16.msra.mxu0 %v1361
    %1692 = vmatpush.bf16.msra.mxu0 %v1357
    %1693 = vmatpush.bf16.msra.mxu0 %v1353
    %1694 = vmatpush.bf16.msra.mxu0 %v1349
    %1695 = vmatpush.bf16.msra.mxu0 %v1345
    %1696 = vmatpush.bf16.msra.mxu0 %v1341
    %1697 = vmatpush.bf16.msra.mxu0 %v1337
    %1698 = vmatpush.bf16.msra.mxu0 %v1333
    %1699 = vmatmul.bf16.gmra.mxu0 %v800
    %v1700 = vpop.f32.mrf.mxu0
    %v1701 = vadd.f32 %v941, %v1700
    %v1702 = vpop.f32.mrf.mxu0
    %1703 = vdwg.mxu0
    %1704 = vmatpush.bf16.msra.mxu0 %v1393
    %1705 = vmatpush.bf16.msra.mxu0 %v1389
    %1706 = vmatpush.bf16.msra.mxu0 %v1385
    %1707 = vmatpush.bf16.msra.mxu0 %v1381
    %1708 = vmatpush.bf16.msra.mxu0 %v1377
    %1709 = vmatpush.bf16.msra.mxu0 %v1373
    %1710 = vmatpush.bf16.msra.mxu0 %v1369
    %1711 = vmatpush.bf16.msra.mxu0 %v1365
    %1712 = vmatmul.bf16.gmra.mxu0 %v801
    %v1713 = vpop.f32.mrf.mxu0
    %v1714 = vadd.f32 %v1701, %v1713
    %v1715 = vpop.f32.mrf.mxu0
    %1716 = vdwg.mxu0
    %1717 = vmatpush.bf16.msra.mxu0 %v1425
    %1718 = vmatpush.bf16.msra.mxu0 %v1421
    %1719 = vmatpush.bf16.msra.mxu0 %v1417
    %1720 = vmatpush.bf16.msra.mxu0 %v1413
    %1721 = vmatpush.bf16.msra.mxu0 %v1409
    %1722 = vmatpush.bf16.msra.mxu0 %v1405
    %1723 = vmatpush.bf16.msra.mxu0 %v1401
    %1724 = vmatpush.bf16.msra.mxu0 %v1397
    %1725 = vmatmul.bf16.gmra.mxu0 %v802
    %v1726 = vpop.f32.mrf.mxu0
    %v1727 = vadd.f32 %v1714, %v1726
    %v1728 = vpop.f32.mrf.mxu0
    %1729 = vdwg.mxu0
    %1730 = vmatpush.bf16.msra.mxu0 %v1457
    %1731 = vmatpush.bf16.msra.mxu0 %v1453
    %1732 = vmatpush.bf16.msra.mxu0 %v1449
    %1733 = vmatpush.bf16.msra.mxu0 %v1445
    %1734 = vmatpush.bf16.msra.mxu0 %v1441
    %1735 = vmatpush.bf16.msra.mxu0 %v1437
    %1736 = vmatpush.bf16.msra.mxu0 %v1433
    %1737 = vmatpush.bf16.msra.mxu0 %v1429
    %1738 = vmatmul.bf16.gmra.mxu0 %v803
    %v1739 = vpop.f32.mrf.mxu0
    %v1740 = vadd.f32 %v1727, %v1739
    %v1741 = vpop.f32.mrf.mxu0
    %1742 = vdwg.mxu0
    %1743 = vmatpush.bf16.msra.mxu0 %v1362
    %1744 = vmatpush.bf16.msra.mxu0 %v1358
    %1745 = vmatpush.bf16.msra.mxu0 %v1354
    %1746 = vmatpush.bf16.msra.mxu0 %v1350
    %1747 = vmatpush.bf16.msra.mxu0 %v1346
    %1748 = vmatpush.bf16.msra.mxu0 %v1342
    %1749 = vmatpush.bf16.msra.mxu0 %v1338
    %1750 = vmatpush.bf16.msra.mxu0 %v1334
    %1751 = vmatmul.bf16.gmra.mxu0 %v800
    %v1752 = vpop.f32.mrf.mxu0
    %v1753 = vadd.f32 %v942, %v1752
    %v1754 = vpop.f32.mrf.mxu0
    %1755 = vdwg.mxu0
    %1756 = vmatpush.bf16.msra.mxu0 %v1394
    %1757 = vmatpush.bf16.msra.mxu0 %v1390
    %1758 = vmatpush.bf16.msra.mxu0 %v1386
    %1759 = vmatpush.bf16.msra.mxu0 %v1382
    %1760 = vmatpush.bf16.msra.mxu0 %v1378
    %1761 = vmatpush.bf16.msra.mxu0 %v1374
    %1762 = vmatpush.bf16.msra.mxu0 %v1370
    %1763 = vmatpush.bf16.msra.mxu0 %v1366
    %1764 = vmatmul.bf16.gmra.mxu0 %v801
    %v1765 = vpop.f32.mrf.mxu0
    %v1766 = vadd.f32 %v1753, %v1765
    %v1767 = vpop.f32.mrf.mxu0
    %1768 = vdwg.mxu0
    %1769 = vmatpush.bf16.msra.mxu0 %v1426
    %1770 = vmatpush.bf16.msra.mxu0 %v1422
    %1771 = vmatpush.bf16.msra.mxu0 %v1418
    %1772 = vmatpush.bf16.msra.mxu0 %v1414
    %1773 = vmatpush.bf16.msra.mxu0 %v1410
    %1774 = vmatpush.bf16.msra.mxu0 %v1406
    %1775 = vmatpush.bf16.msra.mxu0 %v1402
    %1776 = vmatpush.bf16.msra.mxu0 %v1398
    %1777 = vmatmul.bf16.gmra.mxu0 %v802
    %v1778 = vpop.f32.mrf.mxu0
    %v1779 = vadd.f32 %v1766, %v1778
    %v1780 = vpop.f32.mrf.mxu0
    %1781 = vdwg.mxu0
    %1782 = vmatpush.bf16.msra.mxu0 %v1458
    %1783 = vmatpush.bf16.msra.mxu0 %v1454
    %1784 = vmatpush.bf16.msra.mxu0 %v1450
    %1785 = vmatpush.bf16.msra.mxu0 %v1446
    %1786 = vmatpush.bf16.msra.mxu0 %v1442
    %1787 = vmatpush.bf16.msra.mxu0 %v1438
    %1788 = vmatpush.bf16.msra.mxu0 %v1434
    %1789 = vmatpush.bf16.msra.mxu0 %v1430
    %1790 = vmatmul.bf16.gmra.mxu0 %v803
    %v1791 = vpop.f32.mrf.mxu0
    %v1792 = vadd.f32 %v1779, %v1791
    %v1793 = vpop.f32.mrf.mxu0
    %1794 = vdwg.mxu0
    %v1795 = vmul.f32 %v1636, 0.01
    %v1796 = vmul.f32 %v1688, 0.01
    %v1797 = vmul.f32 %v1740, 0.01
    %v1798 = vmul.f32 %v1792, 0.01
    %v1799 = vmax.f32 %v1636, %v1795
    %v1800 = vmax.f32 %v1688, %v1796
    %v1801 = vmax.f32 %v1740, %v1797
    %v1802 = vmax.f32 %v1792, %v1798
    %v1803 = vrot.slane %v1799, 4
    %v1804 = vadd.f32 %v1799, %v1803
    %v1805 = vrot.slane %v1804, 2
    %v1806 = vadd.f32 %v1804, %v1805
    %v1807 = vrot.slane %v1806, 1
    %v1808 = vadd.f32 %v1806, %v1807
    %v1809 = vrot.slane %v1800, 4
    %v1810 = vadd.f32 %v1800, %v1809
    %v1811 = vrot.slane %v1810, 2
    %v1812 = vadd.f32 %v1810, %v1811
    %v1813 = vrot.slane %v1812, 1
    %v1814 = vadd.f32 %v1812, %v1813
    %v1815 = vrot.slane %v1801, 4
    %v1816 = vadd.f32 %v1801, %v1815
    %v1817 = vrot.slane %v1816, 2
    %v1818 = vadd.f32 %v1816, %v1817
    %v1819 = vrot.slane %v1818, 1
    %v1820 = vadd.f32 %v1818, %v1819
    %v1821 = vrot.slane %v1802, 4
    %v1822 = vadd.f32 %v1802, %v1821
    %v1823 = vrot.slane %v1822, 2
    %v1824 = vadd.f32 %v1822, %v1823
    %v1825 = vrot.slane %v1824, 1
    %v1826 = vadd.f32 %v1824, %v1825
    %v1827 = vmul.f32 %v1808, %v650
    %v1828 = vmul.f32 %v1814, %v650
    %v1829 = vmul.f32 %v1820, %v650
    %v1830 = vmul.f32 %v1826, %v650
    %v1831 = vmul.f32 %v1799, %v1799
    %v1832 = vmul.f32 %v1800, %v1800
    %v1833 = vmul.f32 %v1801, %v1801
    %v1834 = vmul.f32 %v1802, %v1802
    %v1835 = vrot.slane %v1831, 4
    %v1836 = vadd.f32 %v1831, %v1835
    %v1837 = vrot.slane %v1836, 2
    %v1838 = vadd.f32 %v1836, %v1837
    %v1839 = vrot.slane %v1838, 1
    %v1840 = vadd.f32 %v1838, %v1839
    %v1841 = vrot.slane %v1832, 4
    %v1842 = vadd.f32 %v1832, %v1841
    %v1843 = vrot.slane %v1842, 2
    %v1844 = vadd.f32 %v1842, %v1843
    %v1845 = vrot.slane %v1844, 1
    %v1846 = vadd.f32 %v1844, %v1845
    %v1847 = vrot.slane %v1833, 4
    %v1848 = vadd.f32 %v1833, %v1847
    %v1849 = vrot.slane %v1848, 2
    %v1850 = vadd.f32 %v1848, %v1849
    %v1851 = vrot.slane %v1850, 1
    %v1852 = vadd.f32 %v1850, %v1851
    %v1853 = vrot.slane %v1834, 4
    %v1854 = vadd.f32 %v1834, %v1853
    %v1855 = vrot.slane %v1854, 2
    %v1856 = vadd.f32 %v1854, %v1855
    %v1857 = vrot.slane %v1856, 1
    %v1858 = vadd.f32 %v1856, %v1857
    %v1859 = vmul.f32 %v1840, %v650
    %v1860 = vmul.f32 %v1846, %v650
    %v1861 = vmul.f32 %v1852, %v650
    %v1862 = vmul.f32 %v1858, %v650
    %v1863 = vmul.f32 %v1827, %v1827
    %v1864 = vmul.f32 %v1828, %v1828
    %v1865 = vmul.f32 %v1829, %v1829
    %v1866 = vmul.f32 %v1830, %v1830
    %v1867 = vsub.f32 %v1859, %v1863
    %v1868 = vsub.f32 %v1860, %v1864
    %v1869 = vsub.f32 %v1861, %v1865
    %v1870 = vsub.f32 %v1862, %v1866
    %v1871 = vmax.f32 %v1867, 0.0
    %v1872 = vmax.f32 %v1868, 0.0
    %v1873 = vmax.f32 %v1869, 0.0
    %v1874 = vmax.f32 %v1870, 0.0
    %v1875 = vadd.f32 %v1871, 1e-05
    %v1876 = vadd.f32 %v1872, 1e-05
    %v1877 = vadd.f32 %v1873, 1e-05
    %v1878 = vadd.f32 %v1874, 1e-05
    %v1879 = vrsqrt.pop %v1875
    %v1880 = vmul.f32 %v1879, %v1875
    %v1881 = vmul.f32 %v1880, %v1879
    %v1882 = vmul.f32 0.5, %v1881
    %v1883 = vsub.f32 1.5, %v1882
    %v1884 = vmul.f32 %v1879, %v1883
    %vm1885 = vweird.f32 %v1875
    %vm1886 = vweird.f32 %v1879
    %vm1887 = vmor %vm1885, %vm1886
    %v1888 = vsel %vm1887, %v1879, %v1884
    %v1889 = vrsqrt.pop %v1876
    %v1890 = vmul.f32 %v1889, %v1876
    %v1891 = vmul.f32 %v1890, %v1889
    %v1892 = vmul.f32 0.5, %v1891
    %v1893 = vsub.f32 1.5, %v1892
    %v1894 = vmul.f32 %v1889, %v1893
    %vm1895 = vweird.f32 %v1876
    %vm1896 = vweird.f32 %v1889
    %vm1897 = vmor %vm1895, %vm1896
    %v1898 = vsel %vm1897, %v1889, %v1894
    %v1899 = vrsqrt.pop %v1877
    %v1900 = vmul.f32 %v1899, %v1877
    %v1901 = vmul.f32 %v1900, %v1899
    %v1902 = vmul.f32 0.5, %v1901
    %v1903 = vsub.f32 1.5, %v1902
    %v1904 = vmul.f32 %v1899, %v1903
    %vm1905 = vweird.f32 %v1877
    %vm1906 = vweird.f32 %v1899
    %vm1907 = vmor %vm1905, %vm1906
    %v1908 = vsel %vm1907, %v1899, %v1904
    %v1909 = vrsqrt.pop %v1878
    %v1910 = vmul.f32 %v1909, %v1878
    %v1911 = vmul.f32 %v1910, %v1909
    %v1912 = vmul.f32 0.5, %v1911
    %v1913 = vsub.f32 1.5, %v1912
    %v1914 = vmul.f32 %v1909, %v1913
    %vm1915 = vweird.f32 %v1878
    %vm1916 = vweird.f32 %v1909
    %vm1917 = vmor %vm1915, %vm1916
    %v1918 = vsel %vm1917, %v1909, %v1914
    %v1923 = vrot.slane %v1898, 7
    %v1924 = vrot.slane %v1908, 6
    %v1925 = vrot.slane %v1918, 5
    %v1926 = vsel %vm750, %v1888, %v1923
    %v1927 = vsel %vm752, %v1924, %v1925
    %v1928 = vsel %vm754, %v1926, %v1927
    %v1930 = vmul.f32 %v935, %v1928
    %v1932 = vperm.slane %v1930, 0
    %v1933 = vperm.slane %v1930, 1
    %v1934 = vperm.slane %v1930, 2
    %v1935 = vperm.slane %v1930, 3
    %v1940 = vmul.f32 %v1827, %v1932
    %v1941 = vmul.f32 %v1828, %v1933
    %v1942 = vmul.f32 %v1829, %v1934
    %v1943 = vmul.f32 %v1830, %v1935
    %v1948 = vrot.slane %v1941, 7
    %v1949 = vrot.slane %v1942, 6
    %v1950 = vrot.slane %v1943, 5
    %v1951 = vsel %vm750, %v1940, %v1948
    %v1952 = vsel %vm752, %v1949, %v1950
    %v1953 = vsel %vm754, %v1951, %v1952
    %v1955 = vsub.f32 %v937, %v1953
    %v1956 = vmul.f32 %v1799, %v1932
    %v1957 = vmul.f32 %v1800, %v1933
    %v1958 = vmul.f32 %v1801, %v1934
    %v1959 = vmul.f32 %v1802, %v1935
    %v1961 = vperm.slane %v1955, 0
    %v1962 = vperm.slane %v1955, 1
    %v1963 = vperm.slane %v1955, 2
    %v1964 = vperm.slane %v1955, 3
    %v1969 = vadd.f32 %v1956, %v1961
    %v1970 = vadd.f32 %v1957, %v1962
    %v1971 = vadd.f32 %v1958, %v1963
    %v1972 = vadd.f32 %v1959, %v1964
    %v1973 = vpack.c.bf16 %v1969, %v1969
    %v1974 = vpack.c.bf16 %v1970, %v1970
    %v1975 = vpack.c.bf16 %v1971, %v1971
    %v1976 = vpack.c.bf16 %v1972, %v1972
    %v1977 = vld [vmem:[#allocation5] sm:$0xff]
    %v1978 = vld [vmem:[#allocation5 + $0x8] sm:$0xf]
    %v1979 = vld [vmem:[#allocation5 + $0xc] sm:$0xff]
    %v1980 = vld [vmem:[#allocation5 + $0x14] sm:$0xf]
    %v1981 = vld [vmem:[#allocation5 + $0x18] sm:$0xff]
    %v1982 = vld [vmem:[#allocation5 + $0x20] sm:$0xf]
    %v1983 = vld [vmem:[#allocation5 + $0x24] sm:$0xff]
    %v1984 = vld [vmem:[#allocation5 + $0x2c] sm:$0xf]
    %v1985 = vld [vmem:[#allocation5 + $0x30] sm:$0xff]
    %v1986 = vld [vmem:[#allocation5 + $0x38] sm:$0xf]
    %v1987 = vld [vmem:[#allocation5 + $0x3c] sm:$0xff]
    %v1988 = vld [vmem:[#allocation5 + $0x44] sm:$0xf]
    %v1989 = vld [vmem:[#allocation5 + $0x48] sm:$0xff]
    %v1990 = vld [vmem:[#allocation5 + $0x50] sm:$0xf]
    %v1991 = vld [vmem:[#allocation5 + $0x54] sm:$0xff]
    %v1992 = vld [vmem:[#allocation5 + $0x5c] sm:$0xf]
    %v1993 = vld [vmem:[#allocation5 + $0x60] sm:$0xff]
    %v1994 = vld [vmem:[#allocation5 + $0x68] sm:$0xf]
    %v1995 = vld [vmem:[#allocation5 + $0x6c] sm:$0xff]
    %v1996 = vld [vmem:[#allocation5 + $0x74] sm:$0xf]
    %v1997 = vld [vmem:[#allocation5 + $0x78] sm:$0xff]
    %v1998 = vld [vmem:[#allocation5 + $0x80] sm:$0xf]
    %v1999 = vld [vmem:[#allocation5 + $0x84] sm:$0xff]
    %v2000 = vld [vmem:[#allocation5 + $0x8c] sm:$0xf]
    %v2001 = vld [vmem:[#allocation5 + $0x90] sm:$0xff]
    %v2002 = vld [vmem:[#allocation5 + $0x98] sm:$0xf]
    %v2003 = vld [vmem:[#allocation5 + $0x9c] sm:$0xff]
    %v2004 = vld [vmem:[#allocation5 + $0xa4] sm:$0xf]
    %v2005 = vld [vmem:[#allocation5 + $0xa8] sm:$0xff]
    %v2006 = vld [vmem:[#allocation5 + $0xb0] sm:$0xf]
    %v2007 = vld [vmem:[#allocation5 + $0xb4] sm:$0xff]
    %v2008 = vld [vmem:[#allocation5 + $0xbc] sm:$0xf]
    %v2009 = vld [vmem:[#allocation5 + $0xc0] sm:$0xff]
    %v2010 = vld [vmem:[#allocation5 + $0xc8] sm:$0xf]
    %v2011 = vld [vmem:[#allocation5 + $0xcc] sm:$0xff]
    %v2012 = vld [vmem:[#allocation5 + $0xd4] sm:$0xf]
    %v2013 = vld [vmem:[#allocation5 + $0xd8] sm:$0xff]
    %v2014 = vld [vmem:[#allocation5 + $0xe0] sm:$0xf]
    %v2015 = vld [vmem:[#allocation5 + $0xe4] sm:$0xff]
    %v2016 = vld [vmem:[#allocation5 + $0xec] sm:$0xf]
    %v2017 = vld [vmem:[#allocation5 + $0xf0] sm:$0xff]
    %v2018 = vld [vmem:[#allocation5 + $0xf8] sm:$0xf]
    %v2019 = vld [vmem:[#allocation5 + $0xfc] sm:$0xff]
    %v2020 = vld [vmem:[#allocation5 + $0x104] sm:$0xf]
    %v2021 = vld [vmem:[#allocation5 + $0x108] sm:$0xff]
    %v2022 = vld [vmem:[#allocation5 + $0x110] sm:$0xf]
    %v2023 = vld [vmem:[#allocation5 + $0x114] sm:$0xff]
    %v2024 = vld [vmem:[#allocation5 + $0x11c] sm:$0xf]
    %v2025 = vld [vmem:[#allocation5 + $0x120] sm:$0xff]
    %v2026 = vld [vmem:[#allocation5 + $0x128] sm:$0xf]
    %v2027 = vld [vmem:[#allocation5 + $0x12c] sm:$0xff]
    %v2028 = vld [vmem:[#allocation5 + $0x134] sm:$0xf]
    %v2029 = vld [vmem:[#allocation5 + $0x138] sm:$0xff]
    %v2030 = vld [vmem:[#allocation5 + $0x140] sm:$0xf]
    %v2031 = vld [vmem:[#allocation5 + $0x144] sm:$0xff]
    %v2032 = vld [vmem:[#allocation5 + $0x14c] sm:$0xf]
    %v2033 = vld [vmem:[#allocation5 + $0x150] sm:$0xff]
    %v2034 = vld [vmem:[#allocation5 + $0x158] sm:$0xf]
    %v2035 = vld [vmem:[#allocation5 + $0x15c] sm:$0xff]
    %v2036 = vld [vmem:[#allocation5 + $0x164] sm:$0xf]
    %v2037 = vld [vmem:[#allocation5 + $0x168] sm:$0xff]
    %v2038 = vld [vmem:[#allocation5 + $0x170] sm:$0xf]
    %v2039 = vld [vmem:[#allocation5 + $0x174] sm:$0xff]
    %v2040 = vld [vmem:[#allocation5 + $0x17c] sm:$0xf]
    %v2041 = vld [vmem:[#allocation5 + $0x180] sm:$0xff]
    %v2042 = vld [vmem:[#allocation5 + $0x188] sm:$0xf]
    %v2043 = vld [vmem:[#allocation5 + $0x18c] sm:$0xff]
    %v2044 = vld [vmem:[#allocation5 + $0x194] sm:$0xf]
    %v2045 = vld [vmem:[#allocation5 + $0x198] sm:$0xff]
    %v2046 = vld [vmem:[#allocation5 + $0x1a0] sm:$0xf]
    %v2047 = vld [vmem:[#allocation5 + $0x1a4] sm:$0xff]
    %v2048 = vld [vmem:[#allocation5 + $0x1ac] sm:$0xf]
    %v2049 = vld [vmem:[#allocation5 + $0x1b0] sm:$0xff]
    %v2050 = vld [vmem:[#allocation5 + $0x1b8] sm:$0xf]
    %v2051 = vld [vmem:[#allocation5 + $0x1bc] sm:$0xff]
    %v2052 = vld [vmem:[#allocation5 + $0x1c4] sm:$0xf]
    %v2053 = vld [vmem:[#allocation5 + $0x1c8] sm:$0xff]
    %v2054 = vld [vmem:[#allocation5 + $0x1d0] sm:$0xf]
    %v2055 = vld [vmem:[#allocation5 + $0x1d4] sm:$0xff]
    %v2056 = vld [vmem:[#allocation5 + $0x1dc] sm:$0xf]
    %v2057 = vld [vmem:[#allocation5 + $0x1e0] sm:$0xff]
    %v2058 = vld [vmem:[#allocation5 + $0x1e8] sm:$0xf]
    %v2059 = vld [vmem:[#allocation5 + $0x1ec] sm:$0xff]
    %v2060 = vld [vmem:[#allocation5 + $0x1f4] sm:$0xf]
    %v2061 = vld [vmem:[#allocation5 + $0x1f8] sm:$0xff]
    %v2062 = vld [vmem:[#allocation5 + $0x200] sm:$0xf]
    %v2063 = vld [vmem:[#allocation5 + $0x204] sm:$0xff]
    %v2064 = vld [vmem:[#allocation5 + $0x20c] sm:$0xf]
    %v2065 = vld [vmem:[#allocation5 + $0x210] sm:$0xff]
    %v2066 = vld [vmem:[#allocation5 + $0x218] sm:$0xf]
    %v2067 = vld [vmem:[#allocation5 + $0x21c] sm:$0xff]
    %v2068 = vld [vmem:[#allocation5 + $0x224] sm:$0xf]
    %v2069 = vld [vmem:[#allocation5 + $0x228] sm:$0xff]
    %v2070 = vld [vmem:[#allocation5 + $0x230] sm:$0xf]
    %v2071 = vld [vmem:[#allocation5 + $0x234] sm:$0xff]
    %v2072 = vld [vmem:[#allocation5 + $0x23c] sm:$0xf]
    %v2073 = vld [vmem:[#allocation5 + $0x240] sm:$0xff]
    %v2074 = vld [vmem:[#allocation5 + $0x248] sm:$0xf]
    %v2075 = vld [vmem:[#allocation5 + $0x24c] sm:$0xff]
    %v2076 = vld [vmem:[#allocation5 + $0x254] sm:$0xf]
    %v2077 = vld [vmem:[#allocation5 + $0x258] sm:$0xff]
    %v2078 = vld [vmem:[#allocation5 + $0x260] sm:$0xf]
    %v2079 = vld [vmem:[#allocation5 + $0x264] sm:$0xff]
    %v2080 = vld [vmem:[#allocation5 + $0x26c] sm:$0xf]
    %v2081 = vld [vmem:[#allocation5 + $0x270] sm:$0xff]
    %v2082 = vld [vmem:[#allocation5 + $0x278] sm:$0xf]
    %v2083 = vld [vmem:[#allocation5 + $0x27c] sm:$0xff]
    %v2084 = vld [vmem:[#allocation5 + $0x284] sm:$0xf]
    %v2085 = vld [vmem:[#allocation5 + $0x288] sm:$0xff]
    %v2086 = vld [vmem:[#allocation5 + $0x290] sm:$0xf]
    %v2087 = vld [vmem:[#allocation5 + $0x294] sm:$0xff]
    %v2088 = vld [vmem:[#allocation5 + $0x29c] sm:$0xf]
    %v2089 = vld [vmem:[#allocation5 + $0x2a0] sm:$0xff]
    %v2090 = vld [vmem:[#allocation5 + $0x2a8] sm:$0xf]
    %v2091 = vld [vmem:[#allocation5 + $0x2ac] sm:$0xff]
    %v2092 = vld [vmem:[#allocation5 + $0x2b4] sm:$0xf]
    %v2093 = vld [vmem:[#allocation5 + $0x2b8] sm:$0xff]
    %v2094 = vld [vmem:[#allocation5 + $0x2c0] sm:$0xf]
    %v2095 = vld [vmem:[#allocation5 + $0x2c4] sm:$0xff]
    %v2096 = vld [vmem:[#allocation5 + $0x2cc] sm:$0xf]
    %v2097 = vld [vmem:[#allocation5 + $0x2d0] sm:$0xff]
    %v2098 = vld [vmem:[#allocation5 + $0x2d8] sm:$0xf]
    %v2099 = vld [vmem:[#allocation5 + $0x2dc] sm:$0xff]
    %v2100 = vld [vmem:[#allocation5 + $0x2e4] sm:$0xf]
    %v2101 = vld [vmem:[#allocation5 + $0x2e8] sm:$0xff]
    %v2102 = vld [vmem:[#allocation5 + $0x2f0] sm:$0xf]
    %v2103 = vld [vmem:[#allocation5 + $0x2f4] sm:$0xff]
    %v2104 = vld [vmem:[#allocation5 + $0x2fc] sm:$0xf]
    %s2105 = scalar_lea.vmem [#allocation10], 2
    %v2106 = vld [vmem:[%s2105] ss:$8 sm:$0x7]
    %s2107 = scalar_lea.vmem [#allocation10], 32
    %v2108 = vld [vmem:[%s2107] ss:$8 sm:$0x7]
    %s2109 = scalar_lea.vmem [#allocation10], 38
    %v2110 = vld [vmem:[%s2109] ss:$8 sm:$0x7]
    %v2112 = vperm.slane %v2106, 0
    %v2113 = vperm.slane %v2106, 1
    %v2114 = vperm.slane %v2106, 2
    %v2246 = vunpack.c.l.b16 %v1977
    %v2247 = vunpack.c.h.b16 %v1977
    %v2248 = vunpack.c.l.b16 %v1978
    %v2249 = vunpack.c.l.b16 %v1979
    %v2250 = vunpack.c.h.b16 %v1979
    %v2251 = vunpack.c.l.b16 %v1980
    %v2252 = vunpack.c.l.b16 %v1981
    %v2253 = vunpack.c.h.b16 %v1981
    %v2254 = vunpack.c.l.b16 %v1982
    %v2255 = vunpack.c.l.b16 %v1983
    %v2256 = vunpack.c.h.b16 %v1983
    %v2257 = vunpack.c.l.b16 %v1984
    %v2258 = vunpack.c.l.b16 %v1985
    %v2259 = vunpack.c.h.b16 %v1985
    %v2260 = vunpack.c.l.b16 %v1986
    %v2261 = vunpack.c.l.b16 %v1987
    %v2262 = vunpack.c.h.b16 %v1987
    %v2263 = vunpack.c.l.b16 %v1988
    %v2264 = vunpack.c.l.b16 %v1989
    %v2265 = vunpack.c.h.b16 %v1989
    %v2266 = vunpack.c.l.b16 %v1990
    %v2267 = vunpack.c.l.b16 %v1991
    %v2268 = vunpack.c.h.b16 %v1991
    %v2269 = vunpack.c.l.b16 %v1992
    %v2270 = vunpack.c.l.b16 %v1993
    %v2271 = vunpack.c.h.b16 %v1993
    %v2272 = vunpack.c.l.b16 %v1994
    %v2273 = vunpack.c.l.b16 %v1995
    %v2274 = vunpack.c.h.b16 %v1995
    %v2275 = vunpack.c.l.b16 %v1996
    %v2276 = vunpack.c.l.b16 %v1997
    %v2277 = vunpack.c.h.b16 %v1997
    %v2278 = vunpack.c.l.b16 %v1998
    %v2279 = vunpack.c.l.b16 %v1999
    %v2280 = vunpack.c.h.b16 %v1999
    %v2281 = vunpack.c.l.b16 %v2000
    %v2282 = vunpack.c.l.b16 %v2001
    %v2283 = vunpack.c.h.b16 %v2001
    %v2284 = vunpack.c.l.b16 %v2002
    %v2285 = vunpack.c.l.b16 %v2003
    %v2286 = vunpack.c.h.b16 %v2003
    %v2287 = vunpack.c.l.b16 %v2004
    %v2288 = vunpack.c.l.b16 %v2005
    %v2289 = vunpack.c.h.b16 %v2005
    %v2290 = vunpack.c.l.b16 %v2006
    %v2291 = vunpack.c.l.b16 %v2007
    %v2292 = vunpack.c.h.b16 %v2007
    %v2293 = vunpack.c.l.b16 %v2008
    %v2294 = vunpack.c.l.b16 %v2009
    %v2295 = vunpack.c.h.b16 %v2009
    %v2296 = vunpack.c.l.b16 %v2010
    %v2297 = vunpack.c.l.b16 %v2011
    %v2298 = vunpack.c.h.b16 %v2011
    %v2299 = vunpack.c.l.b16 %v2012
    %v2300 = vunpack.c.l.b16 %v2013
    %v2301 = vunpack.c.h.b16 %v2013
    %v2302 = vunpack.c.l.b16 %v2014
    %v2303 = vunpack.c.l.b16 %v2015
    %v2304 = vunpack.c.h.b16 %v2015
    %v2305 = vunpack.c.l.b16 %v2016
    %v2306 = vunpack.c.l.b16 %v2017
    %v2307 = vunpack.c.h.b16 %v2017
    %v2308 = vunpack.c.l.b16 %v2018
    %v2309 = vunpack.c.l.b16 %v2019
    %v2310 = vunpack.c.h.b16 %v2019
    %v2311 = vunpack.c.l.b16 %v2020
    %v2312 = vunpack.c.l.b16 %v2021
    %v2313 = vunpack.c.h.b16 %v2021
    %v2314 = vunpack.c.l.b16 %v2022
    %v2315 = vunpack.c.l.b16 %v2023
    %v2316 = vunpack.c.h.b16 %v2023
    %v2317 = vunpack.c.l.b16 %v2024
    %v2318 = vunpack.c.l.b16 %v2025
    %v2319 = vunpack.c.h.b16 %v2025
    %v2320 = vunpack.c.l.b16 %v2026
    %v2321 = vunpack.c.l.b16 %v2027
    %v2322 = vunpack.c.h.b16 %v2027
    %v2323 = vunpack.c.l.b16 %v2028
    %v2324 = vunpack.c.l.b16 %v2029
    %v2325 = vunpack.c.h.b16 %v2029
    %v2326 = vunpack.c.l.b16 %v2030
    %v2327 = vunpack.c.l.b16 %v2031
    %v2328 = vunpack.c.h.b16 %v2031
    %v2329 = vunpack.c.l.b16 %v2032
    %v2330 = vunpack.c.l.b16 %v2033
    %v2331 = vunpack.c.h.b16 %v2033
    %v2332 = vunpack.c.l.b16 %v2034
    %v2333 = vunpack.c.l.b16 %v2035
    %v2334 = vunpack.c.h.b16 %v2035
    %v2335 = vunpack.c.l.b16 %v2036
    %v2336 = vunpack.c.l.b16 %v2037
    %v2337 = vunpack.c.h.b16 %v2037
    %v2338 = vunpack.c.l.b16 %v2038
    %v2339 = vunpack.c.l.b16 %v2039
    %v2340 = vunpack.c.h.b16 %v2039
    %v2341 = vunpack.c.l.b16 %v2040
    %v2342 = vunpack.c.l.b16 %v2041
    %v2343 = vunpack.c.h.b16 %v2041
    %v2344 = vunpack.c.l.b16 %v2042
    %v2345 = vunpack.c.l.b16 %v2043
    %v2346 = vunpack.c.h.b16 %v2043
    %v2347 = vunpack.c.l.b16 %v2044
    %v2348 = vunpack.c.l.b16 %v2045
    %v2349 = vunpack.c.h.b16 %v2045
    %v2350 = vunpack.c.l.b16 %v2046
    %v2351 = vunpack.c.l.b16 %v2047
    %v2352 = vunpack.c.h.b16 %v2047
    %v2353 = vunpack.c.l.b16 %v2048
    %v2354 = vunpack.c.l.b16 %v2049
    %v2355 = vunpack.c.h.b16 %v2049
    %v2356 = vunpack.c.l.b16 %v2050
    %v2357 = vunpack.c.l.b16 %v2051
    %v2358 = vunpack.c.h.b16 %v2051
    %v2359 = vunpack.c.l.b16 %v2052
    %v2360 = vunpack.c.l.b16 %v2053
    %v2361 = vunpack.c.h.b16 %v2053
    %v2362 = vunpack.c.l.b16 %v2054
    %v2363 = vunpack.c.l.b16 %v2055
    %v2364 = vunpack.c.h.b16 %v2055
    %v2365 = vunpack.c.l.b16 %v2056
    %v2366 = vunpack.c.l.b16 %v2057
    %v2367 = vunpack.c.h.b16 %v2057
    %v2368 = vunpack.c.l.b16 %v2058
    %v2369 = vunpack.c.l.b16 %v2059
    %v2370 = vunpack.c.h.b16 %v2059
    %v2371 = vunpack.c.l.b16 %v2060
    %v2372 = vunpack.c.l.b16 %v2061
    %v2373 = vunpack.c.h.b16 %v2061
    %v2374 = vunpack.c.l.b16 %v2062
    %v2375 = vunpack.c.l.b16 %v2063
    %v2376 = vunpack.c.h.b16 %v2063
    %v2377 = vunpack.c.l.b16 %v2064
    %v2378 = vunpack.c.l.b16 %v2065
    %v2379 = vunpack.c.h.b16 %v2065
    %v2380 = vunpack.c.l.b16 %v2066
    %v2381 = vunpack.c.l.b16 %v2067
    %v2382 = vunpack.c.h.b16 %v2067
    %v2383 = vunpack.c.l.b16 %v2068
    %v2384 = vunpack.c.l.b16 %v2069
    %v2385 = vunpack.c.h.b16 %v2069
    %v2386 = vunpack.c.l.b16 %v2070
    %v2387 = vunpack.c.l.b16 %v2071
    %v2388 = vunpack.c.h.b16 %v2071
    %v2389 = vunpack.c.l.b16 %v2072
    %v2390 = vunpack.c.l.b16 %v2073
    %v2391 = vunpack.c.h.b16 %v2073
    %v2392 = vunpack.c.l.b16 %v2074
    %v2393 = vunpack.c.l.b16 %v2075
    %v2394 = vunpack.c.h.b16 %v2075
    %v2395 = vunpack.c.l.b16 %v2076
    %v2396 = vunpack.c.l.b16 %v2077
    %v2397 = vunpack.c.h.b16 %v2077
    %v2398 = vunpack.c.l.b16 %v2078
    %v2399 = vunpack.c.l.b16 %v2079
    %v2400 = vunpack.c.h.b16 %v2079
    %v2401 = vunpack.c.l.b16 %v2080
    %v2402 = vunpack.c.l.b16 %v2081
    %v2403 = vunpack.c.h.b16 %v2081
    %v2404 = vunpack.c.l.b16 %v2082
    %v2405 = vunpack.c.l.b16 %v2083
    %v2406 = vunpack.c.h.b16 %v2083
    %v2407 = vunpack.c.l.b16 %v2084
    %v2408 = vunpack.c.l.b16 %v2085
    %v2409 = vunpack.c.h.b16 %v2085
    %v2410 = vunpack.c.l.b16 %v2086
    %v2411 = vunpack.c.l.b16 %v2087
    %v2412 = vunpack.c.h.b16 %v2087
    %v2413 = vunpack.c.l.b16 %v2088
    %v2414 = vunpack.c.l.b16 %v2089
    %v2415 = vunpack.c.h.b16 %v2089
    %v2416 = vunpack.c.l.b16 %v2090
    %v2417 = vunpack.c.l.b16 %v2091
    %v2418 = vunpack.c.h.b16 %v2091
    %v2419 = vunpack.c.l.b16 %v2092
    %v2420 = vunpack.c.l.b16 %v2093
    %v2421 = vunpack.c.h.b16 %v2093
    %v2422 = vunpack.c.l.b16 %v2094
    %v2423 = vunpack.c.l.b16 %v2095
    %v2424 = vunpack.c.h.b16 %v2095
    %v2425 = vunpack.c.l.b16 %v2096
    %v2426 = vunpack.c.l.b16 %v2097
    %v2427 = vunpack.c.h.b16 %v2097
    %v2428 = vunpack.c.l.b16 %v2098
    %v2429 = vunpack.c.l.b16 %v2099
    %v2430 = vunpack.c.h.b16 %v2099
    %v2431 = vunpack.c.l.b16 %v2100
    %v2432 = vunpack.c.l.b16 %v2101
    %v2433 = vunpack.c.h.b16 %v2101
    %v2434 = vunpack.c.l.b16 %v2102
    %v2435 = vunpack.c.l.b16 %v2103
    %v2436 = vunpack.c.h.b16 %v2103
    %v2437 = vunpack.c.l.b16 %v2104
    %v2438 = vpack.c.b16 %v2249, %v2246
    %v2439 = vpack.c.b16 %v2250, %v2247
    %v2440 = vpack.c.b16 %v2251, %v2248
    %v2441 = vpack.c.b16 %v2255, %v2252
    %v2442 = vpack.c.b16 %v2256, %v2253
    %v2443 = vpack.c.b16 %v2257, %v2254
    %v2444 = vpack.c.b16 %v2261, %v2258
    %v2445 = vpack.c.b16 %v2262, %v2259
    %v2446 = vpack.c.b16 %v2263, %v2260
    %v2447 = vpack.c.b16 %v2267, %v2264
    %v2448 = vpack.c.b16 %v2268, %v2265
    %v2449 = vpack.c.b16 %v2269, %v2266
    %v2450 = vpack.c.b16 %v2273, %v2270
    %v2451 = vpack.c.b16 %v2274, %v2271
    %v2452 = vpack.c.b16 %v2275, %v2272
    %v2453 = vpack.c.b16 %v2279, %v2276
    %v2454 = vpack.c.b16 %v2280, %v2277
    %v2455 = vpack.c.b16 %v2281, %v2278
    %v2456 = vpack.c.b16 %v2285, %v2282
    %v2457 = vpack.c.b16 %v2286, %v2283
    %v2458 = vpack.c.b16 %v2287, %v2284
    %v2459 = vpack.c.b16 %v2291, %v2288
    %v2460 = vpack.c.b16 %v2292, %v2289
    %v2461 = vpack.c.b16 %v2293, %v2290
    %v2462 = vpack.c.b16 %v2297, %v2294
    %v2463 = vpack.c.b16 %v2298, %v2295
    %v2464 = vpack.c.b16 %v2299, %v2296
    %v2465 = vpack.c.b16 %v2303, %v2300
    %v2466 = vpack.c.b16 %v2304, %v2301
    %v2467 = vpack.c.b16 %v2305, %v2302
    %v2468 = vpack.c.b16 %v2309, %v2306
    %v2469 = vpack.c.b16 %v2310, %v2307
    %v2470 = vpack.c.b16 %v2311, %v2308
    %v2471 = vpack.c.b16 %v2315, %v2312
    %v2472 = vpack.c.b16 %v2316, %v2313
    %v2473 = vpack.c.b16 %v2317, %v2314
    %v2474 = vpack.c.b16 %v2321, %v2318
    %v2475 = vpack.c.b16 %v2322, %v2319
    %v2476 = vpack.c.b16 %v2323, %v2320
    %v2477 = vpack.c.b16 %v2327, %v2324
    %v2478 = vpack.c.b16 %v2328, %v2325
    %v2479 = vpack.c.b16 %v2329, %v2326
    %v2480 = vpack.c.b16 %v2333, %v2330
    %v2481 = vpack.c.b16 %v2334, %v2331
    %v2482 = vpack.c.b16 %v2335, %v2332
    %v2483 = vpack.c.b16 %v2339, %v2336
    %v2484 = vpack.c.b16 %v2340, %v2337
    %v2485 = vpack.c.b16 %v2341, %v2338
    %v2486 = vpack.c.b16 %v2345, %v2342
    %v2487 = vpack.c.b16 %v2346, %v2343
    %v2488 = vpack.c.b16 %v2347, %v2344
    %v2489 = vpack.c.b16 %v2351, %v2348
    %v2490 = vpack.c.b16 %v2352, %v2349
    %v2491 = vpack.c.b16 %v2353, %v2350
    %v2492 = vpack.c.b16 %v2357, %v2354
    %v2493 = vpack.c.b16 %v2358, %v2355
    %v2494 = vpack.c.b16 %v2359, %v2356
    %v2495 = vpack.c.b16 %v2363, %v2360
    %v2496 = vpack.c.b16 %v2364, %v2361
    %v2497 = vpack.c.b16 %v2365, %v2362
    %v2498 = vpack.c.b16 %v2369, %v2366
    %v2499 = vpack.c.b16 %v2370, %v2367
    %v2500 = vpack.c.b16 %v2371, %v2368
    %v2501 = vpack.c.b16 %v2375, %v2372
    %v2502 = vpack.c.b16 %v2376, %v2373
    %v2503 = vpack.c.b16 %v2377, %v2374
    %v2504 = vpack.c.b16 %v2381, %v2378
    %v2505 = vpack.c.b16 %v2382, %v2379
    %v2506 = vpack.c.b16 %v2383, %v2380
    %v2507 = vpack.c.b16 %v2387, %v2384
    %v2508 = vpack.c.b16 %v2388, %v2385
    %v2509 = vpack.c.b16 %v2389, %v2386
    %v2510 = vpack.c.b16 %v2393, %v2390
    %v2511 = vpack.c.b16 %v2394, %v2391
    %v2512 = vpack.c.b16 %v2395, %v2392
    %v2513 = vpack.c.b16 %v2399, %v2396
    %v2514 = vpack.c.b16 %v2400, %v2397
    %v2515 = vpack.c.b16 %v2401, %v2398
    %v2516 = vpack.c.b16 %v2405, %v2402
    %v2517 = vpack.c.b16 %v2406, %v2403
    %v2518 = vpack.c.b16 %v2407, %v2404
    %v2519 = vpack.c.b16 %v2411, %v2408
    %v2520 = vpack.c.b16 %v2412, %v2409
    %v2521 = vpack.c.b16 %v2413, %v2410
    %v2522 = vpack.c.b16 %v2417, %v2414
    %v2523 = vpack.c.b16 %v2418, %v2415
    %v2524 = vpack.c.b16 %v2419, %v2416
    %v2525 = vpack.c.b16 %v2423, %v2420
    %v2526 = vpack.c.b16 %v2424, %v2421
    %v2527 = vpack.c.b16 %v2425, %v2422
    %v2528 = vpack.c.b16 %v2429, %v2426
    %v2529 = vpack.c.b16 %v2430, %v2427
    %v2530 = vpack.c.b16 %v2431, %v2428
    %v2531 = vpack.c.b16 %v2435, %v2432
    %v2532 = vpack.c.b16 %v2436, %v2433
    %v2533 = vpack.c.b16 %v2437, %v2434
    %2630 = vmatpush.bf16.msra.mxu0 %v2459
    %2631 = vmatpush.bf16.msra.mxu0 %v2456
    %2632 = vmatpush.bf16.msra.mxu0 %v2453
    %2633 = vmatpush.bf16.msra.mxu0 %v2450
    %2634 = vmatpush.bf16.msra.mxu0 %v2447
    %2635 = vmatpush.bf16.msra.mxu0 %v2444
    %2636 = vmatpush.bf16.msra.mxu0 %v2441
    %2637 = vmatpush.bf16.msra.mxu0 %v2438
    %2638 = vmatmul.bf16.gmra.mxu0 %v1973
    %v2639 = vpop.f32.mrf.mxu0
    %v2640 = vadd.f32 %v2112, %v2639
    %v2641 = vpop.f32.mrf.mxu0
    %2642 = vdwg.mxu0
    %2643 = vmatpush.bf16.msra.mxu0 %v2483
    %2644 = vmatpush.bf16.msra.mxu0 %v2480
    %2645 = vmatpush.bf16.msra.mxu0 %v2477
    %2646 = vmatpush.bf16.msra.mxu0 %v2474
    %2647 = vmatpush.bf16.msra.mxu0 %v2471
    %2648 = vmatpush.bf16.msra.mxu0 %v2468
    %2649 = vmatpush.bf16.msra.mxu0 %v2465
    %2650 = vmatpush.bf16.msra.mxu0 %v2462
    %2651 = vmatmul.bf16.gmra.mxu0 %v1974
    %v2652 = vpop.f32.mrf.mxu0
    %v2653 = vadd.f32 %v2640, %v2652
    %v2654 = vpop.f32.mrf.mxu0
    %2655 = vdwg.mxu0
    %2656 = vmatpush.bf16.msra.mxu0 %v2507
    %2657 = vmatpush.bf16.msra.mxu0 %v2504
    %2658 = vmatpush.bf16.msra.mxu0 %v2501
    %2659 = vmatpush.bf16.msra.mxu0 %v2498
    %2660 = vmatpush.bf16.msra.mxu0 %v2495
    %2661 = vmatpush.bf16.msra.mxu0 %v2492
    %2662 = vmatpush.bf16.msra.mxu0 %v2489
    %2663 = vmatpush.bf16.msra.mxu0 %v2486
    %2664 = vmatmul.bf16.gmra.mxu0 %v1975
    %v2665 = vpop.f32.mrf.mxu0
    %v2666 = vadd.f32 %v2653, %v2665
    %v2667 = vpop.f32.mrf.mxu0
    %2668 = vdwg.mxu0
    %2669 = vmatpush.bf16.msra.mxu0 %v2531
    %2670 = vmatpush.bf16.msra.mxu0 %v2528
    %2671 = vmatpush.bf16.msra.mxu0 %v2525
    %2672 = vmatpush.bf16.msra.mxu0 %v2522
    %2673 = vmatpush.bf16.msra.mxu0 %v2519
    %2674 = vmatpush.bf16.msra.mxu0 %v2516
    %2675 = vmatpush.bf16.msra.mxu0 %v2513
    %2676 = vmatpush.bf16.msra.mxu0 %v2510
    %2677 = vmatmul.bf16.gmra.mxu0 %v1976
    %v2678 = vpop.f32.mrf.mxu0
    %v2679 = vadd.f32 %v2666, %v2678
    %v2680 = vpop.f32.mrf.mxu0
    %2681 = vdwg.mxu0
    %2682 = vmatpush.bf16.msra.mxu0 %v2460
    %2683 = vmatpush.bf16.msra.mxu0 %v2457
    %2684 = vmatpush.bf16.msra.mxu0 %v2454
    %2685 = vmatpush.bf16.msra.mxu0 %v2451
    %2686 = vmatpush.bf16.msra.mxu0 %v2448
    %2687 = vmatpush.bf16.msra.mxu0 %v2445
    %2688 = vmatpush.bf16.msra.mxu0 %v2442
    %2689 = vmatpush.bf16.msra.mxu0 %v2439
    %2690 = vmatmul.bf16.gmra.mxu0 %v1973
    %v2691 = vpop.f32.mrf.mxu0
    %v2692 = vadd.f32 %v2113, %v2691
    %v2693 = vpop.f32.mrf.mxu0
    %2694 = vdwg.mxu0
    %2695 = vmatpush.bf16.msra.mxu0 %v2484
    %2696 = vmatpush.bf16.msra.mxu0 %v2481
    %2697 = vmatpush.bf16.msra.mxu0 %v2478
    %2698 = vmatpush.bf16.msra.mxu0 %v2475
    %2699 = vmatpush.bf16.msra.mxu0 %v2472
    %2700 = vmatpush.bf16.msra.mxu0 %v2469
    %2701 = vmatpush.bf16.msra.mxu0 %v2466
    %2702 = vmatpush.bf16.msra.mxu0 %v2463
    %2703 = vmatmul.bf16.gmra.mxu0 %v1974
    %v2704 = vpop.f32.mrf.mxu0
    %v2705 = vadd.f32 %v2692, %v2704
    %v2706 = vpop.f32.mrf.mxu0
    %2707 = vdwg.mxu0
    %2708 = vmatpush.bf16.msra.mxu0 %v2508
    %2709 = vmatpush.bf16.msra.mxu0 %v2505
    %2710 = vmatpush.bf16.msra.mxu0 %v2502
    %2711 = vmatpush.bf16.msra.mxu0 %v2499
    %2712 = vmatpush.bf16.msra.mxu0 %v2496
    %2713 = vmatpush.bf16.msra.mxu0 %v2493
    %2714 = vmatpush.bf16.msra.mxu0 %v2490
    %2715 = vmatpush.bf16.msra.mxu0 %v2487
    %2716 = vmatmul.bf16.gmra.mxu0 %v1975
    %v2717 = vpop.f32.mrf.mxu0
    %v2718 = vadd.f32 %v2705, %v2717
    %v2719 = vpop.f32.mrf.mxu0
    %2720 = vdwg.mxu0
    %2721 = vmatpush.bf16.msra.mxu0 %v2532
    %2722 = vmatpush.bf16.msra.mxu0 %v2529
    %2723 = vmatpush.bf16.msra.mxu0 %v2526
    %2724 = vmatpush.bf16.msra.mxu0 %v2523
    %2725 = vmatpush.bf16.msra.mxu0 %v2520
    %2726 = vmatpush.bf16.msra.mxu0 %v2517
    %2727 = vmatpush.bf16.msra.mxu0 %v2514
    %2728 = vmatpush.bf16.msra.mxu0 %v2511
    %2729 = vmatmul.bf16.gmra.mxu0 %v1976
    %v2730 = vpop.f32.mrf.mxu0
    %v2731 = vadd.f32 %v2718, %v2730
    %v2732 = vpop.f32.mrf.mxu0
    %2733 = vdwg.mxu0
    %2734 = vmatpush.bf16.msra.mxu0 %v2461
    %2735 = vmatpush.bf16.msra.mxu0 %v2458
    %2736 = vmatpush.bf16.msra.mxu0 %v2455
    %2737 = vmatpush.bf16.msra.mxu0 %v2452
    %2738 = vmatpush.bf16.msra.mxu0 %v2449
    %2739 = vmatpush.bf16.msra.mxu0 %v2446
    %2740 = vmatpush.bf16.msra.mxu0 %v2443
    %2741 = vmatpush.bf16.msra.mxu0 %v2440
    %2742 = vmatmul.bf16.gmra.mxu0 %v1973
    %v2743 = vpop.f32.mrf.mxu0
    %v2744 = vadd.f32 %v2114, %v2743
    %v2745 = vpop.f32.mrf.mxu0
    %2746 = vdwg.mxu0
    %2747 = vmatpush.bf16.msra.mxu0 %v2485
    %2748 = vmatpush.bf16.msra.mxu0 %v2482
    %2749 = vmatpush.bf16.msra.mxu0 %v2479
    %2750 = vmatpush.bf16.msra.mxu0 %v2476
    %2751 = vmatpush.bf16.msra.mxu0 %v2473
    %2752 = vmatpush.bf16.msra.mxu0 %v2470
    %2753 = vmatpush.bf16.msra.mxu0 %v2467
    %2754 = vmatpush.bf16.msra.mxu0 %v2464
    %2755 = vmatmul.bf16.gmra.mxu0 %v1974
    %v2756 = vpop.f32.mrf.mxu0
    %v2757 = vadd.f32 %v2744, %v2756
    %v2758 = vpop.f32.mrf.mxu0
    %2759 = vdwg.mxu0
    %2760 = vmatpush.bf16.msra.mxu0 %v2509
    %2761 = vmatpush.bf16.msra.mxu0 %v2506
    %2762 = vmatpush.bf16.msra.mxu0 %v2503
    %2763 = vmatpush.bf16.msra.mxu0 %v2500
    %2764 = vmatpush.bf16.msra.mxu0 %v2497
    %2765 = vmatpush.bf16.msra.mxu0 %v2494
    %2766 = vmatpush.bf16.msra.mxu0 %v2491
    %2767 = vmatpush.bf16.msra.mxu0 %v2488
    %2768 = vmatmul.bf16.gmra.mxu0 %v1975
    %v2769 = vpop.f32.mrf.mxu0
    %v2770 = vadd.f32 %v2757, %v2769
    %v2771 = vpop.f32.mrf.mxu0
    %2772 = vdwg.mxu0
    %2773 = vmatpush.bf16.msra.mxu0 %v2533
    %2774 = vmatpush.bf16.msra.mxu0 %v2530
    %2775 = vmatpush.bf16.msra.mxu0 %v2527
    %2776 = vmatpush.bf16.msra.mxu0 %v2524
    %2777 = vmatpush.bf16.msra.mxu0 %v2521
    %2778 = vmatpush.bf16.msra.mxu0 %v2518
    %2779 = vmatpush.bf16.msra.mxu0 %v2515
    %2780 = vmatpush.bf16.msra.mxu0 %v2512
    %2781 = vmatmul.bf16.gmra.mxu0 %v1976
    %v2782 = vpop.f32.mrf.mxu0
    %v2783 = vadd.f32 %v2770, %v2782
    %v2784 = vpop.f32.mrf.mxu0
    %2785 = vdwg.mxu0
    %v2786 = vmul.f32 %v2679, 0.01
    %v2787 = vmul.f32 %v2731, 0.01
    %v2788 = vmul.f32 %v2783, 0.01
    %v2789 = vmax.f32 %v2679, %v2786
    %v2790 = vmax.f32 %v2731, %v2787
    %v2791 = vmax.f32 %v2783, %v2788
    %v2792 = vrot.slane %v2789, 4
    %v2793 = vadd.f32 %v2789, %v2792
    %v2794 = vrot.slane %v2793, 2
    %v2795 = vadd.f32 %v2793, %v2794
    %v2796 = vrot.slane %v2795, 1
    %v2797 = vadd.f32 %v2795, %v2796
    %v2798 = vrot.slane %v2790, 4
    %v2799 = vadd.f32 %v2790, %v2798
    %v2800 = vrot.slane %v2799, 2
    %v2801 = vadd.f32 %v2799, %v2800
    %v2802 = vrot.slane %v2801, 1
    %v2803 = vadd.f32 %v2801, %v2802
    %v2804 = vrot.slane %v2791, 4
    %v2805 = vadd.f32 %v2791, %v2804
    %v2806 = vrot.slane %v2805, 2
    %v2807 = vadd.f32 %v2805, %v2806
    %v2808 = vrot.slane %v2807, 1
    %v2809 = vadd.f32 %v2807, %v2808
    %v2810 = vmul.f32 %v2797, %v650
    %v2811 = vmul.f32 %v2803, %v650
    %v2812 = vmul.f32 %v2809, %v650
    %v2813 = vmul.f32 %v2789, %v2789
    %v2814 = vmul.f32 %v2790, %v2790
    %v2815 = vmul.f32 %v2791, %v2791
    %v2816 = vrot.slane %v2813, 4
    %v2817 = vadd.f32 %v2813, %v2816
    %v2818 = vrot.slane %v2817, 2
    %v2819 = vadd.f32 %v2817, %v2818
    %v2820 = vrot.slane %v2819, 1
    %v2821 = vadd.f32 %v2819, %v2820
    %v2822 = vrot.slane %v2814, 4
    %v2823 = vadd.f32 %v2814, %v2822
    %v2824 = vrot.slane %v2823, 2
    %v2825 = vadd.f32 %v2823, %v2824
    %v2826 = vrot.slane %v2825, 1
    %v2827 = vadd.f32 %v2825, %v2826
    %v2828 = vrot.slane %v2815, 4
    %v2829 = vadd.f32 %v2815, %v2828
    %v2830 = vrot.slane %v2829, 2
    %v2831 = vadd.f32 %v2829, %v2830
    %v2832 = vrot.slane %v2831, 1
    %v2833 = vadd.f32 %v2831, %v2832
    %v2834 = vmul.f32 %v2821, %v650
    %v2835 = vmul.f32 %v2827, %v650
    %v2836 = vmul.f32 %v2833, %v650
    %v2837 = vmul.f32 %v2810, %v2810
    %v2838 = vmul.f32 %v2811, %v2811
    %v2839 = vmul.f32 %v2812, %v2812
    %v2840 = vsub.f32 %v2834, %v2837
    %v2841 = vsub.f32 %v2835, %v2838
    %v2842 = vsub.f32 %v2836, %v2839
    %v2843 = vmax.f32 %v2840, 0.0
    %v2844 = vmax.f32 %v2841, 0.0
    %v2845 = vmax.f32 %v2842, 0.0
    %v2846 = vadd.f32 %v2843, 1e-05
    %v2847 = vadd.f32 %v2844, 1e-05
    %v2848 = vadd.f32 %v2845, 1e-05
    %v2849 = vrsqrt.pop %v2846
    %v2850 = vmul.f32 %v2849, %v2846
    %v2851 = vmul.f32 %v2850, %v2849
    %v2852 = vmul.f32 0.5, %v2851
    %v2853 = vsub.f32 1.5, %v2852
    %v2854 = vmul.f32 %v2849, %v2853
    %vm2855 = vweird.f32 %v2846
    %vm2856 = vweird.f32 %v2849
    %vm2857 = vmor %vm2855, %vm2856
    %v2858 = vsel %vm2857, %v2849, %v2854
    %v2859 = vrsqrt.pop %v2847
    %v2860 = vmul.f32 %v2859, %v2847
    %v2861 = vmul.f32 %v2860, %v2859
    %v2862 = vmul.f32 0.5, %v2861
    %v2863 = vsub.f32 1.5, %v2862
    %v2864 = vmul.f32 %v2859, %v2863
    %vm2865 = vweird.f32 %v2847
    %vm2866 = vweird.f32 %v2859
    %vm2867 = vmor %vm2865, %vm2866
    %v2868 = vsel %vm2867, %v2859, %v2864
    %v2869 = vrsqrt.pop %v2848
    %v2870 = vmul.f32 %v2869, %v2848
    %v2871 = vmul.f32 %v2870, %v2869
    %v2872 = vmul.f32 0.5, %v2871
    %v2873 = vsub.f32 1.5, %v2872
    %v2874 = vmul.f32 %v2869, %v2873
    %vm2875 = vweird.f32 %v2848
    %vm2876 = vweird.f32 %v2869
    %vm2877 = vmor %vm2875, %vm2876
    %v2878 = vsel %vm2877, %v2869, %v2874
    %v2882 = vrot.slane %v2868, 7
    %v2883 = vrot.slane %v2878, 6
    %v2884 = vsel %vm750, %v2858, %v2882
    %v2885 = vsel %vm754, %v2884, %v2883
    %v2887 = vmul.f32 %v2108, %v2885
    %v2889 = vperm.slane %v2887, 0
    %v2890 = vperm.slane %v2887, 1
    %v2891 = vperm.slane %v2887, 2
    %v2895 = vmul.f32 %v2810, %v2889
    %v2896 = vmul.f32 %v2811, %v2890
    %v2897 = vmul.f32 %v2812, %v2891
    %v2901 = vrot.slane %v2896, 7
    %v2902 = vrot.slane %v2897, 6
    %v2903 = vsel %vm750, %v2895, %v2901
    %v2904 = vsel %vm754, %v2903, %v2902
    %v2906 = vsub.f32 %v2110, %v2904
    %v2907 = vmul.f32 %v2789, %v2889
    %v2908 = vmul.f32 %v2790, %v2890
    %v2909 = vmul.f32 %v2791, %v2891
    %v2911 = vperm.slane %v2906, 0
    %v2912 = vperm.slane %v2906, 1
    %v2913 = vperm.slane %v2906, 2
    %v2917 = vadd.f32 %v2907, %v2911
    %v2918 = vadd.f32 %v2908, %v2912
    %v2919 = vadd.f32 %v2909, %v2913
    %v2920 = vpack.c.bf16 %v2917, %v2917
    %v2921 = vpack.c.bf16 %v2918, %v2918
    %v2922 = vpack.c.bf16 %v2919, %v2919
    %v2923 = vld [vmem:[#allocation7] sm:$0xff]
    %v2924 = vld [vmem:[#allocation7 + $0x8] sm:$0xff]
    %v2925 = vld [vmem:[#allocation7 + $0x10] sm:$0xff]
    %v2926 = vld [vmem:[#allocation7 + $0x18] sm:$0xff]
    %v2927 = vld [vmem:[#allocation7 + $0x20] sm:$0xff]
    %v2928 = vld [vmem:[#allocation7 + $0x28] sm:$0xff]
    %v2929 = vld [vmem:[#allocation7 + $0x30] sm:$0xff]
    %v2930 = vld [vmem:[#allocation7 + $0x38] sm:$0xff]
    %v2931 = vld [vmem:[#allocation7 + $0x40] sm:$0xff]
    %v2932 = vld [vmem:[#allocation7 + $0x48] sm:$0xff]
    %v2933 = vld [vmem:[#allocation7 + $0x50] sm:$0xff]
    %v2934 = vld [vmem:[#allocation7 + $0x58] sm:$0xff]
    %v2935 = vld [vmem:[#allocation7 + $0x60] sm:$0xff]
    %v2936 = vld [vmem:[#allocation7 + $0x68] sm:$0xff]
    %v2937 = vld [vmem:[#allocation7 + $0x70] sm:$0xff]
    %v2938 = vld [vmem:[#allocation7 + $0x78] sm:$0xff]
    %v2939 = vld [vmem:[#allocation7 + $0x80] sm:$0xff]
    %v2940 = vld [vmem:[#allocation7 + $0x88] sm:$0xff]
    %v2941 = vld [vmem:[#allocation7 + $0x90] sm:$0xff]
    %v2942 = vld [vmem:[#allocation7 + $0x98] sm:$0xff]
    %v2943 = vld [vmem:[#allocation7 + $0xa0] sm:$0xff]
    %v2944 = vld [vmem:[#allocation7 + $0xa8] sm:$0xff]
    %v2945 = vld [vmem:[#allocation7 + $0xb0] sm:$0xff]
    %v2946 = vld [vmem:[#allocation7 + $0xb8] sm:$0xff]
    %v2947 = vld [vmem:[#allocation7 + $0xc0] sm:$0xff]
    %v2948 = vld [vmem:[#allocation7 + $0xc8] sm:$0xff]
    %v2949 = vld [vmem:[#allocation7 + $0xd0] sm:$0xff]
    %v2950 = vld [vmem:[#allocation7 + $0xd8] sm:$0xff]
    %v2951 = vld [vmem:[#allocation7 + $0xe0] sm:$0xff]
    %v2952 = vld [vmem:[#allocation7 + $0xe8] sm:$0xff]
    %v2953 = vld [vmem:[#allocation7 + $0xf0] sm:$0xff]
    %v2954 = vld [vmem:[#allocation7 + $0xf8] sm:$0xff]
    %v2955 = vld [vmem:[#allocation7 + $0x100] sm:$0xff]
    %v2956 = vld [vmem:[#allocation7 + $0x108] sm:$0xff]
    %v2957 = vld [vmem:[#allocation7 + $0x110] sm:$0xff]
    %v2958 = vld [vmem:[#allocation7 + $0x118] sm:$0xff]
    %v2959 = vld [vmem:[#allocation7 + $0x120] sm:$0xff]
    %v2960 = vld [vmem:[#allocation7 + $0x128] sm:$0xff]
    %v2961 = vld [vmem:[#allocation7 + $0x130] sm:$0xff]
    %v2962 = vld [vmem:[#allocation7 + $0x138] sm:$0xff]
    %v2963 = vld [vmem:[#allocation7 + $0x140] sm:$0xff]
    %v2964 = vld [vmem:[#allocation7 + $0x148] sm:$0xff]
    %v2965 = vld [vmem:[#allocation7 + $0x150] sm:$0xff]
    %v2966 = vld [vmem:[#allocation7 + $0x158] sm:$0xff]
    %v2967 = vld [vmem:[#allocation7 + $0x160] sm:$0xff]
    %v2968 = vld [vmem:[#allocation7 + $0x168] sm:$0xff]
    %v2969 = vld [vmem:[#allocation7 + $0x170] sm:$0xff]
    %v2970 = vld [vmem:[#allocation7 + $0x178] sm:$0xff]
    %s2971 = scalar_lea.vmem [#allocation10], 3
    %v2972 = vld [vmem:[%s2971] ss:$8 sm:$0x3]
    %s2973 = scalar_lea.vmem [#allocation10], 33
    %v2974 = vld [vmem:[%s2973] ss:$8 sm:$0x3]
    %s2975 = scalar_lea.vmem [#allocation10], 39
    %v2976 = vld [vmem:[%s2975] ss:$8 sm:$0x3]
    %v2978 = vperm.slane %v2972, 0
    %v2979 = vperm.slane %v2972, 1
    %v3030 = vunpack.c.l.b16 %v2923
    %v3031 = vunpack.c.h.b16 %v2923
    %v3032 = vunpack.c.l.b16 %v2924
    %v3033 = vunpack.c.h.b16 %v2924
    %v3034 = vunpack.c.l.b16 %v2925
    %v3035 = vunpack.c.h.b16 %v2925
    %v3036 = vunpack.c.l.b16 %v2926
    %v3037 = vunpack.c.h.b16 %v2926
    %v3038 = vunpack.c.l.b16 %v2927
    %v3039 = vunpack.c.h.b16 %v2927
    %v3040 = vunpack.c.l.b16 %v2928
    %v3041 = vunpack.c.h.b16 %v2928
    %v3042 = vunpack.c.l.b16 %v2929
    %v3043 = vunpack.c.h.b16 %v2929
    %v3044 = vunpack.c.l.b16 %v2930
    %v3045 = vunpack.c.h.b16 %v2930
    %v3046 = vunpack.c.l.b16 %v2931
    %v3047 = vunpack.c.h.b16 %v2931
    %v3048 = vunpack.c.l.b16 %v2932
    %v3049 = vunpack.c.h.b16 %v2932
    %v3050 = vunpack.c.l.b16 %v2933
    %v3051 = vunpack.c.h.b16 %v2933
    %v3052 = vunpack.c.l.b16 %v2934
    %v3053 = vunpack.c.h.b16 %v2934
    %v3054 = vunpack.c.l.b16 %v2935
    %v3055 = vunpack.c.h.b16 %v2935
    %v3056 = vunpack.c.l.b16 %v2936
    %v3057 = vunpack.c.h.b16 %v2936
    %v3058 = vunpack.c.l.b16 %v2937
    %v3059 = vunpack.c.h.b16 %v2937
    %v3060 = vunpack.c.l.b16 %v2938
    %v3061 = vunpack.c.h.b16 %v2938
    %v3062 = vunpack.c.l.b16 %v2939
    %v3063 = vunpack.c.h.b16 %v2939
    %v3064 = vunpack.c.l.b16 %v2940
    %v3065 = vunpack.c.h.b16 %v2940
    %v3066 = vunpack.c.l.b16 %v2941
    %v3067 = vunpack.c.h.b16 %v2941
    %v3068 = vunpack.c.l.b16 %v2942
    %v3069 = vunpack.c.h.b16 %v2942
    %v3070 = vunpack.c.l.b16 %v2943
    %v3071 = vunpack.c.h.b16 %v2943
    %v3072 = vunpack.c.l.b16 %v2944
    %v3073 = vunpack.c.h.b16 %v2944
    %v3074 = vunpack.c.l.b16 %v2945
    %v3075 = vunpack.c.h.b16 %v2945
    %v3076 = vunpack.c.l.b16 %v2946
    %v3077 = vunpack.c.h.b16 %v2946
    %v3078 = vunpack.c.l.b16 %v2947
    %v3079 = vunpack.c.h.b16 %v2947
    %v3080 = vunpack.c.l.b16 %v2948
    %v3081 = vunpack.c.h.b16 %v2948
    %v3082 = vunpack.c.l.b16 %v2949
    %v3083 = vunpack.c.h.b16 %v2949
    %v3084 = vunpack.c.l.b16 %v2950
    %v3085 = vunpack.c.h.b16 %v2950
    %v3086 = vunpack.c.l.b16 %v2951
    %v3087 = vunpack.c.h.b16 %v2951
    %v3088 = vunpack.c.l.b16 %v2952
    %v3089 = vunpack.c.h.b16 %v2952
    %v3090 = vunpack.c.l.b16 %v2953
    %v3091 = vunpack.c.h.b16 %v2953
    %v3092 = vunpack.c.l.b16 %v2954
    %v3093 = vunpack.c.h.b16 %v2954
    %v3094 = vunpack.c.l.b16 %v2955
    %v3095 = vunpack.c.h.b16 %v2955
    %v3096 = vunpack.c.l.b16 %v2956
    %v3097 = vunpack.c.h.b16 %v2956
    %v3098 = vunpack.c.l.b16 %v2957
    %v3099 = vunpack.c.h.b16 %v2957
    %v3100 = vunpack.c.l.b16 %v2958
    %v3101 = vunpack.c.h.b16 %v2958
    %v3102 = vunpack.c.l.b16 %v2959
    %v3103 = vunpack.c.h.b16 %v2959
    %v3104 = vunpack.c.l.b16 %v2960
    %v3105 = vunpack.c.h.b16 %v2960
    %v3106 = vunpack.c.l.b16 %v2961
    %v3107 = vunpack.c.h.b16 %v2961
    %v3108 = vunpack.c.l.b16 %v2962
    %v3109 = vunpack.c.h.b16 %v2962
    %v3110 = vunpack.c.l.b16 %v2963
    %v3111 = vunpack.c.h.b16 %v2963
    %v3112 = vunpack.c.l.b16 %v2964
    %v3113 = vunpack.c.h.b16 %v2964
    %v3114 = vunpack.c.l.b16 %v2965
    %v3115 = vunpack.c.h.b16 %v2965
    %v3116 = vunpack.c.l.b16 %v2966
    %v3117 = vunpack.c.h.b16 %v2966
    %v3118 = vunpack.c.l.b16 %v2967
    %v3119 = vunpack.c.h.b16 %v2967
    %v3120 = vunpack.c.l.b16 %v2968
    %v3121 = vunpack.c.h.b16 %v2968
    %v3122 = vunpack.c.l.b16 %v2969
    %v3123 = vunpack.c.h.b16 %v2969
    %v3124 = vunpack.c.l.b16 %v2970
    %v3125 = vunpack.c.h.b16 %v2970
    %v3126 = vpack.c.b16 %v3032, %v3030
    %v3127 = vpack.c.b16 %v3033, %v3031
    %v3128 = vpack.c.b16 %v3036, %v3034
    %v3129 = vpack.c.b16 %v3037, %v3035
    %v3130 = vpack.c.b16 %v3040, %v3038
    %v3131 = vpack.c.b16 %v3041, %v3039
    %v3132 = vpack.c.b16 %v3044, %v3042
    %v3133 = vpack.c.b16 %v3045, %v3043
    %v3134 = vpack.c.b16 %v3048, %v3046
    %v3135 = vpack.c.b16 %v3049, %v3047
    %v3136 = vpack.c.b16 %v3052, %v3050
    %v3137 = vpack.c.b16 %v3053, %v3051
    %v3138 = vpack.c.b16 %v3056, %v3054
    %v3139 = vpack.c.b16 %v3057, %v3055
    %v3140 = vpack.c.b16 %v3060, %v3058
    %v3141 = vpack.c.b16 %v3061, %v3059
    %v3142 = vpack.c.b16 %v3064, %v3062
    %v3143 = vpack.c.b16 %v3065, %v3063
    %v3144 = vpack.c.b16 %v3068, %v3066
    %v3145 = vpack.c.b16 %v3069, %v3067
    %v3146 = vpack.c.b16 %v3072, %v3070
    %v3147 = vpack.c.b16 %v3073, %v3071
    %v3148 = vpack.c.b16 %v3076, %v3074
    %v3149 = vpack.c.b16 %v3077, %v3075
    %v3150 = vpack.c.b16 %v3080, %v3078
    %v3151 = vpack.c.b16 %v3081, %v3079
    %v3152 = vpack.c.b16 %v3084, %v3082
    %v3153 = vpack.c.b16 %v3085, %v3083
    %v3154 = vpack.c.b16 %v3088, %v3086
    %v3155 = vpack.c.b16 %v3089, %v3087
    %v3156 = vpack.c.b16 %v3092, %v3090
    %v3157 = vpack.c.b16 %v3093, %v3091
    %v3158 = vpack.c.b16 %v3096, %v3094
    %v3159 = vpack.c.b16 %v3097, %v3095
    %v3160 = vpack.c.b16 %v3100, %v3098
    %v3161 = vpack.c.b16 %v3101, %v3099
    %v3162 = vpack.c.b16 %v3104, %v3102
    %v3163 = vpack.c.b16 %v3105, %v3103
    %v3164 = vpack.c.b16 %v3108, %v3106
    %v3165 = vpack.c.b16 %v3109, %v3107
    %v3166 = vpack.c.b16 %v3112, %v3110
    %v3167 = vpack.c.b16 %v3113, %v3111
    %v3168 = vpack.c.b16 %v3116, %v3114
    %v3169 = vpack.c.b16 %v3117, %v3115
    %v3170 = vpack.c.b16 %v3120, %v3118
    %v3171 = vpack.c.b16 %v3121, %v3119
    %v3172 = vpack.c.b16 %v3124, %v3122
    %v3173 = vpack.c.b16 %v3125, %v3123
    %3222 = vmatpush.bf16.msra.mxu0 %v3140
    %3223 = vmatpush.bf16.msra.mxu0 %v3138
    %3224 = vmatpush.bf16.msra.mxu0 %v3136
    %3225 = vmatpush.bf16.msra.mxu0 %v3134
    %3226 = vmatpush.bf16.msra.mxu0 %v3132
    %3227 = vmatpush.bf16.msra.mxu0 %v3130
    %3228 = vmatpush.bf16.msra.mxu0 %v3128
    %3229 = vmatpush.bf16.msra.mxu0 %v3126
    %3230 = vmatmul.bf16.gmra.mxu0 %v2920
    %v3231 = vpop.f32.mrf.mxu0
    %v3232 = vadd.f32 %v2978, %v3231
    %v3233 = vpop.f32.mrf.mxu0
    %3234 = vdwg.mxu0
    %3235 = vmatpush.bf16.msra.mxu0 %v3156
    %3236 = vmatpush.bf16.msra.mxu0 %v3154
    %3237 = vmatpush.bf16.msra.mxu0 %v3152
    %3238 = vmatpush.bf16.msra.mxu0 %v3150
    %3239 = vmatpush.bf16.msra.mxu0 %v3148
    %3240 = vmatpush.bf16.msra.mxu0 %v3146
    %3241 = vmatpush.bf16.msra.mxu0 %v3144
    %3242 = vmatpush.bf16.msra.mxu0 %v3142
    %3243 = vmatmul.bf16.gmra.mxu0 %v2921
    %v3244 = vpop.f32.mrf.mxu0
    %v3245 = vadd.f32 %v3232, %v3244
    %v3246 = vpop.f32.mrf.mxu0
    %3247 = vdwg.mxu0
    %3248 = vmatpush.bf16.msra.mxu0 %v3172
    %3249 = vmatpush.bf16.msra.mxu0 %v3170
    %3250 = vmatpush.bf16.msra.mxu0 %v3168
    %3251 = vmatpush.bf16.msra.mxu0 %v3166
    %3252 = vmatpush.bf16.msra.mxu0 %v3164
    %3253 = vmatpush.bf16.msra.mxu0 %v3162
    %3254 = vmatpush.bf16.msra.mxu0 %v3160
    %3255 = vmatpush.bf16.msra.mxu0 %v3158
    %3256 = vmatmul.bf16.gmra.mxu0 %v2922
    %v3257 = vpop.f32.mrf.mxu0
    %v3258 = vadd.f32 %v3245, %v3257
    %v3259 = vpop.f32.mrf.mxu0
    %3260 = vdwg.mxu0
    %3261 = vmatpush.bf16.msra.mxu0 %v3141
    %3262 = vmatpush.bf16.msra.mxu0 %v3139
    %3263 = vmatpush.bf16.msra.mxu0 %v3137
    %3264 = vmatpush.bf16.msra.mxu0 %v3135
    %3265 = vmatpush.bf16.msra.mxu0 %v3133
    %3266 = vmatpush.bf16.msra.mxu0 %v3131
    %3267 = vmatpush.bf16.msra.mxu0 %v3129
    %3268 = vmatpush.bf16.msra.mxu0 %v3127
    %3269 = vmatmul.bf16.gmra.mxu0 %v2920
    %v3270 = vpop.f32.mrf.mxu0
    %v3271 = vadd.f32 %v2979, %v3270
    %v3272 = vpop.f32.mrf.mxu0
    %3273 = vdwg.mxu0
    %3274 = vmatpush.bf16.msra.mxu0 %v3157
    %3275 = vmatpush.bf16.msra.mxu0 %v3155
    %3276 = vmatpush.bf16.msra.mxu0 %v3153
    %3277 = vmatpush.bf16.msra.mxu0 %v3151
    %3278 = vmatpush.bf16.msra.mxu0 %v3149
    %3279 = vmatpush.bf16.msra.mxu0 %v3147
    %3280 = vmatpush.bf16.msra.mxu0 %v3145
    %3281 = vmatpush.bf16.msra.mxu0 %v3143
    %3282 = vmatmul.bf16.gmra.mxu0 %v2921
    %v3283 = vpop.f32.mrf.mxu0
    %v3284 = vadd.f32 %v3271, %v3283
    %v3285 = vpop.f32.mrf.mxu0
    %3286 = vdwg.mxu0
    %3287 = vmatpush.bf16.msra.mxu0 %v3173
    %3288 = vmatpush.bf16.msra.mxu0 %v3171
    %3289 = vmatpush.bf16.msra.mxu0 %v3169
    %3290 = vmatpush.bf16.msra.mxu0 %v3167
    %3291 = vmatpush.bf16.msra.mxu0 %v3165
    %3292 = vmatpush.bf16.msra.mxu0 %v3163
    %3293 = vmatpush.bf16.msra.mxu0 %v3161
    %3294 = vmatpush.bf16.msra.mxu0 %v3159
    %3295 = vmatmul.bf16.gmra.mxu0 %v2922
    %v3296 = vpop.f32.mrf.mxu0
    %v3297 = vadd.f32 %v3284, %v3296
    %v3298 = vpop.f32.mrf.mxu0
    %3299 = vdwg.mxu0
    %v3300 = vmul.f32 %v3258, 0.01
    %v3301 = vmul.f32 %v3297, 0.01
    %v3302 = vmax.f32 %v3258, %v3300
    %v3303 = vmax.f32 %v3297, %v3301
    %v3304 = vrot.slane %v3302, 4
    %v3305 = vadd.f32 %v3302, %v3304
    %v3306 = vrot.slane %v3305, 2
    %v3307 = vadd.f32 %v3305, %v3306
    %v3308 = vrot.slane %v3307, 1
    %v3309 = vadd.f32 %v3307, %v3308
    %v3310 = vrot.slane %v3303, 4
    %v3311 = vadd.f32 %v3303, %v3310
    %v3312 = vrot.slane %v3311, 2
    %v3313 = vadd.f32 %v3311, %v3312
    %v3314 = vrot.slane %v3313, 1
    %v3315 = vadd.f32 %v3313, %v3314
    %v3316 = vmul.f32 %v3309, %v650
    %v3317 = vmul.f32 %v3315, %v650
    %v3318 = vmul.f32 %v3302, %v3302
    %v3319 = vmul.f32 %v3303, %v3303
    %v3320 = vrot.slane %v3318, 4
    %v3321 = vadd.f32 %v3318, %v3320
    %v3322 = vrot.slane %v3321, 2
    %v3323 = vadd.f32 %v3321, %v3322
    %v3324 = vrot.slane %v3323, 1
    %v3325 = vadd.f32 %v3323, %v3324
    %v3326 = vrot.slane %v3319, 4
    %v3327 = vadd.f32 %v3319, %v3326
    %v3328 = vrot.slane %v3327, 2
    %v3329 = vadd.f32 %v3327, %v3328
    %v3330 = vrot.slane %v3329, 1
    %v3331 = vadd.f32 %v3329, %v3330
    %v3332 = vmul.f32 %v3325, %v650
    %v3333 = vmul.f32 %v3331, %v650
    %v3334 = vmul.f32 %v3316, %v3316
    %v3335 = vmul.f32 %v3317, %v3317
    %v3336 = vsub.f32 %v3332, %v3334
    %v3337 = vsub.f32 %v3333, %v3335
    %v3338 = vmax.f32 %v3336, 0.0
    %v3339 = vmax.f32 %v3337, 0.0
    %v3340 = vadd.f32 %v3338, 1e-05
    %v3341 = vadd.f32 %v3339, 1e-05
    %v3342 = vrsqrt.pop %v3340
    %v3343 = vmul.f32 %v3342, %v3340
    %v3344 = vmul.f32 %v3343, %v3342
    %v3345 = vmul.f32 0.5, %v3344
    %v3346 = vsub.f32 1.5, %v3345
    %v3347 = vmul.f32 %v3342, %v3346
    %vm3348 = vweird.f32 %v3340
    %vm3349 = vweird.f32 %v3342
    %vm3350 = vmor %vm3348, %vm3349
    %v3351 = vsel %vm3350, %v3342, %v3347
    %v3352 = vrsqrt.pop %v3341
    %v3353 = vmul.f32 %v3352, %v3341
    %v3354 = vmul.f32 %v3353, %v3352
    %v3355 = vmul.f32 0.5, %v3354
    %v3356 = vsub.f32 1.5, %v3355
    %v3357 = vmul.f32 %v3352, %v3356
    %vm3358 = vweird.f32 %v3341
    %vm3359 = vweird.f32 %v3352
    %vm3360 = vmor %vm3358, %vm3359
    %v3361 = vsel %vm3360, %v3352, %v3357
    %v3364 = vrot.slane %v3361, 7
    %v3365 = vsel %vm750, %v3351, %v3364
    %v3367 = vmul.f32 %v2974, %v3365
    %v3369 = vperm.slane %v3367, 0
    %v3370 = vperm.slane %v3367, 1
    %v3373 = vmul.f32 %v3316, %v3369
    %v3374 = vmul.f32 %v3317, %v3370
    %v3377 = vrot.slane %v3374, 7
    %v3378 = vsel %vm750, %v3373, %v3377
    %v3380 = vsub.f32 %v2976, %v3378
    %v3381 = vmul.f32 %v3302, %v3369
    %v3382 = vmul.f32 %v3303, %v3370
    %v3384 = vperm.slane %v3380, 0
    %v3385 = vperm.slane %v3380, 1
    %v3388 = vadd.f32 %v3381, %v3384
    %v3389 = vadd.f32 %v3382, %v3385
    %v3390 = vpack.c.bf16 %v3388, %v3388
    %v3391 = vpack.c.bf16 %v3389, %v3389
    %v3392 = vld [vmem:[#allocation8] sm:$0xf]
    %v3393 = vld [vmem:[#allocation8 + $0x4] sm:$0xf]
    %v3394 = vld [vmem:[#allocation8 + $0x8] sm:$0xf]
    %v3395 = vld [vmem:[#allocation8 + $0xc] sm:$0xf]
    %v3396 = vld [vmem:[#allocation8 + $0x10] sm:$0xf]
    %v3397 = vld [vmem:[#allocation8 + $0x14] sm:$0xf]
    %v3398 = vld [vmem:[#allocation8 + $0x18] sm:$0xf]
    %v3399 = vld [vmem:[#allocation8 + $0x1c] sm:$0xf]
    %v3400 = vld [vmem:[#allocation8 + $0x20] sm:$0xf]
    %v3401 = vld [vmem:[#allocation8 + $0x24] sm:$0xf]
    %v3402 = vld [vmem:[#allocation8 + $0x28] sm:$0xf]
    %v3403 = vld [vmem:[#allocation8 + $0x2c] sm:$0xf]
    %v3404 = vld [vmem:[#allocation8 + $0x30] sm:$0xf]
    %v3405 = vld [vmem:[#allocation8 + $0x34] sm:$0xf]
    %v3406 = vld [vmem:[#allocation8 + $0x38] sm:$0xf]
    %v3407 = vld [vmem:[#allocation8 + $0x3c] sm:$0xf]
    %v3408 = vld [vmem:[#allocation8 + $0x40] sm:$0xf]
    %v3409 = vld [vmem:[#allocation8 + $0x44] sm:$0xf]
    %v3410 = vld [vmem:[#allocation8 + $0x48] sm:$0xf]
    %v3411 = vld [vmem:[#allocation8 + $0x4c] sm:$0xf]
    %v3412 = vld [vmem:[#allocation8 + $0x50] sm:$0xf]
    %v3413 = vld [vmem:[#allocation8 + $0x54] sm:$0xf]
    %v3414 = vld [vmem:[#allocation8 + $0x58] sm:$0xf]
    %v3415 = vld [vmem:[#allocation8 + $0x5c] sm:$0xf]
    %v3416 = vld [vmem:[#allocation8 + $0x60] sm:$0xf]
    %v3417 = vld [vmem:[#allocation8 + $0x64] sm:$0xf]
    %v3418 = vld [vmem:[#allocation8 + $0x68] sm:$0xf]
    %v3419 = vld [vmem:[#allocation8 + $0x6c] sm:$0xf]
    %v3420 = vld [vmem:[#allocation8 + $0x70] sm:$0xf]
    %v3421 = vld [vmem:[#allocation8 + $0x74] sm:$0xf]
    %v3422 = vld [vmem:[#allocation8 + $0x78] sm:$0xf]
    %v3423 = vld [vmem:[#allocation8 + $0x7c] sm:$0xf]
    %v3424 = vld [vmem:[#allocation10 + $0x4] ss:$0 sm:$0xff]
    %v3425 = vld [vmem:[#allocation10 + $0x22] ss:$0 sm:$0xff]
    %v3426 = vld [vmem:[#allocation10 + $0x40] ss:$0 sm:$0xff]
    %v3459 = vunpack.c.l.b16 %v3392
    %v3460 = vunpack.c.l.b16 %v3393
    %v3461 = vunpack.c.l.b16 %v3394
    %v3462 = vunpack.c.l.b16 %v3395
    %v3463 = vunpack.c.l.b16 %v3396
    %v3464 = vunpack.c.l.b16 %v3397
    %v3465 = vunpack.c.l.b16 %v3398
    %v3466 = vunpack.c.l.b16 %v3399
    %v3467 = vunpack.c.l.b16 %v3400
    %v3468 = vunpack.c.l.b16 %v3401
    %v3469 = vunpack.c.l.b16 %v3402
    %v3470 = vunpack.c.l.b16 %v3403
    %v3471 = vunpack.c.l.b16 %v3404
    %v3472 = vunpack.c.l.b16 %v3405
    %v3473 = vunpack.c.l.b16 %v3406
    %v3474 = vunpack.c.l.b16 %v3407
    %v3475 = vunpack.c.l.b16 %v3408
    %v3476 = vunpack.c.l.b16 %v3409
    %v3477 = vunpack.c.l.b16 %v3410
    %v3478 = vunpack.c.l.b16 %v3411
    %v3479 = vunpack.c.l.b16 %v3412
    %v3480 = vunpack.c.l.b16 %v3413
    %v3481 = vunpack.c.l.b16 %v3414
    %v3482 = vunpack.c.l.b16 %v3415
    %v3483 = vunpack.c.l.b16 %v3416
    %v3484 = vunpack.c.l.b16 %v3417
    %v3485 = vunpack.c.l.b16 %v3418
    %v3486 = vunpack.c.l.b16 %v3419
    %v3487 = vunpack.c.l.b16 %v3420
    %v3488 = vunpack.c.l.b16 %v3421
    %v3489 = vunpack.c.l.b16 %v3422
    %v3490 = vunpack.c.l.b16 %v3423
    %v3491 = vpack.c.b16 %v3460, %v3459
    %v3492 = vpack.c.b16 %v3462, %v3461
    %v3493 = vpack.c.b16 %v3464, %v3463
    %v3494 = vpack.c.b16 %v3466, %v3465
    %v3495 = vpack.c.b16 %v3468, %v3467
    %v3496 = vpack.c.b16 %v3470, %v3469
    %v3497 = vpack.c.b16 %v3472, %v3471
    %v3498 = vpack.c.b16 %v3474, %v3473
    %v3499 = vpack.c.b16 %v3476, %v3475
    %v3500 = vpack.c.b16 %v3478, %v3477
    %v3501 = vpack.c.b16 %v3480, %v3479
    %v3502 = vpack.c.b16 %v3482, %v3481
    %v3503 = vpack.c.b16 %v3484, %v3483
    %v3504 = vpack.c.b16 %v3486, %v3485
    %v3505 = vpack.c.b16 %v3488, %v3487
    %v3506 = vpack.c.b16 %v3490, %v3489
    %3523 = vmatpush.bf16.msra.mxu0 %v3498
    %3524 = vmatpush.bf16.msra.mxu0 %v3497
    %3525 = vmatpush.bf16.msra.mxu0 %v3496
    %3526 = vmatpush.bf16.msra.mxu0 %v3495
    %3527 = vmatpush.bf16.msra.mxu0 %v3494
    %3528 = vmatpush.bf16.msra.mxu0 %v3493
    %3529 = vmatpush.bf16.msra.mxu0 %v3492
    %3530 = vmatpush.bf16.msra.mxu0 %v3491
    %3531 = vmatmul.bf16.gmra.mxu0 %v3390
    %v3532 = vpop.f32.mrf.mxu0
    %v3533 = vadd.f32 %v3424, %v3532
    %v3534 = vpop.f32.mrf.mxu0
    %3535 = vdwg.mxu0
    %3536 = vmatpush.bf16.msra.mxu0 %v3506
    %3537 = vmatpush.bf16.msra.mxu0 %v3505
    %3538 = vmatpush.bf16.msra.mxu0 %v3504
    %3539 = vmatpush.bf16.msra.mxu0 %v3503
    %3540 = vmatpush.bf16.msra.mxu0 %v3502
    %3541 = vmatpush.bf16.msra.mxu0 %v3501
    %3542 = vmatpush.bf16.msra.mxu0 %v3500
    %3543 = vmatpush.bf16.msra.mxu0 %v3499
    %3544 = vmatmul.bf16.gmra.mxu0 %v3391
    %v3545 = vpop.f32.mrf.mxu0
    %v3546 = vadd.f32 %v3533, %v3545
    %v3547 = vpop.f32.mrf.mxu0
    %3548 = vdwg.mxu0
    %v3549 = vmul.f32 %v3546, 0.01
    %v3550 = vmax.f32 %v3546, %v3549
    %v3551 = vrot.slane %v3550, 4
    %v3552 = vadd.f32 %v3550, %v3551
    %v3553 = vrot.slane %v3552, 2
    %v3554 = vadd.f32 %v3552, %v3553
    %v3555 = vrot.slane %v3554, 1
    %v3556 = vadd.f32 %v3554, %v3555
    %v3557 = vmul.f32 %v3556, %v650
    %v3558 = vmul.f32 %v3550, %v3550
    %v3559 = vrot.slane %v3558, 4
    %v3560 = vadd.f32 %v3558, %v3559
    %v3561 = vrot.slane %v3560, 2
    %v3562 = vadd.f32 %v3560, %v3561
    %v3563 = vrot.slane %v3562, 1
    %v3564 = vadd.f32 %v3562, %v3563
    %v3565 = vmul.f32 %v3564, %v650
    %v3566 = vmul.f32 %v3557, %v3557
    %v3567 = vsub.f32 %v3565, %v3566
    %v3568 = vmax.f32 %v3567, 0.0
    %v3569 = vadd.f32 %v3568, 1e-05
    %v3570 = vrsqrt.pop %v3569
    %v3571 = vmul.f32 %v3570, %v3569
    %v3572 = vmul.f32 %v3571, %v3570
    %v3573 = vmul.f32 0.5, %v3572
    %v3574 = vsub.f32 1.5, %v3573
    %v3575 = vmul.f32 %v3570, %v3574
    %vm3576 = vweird.f32 %v3569
    %vm3577 = vweird.f32 %v3570
    %vm3578 = vmor %vm3576, %vm3577
    %v3579 = vsel %vm3578, %v3570, %v3575
    %v3580 = vmul.f32 %v3425, %v3579
    %v3581 = vmul.f32 %v3557, %v3580
    %v3582 = vsub.f32 %v3426, %v3581
    %v3583 = vmul.f32 %v3550, %v3580
    %v3584 = vadd.f32 %v3583, %v3582
    %v3585 = vpack.c.bf16 %v3584, %v3584
    %v3586 = vld [vmem:[#allocation8 + $0x80] sm:$0xf]
    %v3587 = vld [vmem:[#allocation8 + $0x84] sm:$0xf]
    %v3588 = vld [vmem:[#allocation8 + $0x88] sm:$0xf]
    %v3589 = vld [vmem:[#allocation8 + $0x8c] sm:$0xf]
    %v3590 = vld [vmem:[#allocation8 + $0x90] sm:$0xf]
    %v3591 = vld [vmem:[#allocation8 + $0x94] sm:$0xf]
    %v3592 = vld [vmem:[#allocation8 + $0x98] sm:$0xf]
    %v3593 = vld [vmem:[#allocation8 + $0x9c] sm:$0xf]
    %v3594 = vld [vmem:[#allocation8 + $0xa0] sm:$0xf]
    %v3595 = vld [vmem:[#allocation8 + $0xa4] sm:$0xf]
    %v3596 = vld [vmem:[#allocation8 + $0xa8] sm:$0xf]
    %v3597 = vld [vmem:[#allocation8 + $0xac] sm:$0xf]
    %v3598 = vld [vmem:[#allocation8 + $0xb0] sm:$0xf]
    %v3599 = vld [vmem:[#allocation8 + $0xb4] sm:$0xf]
    %v3600 = vld [vmem:[#allocation8 + $0xb8] sm:$0xf]
    %v3601 = vld [vmem:[#allocation8 + $0xbc] sm:$0xf]
    %v3602 = vld [vmem:[#allocation10 + $0x5] ss:$0 sm:$0xff]
    %v3603 = vld [vmem:[#allocation10 + $0x23] ss:$0 sm:$0xff]
    %v3604 = vld [vmem:[#allocation10 + $0x41] ss:$0 sm:$0xff]
    %v3621 = vunpack.c.l.b16 %v3586
    %v3622 = vunpack.c.l.b16 %v3587
    %v3623 = vunpack.c.l.b16 %v3588
    %v3624 = vunpack.c.l.b16 %v3589
    %v3625 = vunpack.c.l.b16 %v3590
    %v3626 = vunpack.c.l.b16 %v3591
    %v3627 = vunpack.c.l.b16 %v3592
    %v3628 = vunpack.c.l.b16 %v3593
    %v3629 = vunpack.c.l.b16 %v3594
    %v3630 = vunpack.c.l.b16 %v3595
    %v3631 = vunpack.c.l.b16 %v3596
    %v3632 = vunpack.c.l.b16 %v3597
    %v3633 = vunpack.c.l.b16 %v3598
    %v3634 = vunpack.c.l.b16 %v3599
    %v3635 = vunpack.c.l.b16 %v3600
    %v3636 = vunpack.c.l.b16 %v3601
    %v3637 = vpack.c.b16 %v3622, %v3621
    %v3638 = vpack.c.b16 %v3624, %v3623
    %v3639 = vpack.c.b16 %v3626, %v3625
    %v3640 = vpack.c.b16 %v3628, %v3627
    %v3641 = vpack.c.b16 %v3630, %v3629
    %v3642 = vpack.c.b16 %v3632, %v3631
    %v3643 = vpack.c.b16 %v3634, %v3633
    %v3644 = vpack.c.b16 %v3636, %v3635
    %3653 = vmatpush.bf16.msra.mxu0 %v3644
    %3654 = vmatpush.bf16.msra.mxu0 %v3643
    %3655 = vmatpush.bf16.msra.mxu0 %v3642
    %3656 = vmatpush.bf16.msra.mxu0 %v3641
    %3657 = vmatpush.bf16.msra.mxu0 %v3640
    %3658 = vmatpush.bf16.msra.mxu0 %v3639
    %3659 = vmatpush.bf16.msra.mxu0 %v3638
    %3660 = vmatpush.bf16.msra.mxu0 %v3637
    %3661 = vmatmul.bf16.gmra.mxu0 %v3585
    %v3662 = vpop.f32.mrf.mxu0
    %v3663 = vadd.f32 %v3602, %v3662
    %v3664 = vpop.f32.mrf.mxu0
    %3665 = vdwg.mxu0
    %v3666 = vmul.f32 %v3663, 0.01
    %v3667 = vmax.f32 %v3663, %v3666
    %v3668 = vrot.slane %v3667, 4
    %v3669 = vadd.f32 %v3667, %v3668
    %v3670 = vrot.slane %v3669, 2
    %v3671 = vadd.f32 %v3669, %v3670
    %v3672 = vrot.slane %v3671, 1
    %v3673 = vadd.f32 %v3671, %v3672
    %v3674 = vmul.f32 %v3673, %v650
    %v3675 = vmul.f32 %v3667, %v3667
    %v3676 = vrot.slane %v3675, 4
    %v3677 = vadd.f32 %v3675, %v3676
    %v3678 = vrot.slane %v3677, 2
    %v3679 = vadd.f32 %v3677, %v3678
    %v3680 = vrot.slane %v3679, 1
    %v3681 = vadd.f32 %v3679, %v3680
    %v3682 = vmul.f32 %v3681, %v650
    %v3683 = vmul.f32 %v3674, %v3674
    %v3684 = vsub.f32 %v3682, %v3683
    %v3685 = vmax.f32 %v3684, 0.0
    %v3686 = vadd.f32 %v3685, 1e-05
    %v3687 = vrsqrt.pop %v3686
    %v3688 = vmul.f32 %v3687, %v3686
    %v3689 = vmul.f32 %v3688, %v3687
    %v3690 = vmul.f32 0.5, %v3689
    %v3691 = vsub.f32 1.5, %v3690
    %v3692 = vmul.f32 %v3687, %v3691
    %vm3693 = vweird.f32 %v3686
    %vm3694 = vweird.f32 %v3687
    %vm3695 = vmor %vm3693, %vm3694
    %v3696 = vsel %vm3695, %v3687, %v3692
    %v3697 = vmul.f32 %v3603, %v3696
    %v3698 = vmul.f32 %v3674, %v3697
    %v3699 = vsub.f32 %v3604, %v3698
    %v3700 = vmul.f32 %v3667, %v3697
    %v3701 = vadd.f32 %v3700, %v3699
    %v3702 = vpack.c.bf16 %v3701, %v3701
    %v3703 = vld [vmem:[#allocation8 + $0xc0] sm:$0xf]
    %v3704 = vld [vmem:[#allocation8 + $0xc4] sm:$0xf]
    %v3705 = vld [vmem:[#allocation8 + $0xc8] sm:$0xf]
    %v3706 = vld [vmem:[#allocation8 + $0xcc] sm:$0xf]
    %v3707 = vld [vmem:[#allocation8 + $0xd0] sm:$0xf]
    %v3708 = vld [vmem:[#allocation8 + $0xd4] sm:$0xf]
    %v3709 = vld [vmem:[#allocation8 + $0xd8] sm:$0xf]
    %v3710 = vld [vmem:[#allocation8 + $0xdc] sm:$0xf]
    %v3711 = vld [vmem:[#allocation8 + $0xe0] sm:$0xf]
    %v3712 = vld [vmem:[#allocation8 + $0xe4] sm:$0xf]
    %v3713 = vld [vmem:[#allocation8 + $0xe8] sm:$0xf]
    %v3714 = vld [vmem:[#allocation8 + $0xec] sm:$0xf]
    %v3715 = vld [vmem:[#allocation8 + $0xf0] sm:$0xf]
    %v3716 = vld [vmem:[#allocation8 + $0xf4] sm:$0xf]
    %v3717 = vld [vmem:[#allocation8 + $0xf8] sm:$0xf]
    %v3718 = vld [vmem:[#allocation8 + $0xfc] sm:$0xf]
    %v3719 = vld [vmem:[#allocation10 + $0x42] ss:$0 sm:$0xff]
    %v3736 = vunpack.c.l.b16 %v3703
    %v3737 = vunpack.c.l.b16 %v3704
    %v3738 = vunpack.c.l.b16 %v3705
    %v3739 = vunpack.c.l.b16 %v3706
    %v3740 = vunpack.c.l.b16 %v3707
    %v3741 = vunpack.c.l.b16 %v3708
    %v3742 = vunpack.c.l.b16 %v3709
    %v3743 = vunpack.c.l.b16 %v3710
    %v3744 = vunpack.c.l.b16 %v3711
    %v3745 = vunpack.c.l.b16 %v3712
    %v3746 = vunpack.c.l.b16 %v3713
    %v3747 = vunpack.c.l.b16 %v3714
    %v3748 = vunpack.c.l.b16 %v3715
    %v3749 = vunpack.c.l.b16 %v3716
    %v3750 = vunpack.c.l.b16 %v3717
    %v3751 = vunpack.c.l.b16 %v3718
    %v3752 = vpack.c.b16 %v3737, %v3736
    %v3753 = vpack.c.b16 %v3739, %v3738
    %v3754 = vpack.c.b16 %v3741, %v3740
    %v3755 = vpack.c.b16 %v3743, %v3742
    %v3756 = vpack.c.b16 %v3745, %v3744
    %v3757 = vpack.c.b16 %v3747, %v3746
    %v3758 = vpack.c.b16 %v3749, %v3748
    %v3759 = vpack.c.b16 %v3751, %v3750
    %3768 = vmatpush.bf16.msra.mxu0 %v3759
    %3769 = vmatpush.bf16.msra.mxu0 %v3758
    %3770 = vmatpush.bf16.msra.mxu0 %v3757
    %3771 = vmatpush.bf16.msra.mxu0 %v3756
    %3772 = vmatpush.bf16.msra.mxu0 %v3755
    %3773 = vmatpush.bf16.msra.mxu0 %v3754
    %3774 = vmatpush.bf16.msra.mxu0 %v3753
    %3775 = vmatpush.bf16.msra.mxu0 %v3752
    %3776 = vmatmul.bf16.gmra.mxu0 %v3702
    %v3777 = vpop.f32.mrf.mxu0
    %v3778 = vadd.f32 %v3719, %v3777
    %v3779 = vpop.f32.mrf.mxu0
    %3780 = vdwg.mxu0
    %3781 = vmax.xlane.f32.xlu0 %v3778
    %v3782 = vpop.xlane.xlu0 %3781
    %v3783 = vsub.f32 %v3778, %v3782
    %v3784 = vmul.f32 %v3783, 1.442695
    %v3785 = vpow.pop %v3784
    %3786 = vadd.xlane.f32.xlu0 %v3785
    %v3787 = vpop.xlane.xlu0 %3786
    %v3788 = vlog2.pop %v3787
    %v3789 = vmul.f32 %v3788, 0.6931472
    %v3790 = vsub.f32 %v3783, %v3789
    %3791 = vst [vmem:[#allocation11] sm:$0xff] %v3790
    // Predicated region
    $region46: #{image_classifier_forward.1} parent=1 // pred_check
      _
    $region47: #{image_classifier_forward.1} parent=1 // pred_check_branch
      %3793 = sbr.rel (0) target = $region49
    $region48: #{image_classifier_forward.1} parent=1 // pred_region
      %3795 = vsyncadd [#allocation4], 0
      %s3797 = sshll.u32 [#allocation11], 4
      %s3798 = int_to_ptr.vmem [resolvable:$true] %s3797
      %s3799 = sshll.u32 %s6, 4
      %s3800 = int_to_ptr.hbm [resolvable:$true] %s3799
      %3802 = dma.vmem_to_hbm [thread:$0]  %s3798, 128, %s3800, [#allocation4]
    $region49: #{image_classifier_forward.1} parent=1 // pred_fallthru
      _
    // Predicated region
    $region50: #{image_classifier_forward.1} parent=1 // pred_check
      _
    $region51: #{image_classifier_forward.1} parent=1 // pred_check_branch
      %3804 = sbr.rel (0) target = $region53
    $region52: #{image_classifier_forward.1} parent=1 // pred_region
      %3806 = dma.done [#allocation4], 128
    $region53: #{image_classifier_forward.1} parent=1 // pred_fallthru
      _
    %3807 = vsyncpa [#allocation3], 1
    %3808 = vsyncpa [#allocation6], 1
    %3809 = vsyncpa [#allocation9], 1
    %3810 = vsyncpa [#allocation4], 1

</llo_original>
